<compile_context>
chip_gen: v5e
topology: v5e:2x2
jax: 0.10.0
libtpu: 0.0.40
codegen_flags: <defaults>
</compile_context>

<pallas_src>
import numpy as np

import jax
import jax.numpy as jnp
from jax.experimental import pallas as pl
from jax.experimental.pallas import tpu as pltpu

# ----------------------------- static model config ------------------------------
IN_CHANNELS = 3
FILTERS = [8, 8, 16, 16, 16, 16]
NORM_CONVS = {0, 1, 2, 3}          # i < 4 in the PyTorch __init__
POOL_AFTER_CONV = {1, 3}           # pool_positions=[2, 5] -> pools after conv 1 and 3
ELU_ALPHA = 1.0
BN_EPS = 1e-5
CLASSES = 10
INPUT_HW = 32


def _build_layer_geometry():
    layers = []
    h = w = INPUT_HW
    cin = IN_CHANNELS
    for i, cout in enumerate(FILTERS):
        h_out, w_out = h - 2, w - 2
        layers.append(dict(idx=i, cin=cin, cout=cout, h_in=h, w_in=w,
                           h_out=h_out, w_out=w_out,
                           bn=(i in NORM_CONVS), pool=(i in POOL_AFTER_CONV)))
        if i in POOL_AFTER_CONV:
            h, w = h_out // 2, w_out // 2
        else:
            h, w = h_out, w_out
        cin = cout
    return layers


LAYERS = _build_layer_geometry()
assert LAYERS[-1]["h_out"] == 1 and LAYERS[-1]["w_out"] == 1  # head needs 1x1 spatial


def _elu(y, alpha=ELU_ALPHA):
    return jnp.where(y > 0, y, alpha * (jnp.exp(jnp.minimum(y, 0.0)) - 1.0))


def _dot(a, b):
    return jnp.dot(a, b, preferred_element_type=jnp.float32)


# --------------------------------- fused Pallas kernel ----------------------------
def vgg_fused_kernel(*refs):
    """Entire network in one invocation; everything stays in VMEM/vregs."""
    out_ref = refs[-1]
    it = iter(refs[:-1])
    x_ref = next(it)                          # (N*32, 32*3) stacked image-row layout
    n_batch = x_ref.shape[0] // INPUT_HW

    acts = x_ref[...]                         # stacked (N*H, W*C), images contiguous

    for layer in LAYERS:
        h_in = layer["h_in"]
        h_out, w_out, cout = layer["h_out"], layer["w_out"], layer["cout"]
        band_ref = next(it)                   # (3*W*Cin, Wo*Cout) K-stacked banded weights
        if layer["bn"]:
            g_ref, beta_ref, p_ref, pt_ref = next(it), next(it), next(it), next(it)
        else:
            bias_ref = next(it)

        # Build the K-stacked LHS: per image, lane-concat the three row-shifted slices
        # (VPU/XLU copies ride otherwise-idle slots), then sublane-concat the images.
        parts = []
        for n in range(n_batch):
            base = n * h_in
            bands = [acts[base + k: base + k + h_out, :] for k in range(3)]
            parts.append(jnp.concatenate(bands, axis=1))        # (Ho, 3*W*Cin)
        xk = jnp.concatenate(parts, axis=0) if n_batch > 1 else parts[0]

        # ONE MXU matmul per conv layer for the whole batch.
        y = _dot(xk, band_ref[...])                             # (N*Ho, Wo*Cout)

        if layer["bn"]:
            # One-pass batch stats over (N, Ho, Wo) per channel; conv bias cancels here.
            s1 = jnp.sum(y, axis=0, keepdims=True)              # (1, Wo*Cout)
            s2 = jnp.sum(y * y, axis=0, keepdims=True)
            stats = jnp.concatenate([s1, s2], axis=0)           # (2, Wo*Cout)
            inv_cnt = 1.0 / float(n_batch * h_out * w_out)
            red = _dot(stats, p_ref[...]) * inv_cnt             # (2, Cout): [mean; E[y^2]]
            mean_c = red[0:1, :]
            ex2_c = red[1:2, :]
            var_c = jnp.maximum(ex2_c - mean_c * mean_c, 0.0)   # biased var, clamped
            scale_c = g_ref[...] * jax.lax.rsqrt(var_c + BN_EPS)
            shift_c = beta_ref[...] - mean_c * scale_c
            ss = jnp.concatenate([scale_c, shift_c], axis=0)    # (2, Cout)
            rows = _dot(ss, pt_ref[...])                        # (2, Wo*Cout)
            y = _elu(y * rows[0:1, :] + rows[1:2, :])           # single FMA + ELU
        else:
            y = _elu(y + bias_ref[...])

        if layer["pool"]:
            s_ref, t_ref = next(it), next(it)
            # Row-pair max first (block-diagonal 0/1 row selectors over the stacked batch),
            # then column-pair max.  Exact: 0/1 selection commutes with elementwise max.
            rmax = jnp.maximum(_dot(s_ref[0], y), _dot(s_ref[1], y))   # (N*Hp, Wo*C)
            y = jnp.maximum(_dot(rmax, t_ref[0]), _dot(rmax, t_ref[1]))  # (N*Hp, Wp*C)

        acts = y

    # classifier head (Linear -> ELU -> Linear), batch-folded.  acts is (N, F).
    w1 = next(it)[...]
    b1 = next(it)[...]
    w2 = next(it)[...]
    b2 = next(it)[...]
    h = _elu(_dot(acts, w1) + b1)
    out_ref[...] = _dot(h, w2) + b2                             # one lane-dense store


# ------------------------ host-side operand preparation (once) --------------------
def prepare_operands(params, n_batch):
    """Pre-expand conv weights into K-stacked banded matrices + 0/1 selection matrices.
    Host-side, done once at init; nothing heavy happens in the jitted forward path."""
    ops = []
    for layer in LAYERS:
        i = layer["idx"]
        cin, cout = layer["cin"], layer["cout"]
        w_in, h_out, w_out = layer["w_in"], layer["h_out"], layer["w_out"]
        w, b, g, beta = params["conv"][i]
        w_np = np.asarray(w, np.float32)                         # (3, 3, Cin, Cout)

        # K-stacked banded weight: (3*W*Cin, Wo*Cout)
        band = np.zeros((3 * w_in * cin, w_out * cout), np.float32)
        for ky in range(3):
            for kx in range(3):
                tap = w_np[ky, kx]                               # (Cin, Cout)
                for xo in range(w_out):
                    r0 = ky * w_in * cin + (xo + kx) * cin
                    c0 = xo * cout
                    band[r0:r0 + cin, c0:c0 + cout] = tap
        ops.append(jnp.asarray(band))

        if layer["bn"]:
            ops.append(jnp.asarray(np.asarray(g, np.float32).reshape(1, cout)))
            ops.append(jnp.asarray(np.asarray(beta, np.float32).reshape(1, cout)))
            eye = np.eye(cout, dtype=np.float32)
            chan_pool = np.zeros((w_out * cout, cout), np.float32)
            for xo in range(w_out):
                chan_pool[xo * cout:(xo + 1) * cout, :] = eye
            ops.append(jnp.asarray(chan_pool))                          # (Wo*C, C)
            ops.append(jnp.asarray(np.ascontiguousarray(chan_pool.T)))  # (C, Wo*C)
        else:
            bias_row = np.tile(np.asarray(b, np.float32).reshape(1, cout), (1, w_out))
            ops.append(jnp.asarray(bias_row.astype(np.float32)))

        if layer["pool"]:
            hp, wp = h_out // 2, w_out // 2
            # block-diagonal row selectors over the stacked batch: (2, N*Hp, N*Ho)
            srow = np.zeros((2, n_batch * hp, n_batch * h_out), np.float32)
            for dy in range(2):
                for n in range(n_batch):
                    for r in range(hp):
                        srow[dy, n * hp + r, n * h_out + 2 * r + dy] = 1.0
            eye = np.eye(cout, dtype=np.float32)
            tcol = np.zeros((2, w_out * cout, wp * cout), np.float32)
            for dx in range(2):
                for xp in range(wp):
                    src = (2 * xp + dx) * cout
                    dst = xp * cout
                    tcol[dx, src:src + cout, dst:dst + cout] = eye
            ops.append(jnp.asarray(srow))
            ops.append(jnp.asarray(tcol))

    w1, b1, w2, b2 = params["head"]
    ops.append(jnp.asarray(w1, jnp.float32))
    ops.append(jnp.asarray(b1, jnp.float32).reshape(1, -1))
    ops.append(jnp.asarray(w2, jnp.float32))
    ops.append(jnp.asarray(b2, jnp.float32).reshape(1, -1))
    return tuple(ops)


# --------------------------------- forward wrapper ---------------------------------
@jax.jit
def forward(x_nchw, operands):
    x = jnp.transpose(x_nchw, (0, 2, 3, 1)).astype(jnp.float32)   # NCHW -> NHWC
    n, h, w, c = x.shape
    x_rows = x.reshape(n * h, w * c)                              # stacked image-row layout
    vmem = pl.BlockSpec(memory_space=pltpu.MemorySpace.VMEM)
    return pl.pallas_call(
        vgg_fused_kernel,
        out_shape=jax.ShapeDtypeStruct((n, CLASSES), jnp.float32),
        in_specs=[vmem] * (1 + len(operands)),
        out_specs=vmem,
    )(x_rows, *operands)


# ----------------------------- parameters & reference ------------------------------
def init_params(key):
    params = {"conv": [], "head": None}
    prev = IN_CHANNELS
    for f in FILTERS:
        key, kw, kb, kg, kbt = jax.random.split(key, 5)
        w = jax.random.normal(kw, (3, 3, prev, f), jnp.float32) / jnp.sqrt(9.0 * prev)
        b = 0.05 * jax.random.normal(kb, (f,), jnp.float32)
        g = 1.0 + 0.1 * jax.random.normal(kg, (f,), jnp.float32)
        beta = 0.1 * jax.random.normal(kbt, (f,), jnp.float32)
        params["conv"].append((w, b, g, beta))
        prev = f
    F = FILTERS[-1]
    key, k1, k2, k3, k4 = jax.random.split(key, 5)
    w1 = jax.random.normal(k1, (F, F), jnp.float32) / jnp.sqrt(float(F))
    b1 = 0.05 * jax.random.normal(k2, (F,), jnp.float32)
    w2 = jax.random.normal(k3, (F, CLASSES), jnp.float32) / jnp.sqrt(float(F))
    b2 = 0.05 * jax.random.normal(k4, (CLASSES,), jnp.float32)
    params["head"] = (w1, b1, w2, b2)
    return params


def _im2col(x):
    # reference-only helper: (N, H, W, C) -> (N*Ho*Wo, 9*C) valid 3x3 patches
    N, H, W, C = x.shape
    Ho, Wo = H - 2, W - 2
    cols = [x[:, ky:ky + Ho, kx:kx + Wo, :] for ky in range(3) for kx in range(3)]
    a = jnp.stack(cols, axis=3).reshape(N * Ho * Wo, 9 * C)
    return a, (N, Ho, Wo)


def ref_forward(x_nchw, params):
    hi = jax.lax.Precision.HIGHEST
    x = jnp.transpose(x_nchw, (0, 2, 3, 1)).astype(jnp.float32)
    for i, (w, b, g, beta) in enumerate(params["conv"]):
        a, (N, Ho, Wo) = _im2col(x)
        Cout = w.shape[-1]
        y = jnp.dot(a, w.reshape(-1, Cout), precision=hi) + b[None, :]
        if i in NORM_CONVS:
            mean = jnp.mean(y, axis=0, keepdims=True)
            var = jnp.mean((y - mean) ** 2, axis=0, keepdims=True)
            y = (y - mean) / jnp.sqrt(var + BN_EPS)
            y = y * g[None, :] + beta[None, :]
        x = _elu(y, ELU_ALPHA).reshape(N, Ho, Wo, Cout)
        if i in POOL_AFTER_CONV:
            N, H, W, C = x.shape
            Hp, Wp = H // 2, W // 2
            x = x[:, :2 * Hp, :2 * Wp, :].reshape(N, Hp, 2, Wp, 2, C).max(axis=(2, 4))
    x = x.reshape(x.shape[0], -1)
    w1, b1, w2, b2 = params["head"]
    h = _elu(jnp.dot(x, w1, precision=hi) + b1[None, :], ELU_ALPHA)
    return jnp.dot(h, w2, precision=hi) + b2[None, :]


# --------------------------------------- main --------------------------------------
if __name__ == "__main__":
    key = jax.random.PRNGKey(0)
    kx, kp = jax.random.split(key)
    BATCH = 2
    x = jax.random.normal(kx, (BATCH, IN_CHANNELS, INPUT_HW, INPUT_HW), jnp.float32)  # NCHW
    params = init_params(kp)
    operands = prepare_operands(params, BATCH)

    out = jax.block_until_ready(forward(x, operands))
    ref = ref_forward(x, params)

    assert out.shape == (BATCH, CLASSES), out.shape
    assert bool(jnp.all(jnp.isfinite(out)))
    assert bool(jnp.allclose(out, ref, rtol=2e-2, atol=2e-2)), (out, ref)
    print("KERNEL_OK")
</pallas_src>

<mosaic_0001>
module attributes {stable_mosaic.version = 11 : i64} {
  func.func @vgg_fused_kernel(%arg0: memref<64x96xf32, #tpu.memory_space<vmem>>, %arg1: memref<288x240xf32, #tpu.memory_space<vmem>>, %arg2: memref<1x8xf32, #tpu.memory_space<vmem>>, %arg3: memref<1x8xf32, #tpu.memory_space<vmem>>, %arg4: memref<240x8xf32, #tpu.memory_space<vmem>>, %arg5: memref<8x240xf32, #tpu.memory_space<vmem>>, %arg6: memref<720x224xf32, #tpu.memory_space<vmem>>, %arg7: memref<1x8xf32, #tpu.memory_space<vmem>>, %arg8: memref<1x8xf32, #tpu.memory_space<vmem>>, %arg9: memref<224x8xf32, #tpu.memory_space<vmem>>, %arg10: memref<8x224xf32, #tpu.memory_space<vmem>>, %arg11: memref<2x28x56xf32, #tpu.memory_space<vmem>>, %arg12: memref<2x224x112xf32, #tpu.memory_space<vmem>>, %arg13: memref<336x192xf32, #tpu.memory_space<vmem>>, %arg14: memref<1x16xf32, #tpu.memory_space<vmem>>, %arg15: memref<1x16xf32, #tpu.memory_space<vmem>>, %arg16: memref<192x16xf32, #tpu.memory_space<vmem>>, %arg17: memref<16x192xf32, #tpu.memory_space<vmem>>, %arg18: memref<576x160xf32, #tpu.memory_space<vmem>>, %arg19: memref<1x16xf32, #tpu.memory_space<vmem>>, %arg20: memref<1x16xf32, #tpu.memory_space<vmem>>, %arg21: memref<160x16xf32, #tpu.memory_space<vmem>>, %arg22: memref<16x160xf32, #tpu.memory_space<vmem>>, %arg23: memref<2x10x20xf32, #tpu.memory_space<vmem>>, %arg24: memref<2x160x80xf32, #tpu.memory_space<vmem>>, %arg25: memref<240x48xf32, #tpu.memory_space<vmem>>, %arg26: memref<1x48xf32, #tpu.memory_space<vmem>>, %arg27: memref<144x16xf32, #tpu.memory_space<vmem>>, %arg28: memref<1x16xf32, #tpu.memory_space<vmem>>, %arg29: memref<16x16xf32, #tpu.memory_space<vmem>>, %arg30: memref<1x16xf32, #tpu.memory_space<vmem>>, %arg31: memref<16x10xf32, #tpu.memory_space<vmem>>, %arg32: memref<1x10xf32, #tpu.memory_space<vmem>>, %arg33: memref<2x10xf32, #tpu.memory_space<vmem>>) attributes {dimension_semantics = [], scalar_prefetch = 0 : i64, scratch_operands = 0 : i64, tpu.core_type = #tpu.core_type<tc>} {
    %c0 = arith.constant 0 : index
    %c0_0 = arith.constant 0 : index
    %0 = vector.load %arg0[%c0, %c0_0] : memref<64x96xf32, #tpu.memory_space<vmem>>, vector<64x96xf32>
    %1 = vector.extract_strided_slice %0 {offsets = [0, 0], sizes = [30, 96], strides = [1, 1]} : vector<64x96xf32> to vector<30x96xf32>
    %2 = vector.extract_strided_slice %0 {offsets = [1, 0], sizes = [30, 96], strides = [1, 1]} : vector<64x96xf32> to vector<30x96xf32>
    %3 = vector.extract_strided_slice %0 {offsets = [2, 0], sizes = [30, 96], strides = [1, 1]} : vector<64x96xf32> to vector<30x96xf32>
    %4 = tpu.concatenate %1, %2, %3 in 1 : vector<30x96xf32>, vector<30x96xf32>, vector<30x96xf32> -> vector<30x288xf32>
    %5 = vector.extract_strided_slice %0 {offsets = [32, 0], sizes = [30, 96], strides = [1, 1]} : vector<64x96xf32> to vector<30x96xf32>
    %6 = vector.extract_strided_slice %0 {offsets = [33, 0], sizes = [30, 96], strides = [1, 1]} : vector<64x96xf32> to vector<30x96xf32>
    %7 = vector.extract_strided_slice %0 {offsets = [34, 0], sizes = [30, 96], strides = [1, 1]} : vector<64x96xf32> to vector<30x96xf32>
    %8 = tpu.concatenate %5, %6, %7 in 1 : vector<30x96xf32>, vector<30x96xf32>, vector<30x96xf32> -> vector<30x288xf32>
    %9 = tpu.concatenate %4, %8 in 0 : vector<30x288xf32>, vector<30x288xf32> -> vector<60x288xf32>
    %c0_1 = arith.constant 0 : index
    %c0_2 = arith.constant 0 : index
    %10 = vector.load %arg1[%c0_1, %c0_2] : memref<288x240xf32, #tpu.memory_space<vmem>>, vector<288x240xf32>
    %cst = arith.constant dense<0.000000e+00> : vector<60x240xf32>
    %11 = tpu.matmul %9, %10, %cst {dimension_numbers = #tpu.dot_dimension_numbers<[1], [0], [0], [1], [0, 0, 1, 1], [], []>} : vector<60x288xf32>, vector<288x240xf32>, vector<60x240xf32> -> vector<60x240xf32>
    %cst_3 = arith.constant dense<0.000000e+00> : vector<240xf32>
    %12 = vector.multi_reduction <add>, %11, %cst_3 [0] : vector<60x240xf32> to vector<240xf32>
    %13 = vector.shape_cast %12 : vector<240xf32> to vector<1x240xf32>
    %14 = arith.mulf %11, %11 : vector<60x240xf32>
    %cst_4 = arith.constant dense<0.000000e+00> : vector<240xf32>
    %15 = vector.multi_reduction <add>, %14, %cst_4 [0] : vector<60x240xf32> to vector<240xf32>
    %16 = vector.shape_cast %15 : vector<240xf32> to vector<1x240xf32>
    %17 = tpu.concatenate %13, %16 in 0 : vector<1x240xf32>, vector<1x240xf32> -> vector<2x240xf32>
    %c0_5 = arith.constant 0 : index
    %c0_6 = arith.constant 0 : index
    %18 = vector.load %arg4[%c0_5, %c0_6] : memref<240x8xf32, #tpu.memory_space<vmem>>, vector<240x8xf32>
    %cst_7 = arith.constant dense<0.000000e+00> : vector<2x8xf32>
    %19 = tpu.matmul %17, %18, %cst_7 {dimension_numbers = #tpu.dot_dimension_numbers<[1], [0], [0], [1], [0, 0, 1, 1], [], []>} : vector<2x240xf32>, vector<240x8xf32>, vector<2x8xf32> -> vector<2x8xf32>
    %cst_8 = arith.constant 5.55555569E-4 : f32
    %20 = vector.broadcast %cst_8 : f32 to vector<2x8xf32>
    %21 = arith.mulf %19, %20 : vector<2x8xf32>
    %22 = vector.extract_strided_slice %21 {offsets = [0, 0], sizes = [1, 8], strides = [1, 1]} : vector<2x8xf32> to vector<1x8xf32>
    %23 = vector.extract_strided_slice %21 {offsets = [1, 0], sizes = [1, 8], strides = [1, 1]} : vector<2x8xf32> to vector<1x8xf32>
    %24 = arith.mulf %22, %22 : vector<1x8xf32>
    %25 = arith.subf %23, %24 : vector<1x8xf32>
    %cst_9 = arith.constant 0.000000e+00 : f32
    %26 = vector.broadcast %cst_9 : f32 to vector<1x8xf32>
    %27 = arith.maximumf %25, %26 : vector<1x8xf32>
    %c0_10 = arith.constant 0 : index
    %c0_11 = arith.constant 0 : index
    %28 = vector.load %arg2[%c0_10, %c0_11] : memref<1x8xf32, #tpu.memory_space<vmem>>, vector<1x8xf32>
    %cst_12 = arith.constant 9.99999974E-6 : f32
    %29 = vector.broadcast %cst_12 : f32 to vector<1x8xf32>
    %30 = arith.addf %27, %29 : vector<1x8xf32>
    %31 = math.rsqrt %30 : vector<1x8xf32>
    %32 = arith.mulf %28, %31 : vector<1x8xf32>
    %c0_13 = arith.constant 0 : index
    %c0_14 = arith.constant 0 : index
    %33 = vector.load %arg3[%c0_13, %c0_14] : memref<1x8xf32, #tpu.memory_space<vmem>>, vector<1x8xf32>
    %34 = arith.mulf %22, %32 : vector<1x8xf32>
    %35 = arith.subf %33, %34 : vector<1x8xf32>
    %36 = tpu.concatenate %32, %35 in 0 : vector<1x8xf32>, vector<1x8xf32> -> vector<2x8xf32>
    %c0_15 = arith.constant 0 : index
    %c0_16 = arith.constant 0 : index
    %37 = vector.load %arg5[%c0_15, %c0_16] : memref<8x240xf32, #tpu.memory_space<vmem>>, vector<8x240xf32>
    %cst_17 = arith.constant dense<0.000000e+00> : vector<2x240xf32>
    %38 = tpu.matmul %36, %37, %cst_17 {dimension_numbers = #tpu.dot_dimension_numbers<[1], [0], [0], [1], [0, 0, 1, 1], [], []>} : vector<2x8xf32>, vector<8x240xf32>, vector<2x240xf32> -> vector<2x240xf32>
    %39 = vector.extract_strided_slice %38 {offsets = [0, 0], sizes = [1, 240], strides = [1, 1]} : vector<2x240xf32> to vector<1x240xf32>
    %40 = vector.broadcast %39 : vector<1x240xf32> to vector<60x240xf32>
    %41 = arith.mulf %11, %40 : vector<60x240xf32>
    %42 = vector.extract_strided_slice %38 {offsets = [1, 0], sizes = [1, 240], strides = [1, 1]} : vector<2x240xf32> to vector<1x240xf32>
    %43 = vector.broadcast %42 : vector<1x240xf32> to vector<60x240xf32>
    %44 = arith.addf %41, %43 : vector<60x240xf32>
    %cst_18 = arith.constant 0.000000e+00 : f32
    %45 = vector.broadcast %cst_18 : f32 to vector<60x240xf32>
    %46 = arith.cmpf ogt, %44, %45 : vector<60x240xf32>
    %cst_19 = arith.constant 0.000000e+00 : f32
    %47 = vector.broadcast %cst_19 : f32 to vector<60x240xf32>
    %48 = arith.minimumf %44, %47 : vector<60x240xf32>
    %49 = math.exp %48 : vector<60x240xf32>
    %cst_20 = arith.constant 1.000000e+00 : f32
    %50 = vector.broadcast %cst_20 : f32 to vector<60x240xf32>
    %51 = arith.subf %49, %50 : vector<60x240xf32>
    %cst_21 = arith.constant 1.000000e+00 : f32
    %52 = vector.broadcast %cst_21 : f32 to vector<60x240xf32>
    %53 = arith.mulf %52, %51 : vector<60x240xf32>
    %54 = arith.select %46, %44, %53 : vector<60x240xi1>, vector<60x240xf32>
    %55 = vector.extract_strided_slice %54 {offsets = [0, 0], sizes = [28, 240], strides = [1, 1]} : vector<60x240xf32> to vector<28x240xf32>
    %56 = vector.extract_strided_slice %54 {offsets = [1, 0], sizes = [28, 240], strides = [1, 1]} : vector<60x240xf32> to vector<28x240xf32>
    %57 = vector.extract_strided_slice %54 {offsets = [2, 0], sizes = [28, 240], strides = [1, 1]} : vector<60x240xf32> to vector<28x240xf32>
    %58 = tpu.concatenate %55, %56, %57 in 1 : vector<28x240xf32>, vector<28x240xf32>, vector<28x240xf32> -> vector<28x720xf32>
    %59 = vector.extract_strided_slice %54 {offsets = [30, 0], sizes = [28, 240], strides = [1, 1]} : vector<60x240xf32> to vector<28x240xf32>
    %60 = vector.extract_strided_slice %54 {offsets = [31, 0], sizes = [28, 240], strides = [1, 1]} : vector<60x240xf32> to vector<28x240xf32>
    %61 = vector.extract_strided_slice %54 {offsets = [32, 0], sizes = [28, 240], strides = [1, 1]} : vector<60x240xf32> to vector<28x240xf32>
    %62 = tpu.concatenate %59, %60, %61 in 1 : vector<28x240xf32>, vector<28x240xf32>, vector<28x240xf32> -> vector<28x720xf32>
    %63 = tpu.concatenate %58, %62 in 0 : vector<28x720xf32>, vector<28x720xf32> -> vector<56x720xf32>
    %c0_22 = arith.constant 0 : index
    %c0_23 = arith.constant 0 : index
    %64 = vector.load %arg6[%c0_22, %c0_23] : memref<720x224xf32, #tpu.memory_space<vmem>>, vector<720x224xf32>
    %cst_24 = arith.constant dense<0.000000e+00> : vector<56x224xf32>
    %65 = tpu.matmul %63, %64, %cst_24 {dimension_numbers = #tpu.dot_dimension_numbers<[1], [0], [0], [1], [0, 0, 1, 1], [], []>} : vector<56x720xf32>, vector<720x224xf32>, vector<56x224xf32> -> vector<56x224xf32>
    %cst_25 = arith.constant dense<0.000000e+00> : vector<224xf32>
    %66 = vector.multi_reduction <add>, %65, %cst_25 [0] : vector<56x224xf32> to vector<224xf32>
    %67 = vector.shape_cast %66 : vector<224xf32> to vector<1x224xf32>
    %68 = arith.mulf %65, %65 : vector<56x224xf32>
    %cst_26 = arith.constant dense<0.000000e+00> : vector<224xf32>
    %69 = vector.multi_reduction <add>, %68, %cst_26 [0] : vector<56x224xf32> to vector<224xf32>
    %70 = vector.shape_cast %69 : vector<224xf32> to vector<1x224xf32>
    %71 = tpu.concatenate %67, %70 in 0 : vector<1x224xf32>, vector<1x224xf32> -> vector<2x224xf32>
    %c0_27 = arith.constant 0 : index
    %c0_28 = arith.constant 0 : index
    %72 = vector.load %arg9[%c0_27, %c0_28] : memref<224x8xf32, #tpu.memory_space<vmem>>, vector<224x8xf32>
    %cst_29 = arith.constant dense<0.000000e+00> : vector<2x8xf32>
    %73 = tpu.matmul %71, %72, %cst_29 {dimension_numbers = #tpu.dot_dimension_numbers<[1], [0], [0], [1], [0, 0, 1, 1], [], []>} : vector<2x224xf32>, vector<224x8xf32>, vector<2x8xf32> -> vector<2x8xf32>
    %cst_30 = arith.constant 6.37755089E-4 : f32
    %74 = vector.broadcast %cst_30 : f32 to vector<2x8xf32>
    %75 = arith.mulf %73, %74 : vector<2x8xf32>
    %76 = vector.extract_strided_slice %75 {offsets = [0, 0], sizes = [1, 8], strides = [1, 1]} : vector<2x8xf32> to vector<1x8xf32>
    %77 = vector.extract_strided_slice %75 {offsets = [1, 0], sizes = [1, 8], strides = [1, 1]} : vector<2x8xf32> to vector<1x8xf32>
    %78 = arith.mulf %76, %76 : vector<1x8xf32>
    %79 = arith.subf %77, %78 : vector<1x8xf32>
    %cst_31 = arith.constant 0.000000e+00 : f32
    %80 = vector.broadcast %cst_31 : f32 to vector<1x8xf32>
    %81 = arith.maximumf %79, %80 : vector<1x8xf32>
    %c0_32 = arith.constant 0 : index
    %c0_33 = arith.constant 0 : index
    %82 = vector.load %arg7[%c0_32, %c0_33] : memref<1x8xf32, #tpu.memory_space<vmem>>, vector<1x8xf32>
    %cst_34 = arith.constant 9.99999974E-6 : f32
    %83 = vector.broadcast %cst_34 : f32 to vector<1x8xf32>
    %84 = arith.addf %81, %83 : vector<1x8xf32>
    %85 = math.rsqrt %84 : vector<1x8xf32>
    %86 = arith.mulf %82, %85 : vector<1x8xf32>
    %c0_35 = arith.constant 0 : index
    %c0_36 = arith.constant 0 : index
    %87 = vector.load %arg8[%c0_35, %c0_36] : memref<1x8xf32, #tpu.memory_space<vmem>>, vector<1x8xf32>
    %88 = arith.mulf %76, %86 : vector<1x8xf32>
    %89 = arith.subf %87, %88 : vector<1x8xf32>
    %90 = tpu.concatenate %86, %89 in 0 : vector<1x8xf32>, vector<1x8xf32> -> vector<2x8xf32>
    %c0_37 = arith.constant 0 : index
    %c0_38 = arith.constant 0 : index
    %91 = vector.load %arg10[%c0_37, %c0_38] : memref<8x224xf32, #tpu.memory_space<vmem>>, vector<8x224xf32>
    %cst_39 = arith.constant dense<0.000000e+00> : vector<2x224xf32>
    %92 = tpu.matmul %90, %91, %cst_39 {dimension_numbers = #tpu.dot_dimension_numbers<[1], [0], [0], [1], [0, 0, 1, 1], [], []>} : vector<2x8xf32>, vector<8x224xf32>, vector<2x224xf32> -> vector<2x224xf32>
    %93 = vector.extract_strided_slice %92 {offsets = [0, 0], sizes = [1, 224], strides = [1, 1]} : vector<2x224xf32> to vector<1x224xf32>
    %94 = vector.broadcast %93 : vector<1x224xf32> to vector<56x224xf32>
    %95 = arith.mulf %65, %94 : vector<56x224xf32>
    %96 = vector.extract_strided_slice %92 {offsets = [1, 0], sizes = [1, 224], strides = [1, 1]} : vector<2x224xf32> to vector<1x224xf32>
    %97 = vector.broadcast %96 : vector<1x224xf32> to vector<56x224xf32>
    %98 = arith.addf %95, %97 : vector<56x224xf32>
    %cst_40 = arith.constant 0.000000e+00 : f32
    %99 = vector.broadcast %cst_40 : f32 to vector<56x224xf32>
    %100 = arith.cmpf ogt, %98, %99 : vector<56x224xf32>
    %cst_41 = arith.constant 0.000000e+00 : f32
    %101 = vector.broadcast %cst_41 : f32 to vector<56x224xf32>
    %102 = arith.minimumf %98, %101 : vector<56x224xf32>
    %103 = math.exp %102 : vector<56x224xf32>
    %cst_42 = arith.constant 1.000000e+00 : f32
    %104 = vector.broadcast %cst_42 : f32 to vector<56x224xf32>
    %105 = arith.subf %103, %104 : vector<56x224xf32>
    %cst_43 = arith.constant 1.000000e+00 : f32
    %106 = vector.broadcast %cst_43 : f32 to vector<56x224xf32>
    %107 = arith.mulf %106, %105 : vector<56x224xf32>
    %108 = arith.select %100, %98, %107 : vector<56x224xi1>, vector<56x224xf32>
    %c0_44 = arith.constant 0 : index
    %c0_45 = arith.constant 0 : index
    %c0_46 = arith.constant 0 : index
    %109 = vector.load %arg11[%c0_44, %c0_45, %c0_46] : memref<2x28x56xf32, #tpu.memory_space<vmem>>, vector<1x28x56xf32>
    %110 = vector.shape_cast %109 : vector<1x28x56xf32> to vector<28x56xf32>
    %cst_47 = arith.constant dense<0.000000e+00> : vector<28x224xf32>
    %111 = tpu.matmul %110, %108, %cst_47 {dimension_numbers = #tpu.dot_dimension_numbers<[1], [0], [0], [1], [0, 0, 1, 1], [], []>} : vector<28x56xf32>, vector<56x224xf32>, vector<28x224xf32> -> vector<28x224xf32>
    %c1 = arith.constant 1 : index
    %c0_48 = arith.constant 0 : index
    %c0_49 = arith.constant 0 : index
    %112 = vector.load %arg11[%c1, %c0_48, %c0_49] : memref<2x28x56xf32, #tpu.memory_space<vmem>>, vector<1x28x56xf32>
    %113 = vector.shape_cast %112 : vector<1x28x56xf32> to vector<28x56xf32>
    %cst_50 = arith.constant dense<0.000000e+00> : vector<28x224xf32>
    %114 = tpu.matmul %113, %108, %cst_50 {dimension_numbers = #tpu.dot_dimension_numbers<[1], [0], [0], [1], [0, 0, 1, 1], [], []>} : vector<28x56xf32>, vector<56x224xf32>, vector<28x224xf32> -> vector<28x224xf32>
    %115 = arith.maximumf %111, %114 : vector<28x224xf32>
    %c0_51 = arith.constant 0 : index
    %c0_52 = arith.constant 0 : index
    %c0_53 = arith.constant 0 : index
    %116 = vector.load %arg12[%c0_51, %c0_52, %c0_53] : memref<2x224x112xf32, #tpu.memory_space<vmem>>, vector<1x224x112xf32>
    %117 = vector.shape_cast %116 : vector<1x224x112xf32> to vector<224x112xf32>
    %cst_54 = arith.constant dense<0.000000e+00> : vector<28x112xf32>
    %118 = tpu.matmul %115, %117, %cst_54 {dimension_numbers = #tpu.dot_dimension_numbers<[1], [0], [0], [1], [0, 0, 1, 1], [], []>} : vector<28x224xf32>, vector<224x112xf32>, vector<28x112xf32> -> vector<28x112xf32>
    %c1_55 = arith.constant 1 : index
    %c0_56 = arith.constant 0 : index
    %c0_57 = arith.constant 0 : index
    %119 = vector.load %arg12[%c1_55, %c0_56, %c0_57] : memref<2x224x112xf32, #tpu.memory_space<vmem>>, vector<1x224x112xf32>
    %120 = vector.shape_cast %119 : vector<1x224x112xf32> to vector<224x112xf32>
    %cst_58 = arith.constant dense<0.000000e+00> : vector<28x112xf32>
    %121 = tpu.matmul %115, %120, %cst_58 {dimension_numbers = #tpu.dot_dimension_numbers<[1], [0], [0], [1], [0, 0, 1, 1], [], []>} : vector<28x224xf32>, vector<224x112xf32>, vector<28x112xf32> -> vector<28x112xf32>
    %122 = arith.maximumf %118, %121 : vector<28x112xf32>
    %123 = vector.extract_strided_slice %122 {offsets = [0, 0], sizes = [12, 112], strides = [1, 1]} : vector<28x112xf32> to vector<12x112xf32>
    %124 = vector.extract_strided_slice %122 {offsets = [1, 0], sizes = [12, 112], strides = [1, 1]} : vector<28x112xf32> to vector<12x112xf32>
    %125 = vector.extract_strided_slice %122 {offsets = [2, 0], sizes = [12, 112], strides = [1, 1]} : vector<28x112xf32> to vector<12x112xf32>
    %126 = tpu.concatenate %123, %124, %125 in 1 : vector<12x112xf32>, vector<12x112xf32>, vector<12x112xf32> -> vector<12x336xf32>
    %127 = vector.extract_strided_slice %122 {offsets = [14, 0], sizes = [12, 112], strides = [1, 1]} : vector<28x112xf32> to vector<12x112xf32>
    %128 = vector.extract_strided_slice %122 {offsets = [15, 0], sizes = [12, 112], strides = [1, 1]} : vector<28x112xf32> to vector<12x112xf32>
    %129 = vector.extract_strided_slice %122 {offsets = [16, 0], sizes = [12, 112], strides = [1, 1]} : vector<28x112xf32> to vector<12x112xf32>
    %130 = tpu.concatenate %127, %128, %129 in 1 : vector<12x112xf32>, vector<12x112xf32>, vector<12x112xf32> -> vector<12x336xf32>
    %131 = tpu.concatenate %126, %130 in 0 : vector<12x336xf32>, vector<12x336xf32> -> vector<24x336xf32>
    %c0_59 = arith.constant 0 : index
    %c0_60 = arith.constant 0 : index
    %132 = vector.load %arg13[%c0_59, %c0_60] : memref<336x192xf32, #tpu.memory_space<vmem>>, vector<336x192xf32>
    %cst_61 = arith.constant dense<0.000000e+00> : vector<24x192xf32>
    %133 = tpu.matmul %131, %132, %cst_61 {dimension_numbers = #tpu.dot_dimension_numbers<[1], [0], [0], [1], [0, 0, 1, 1], [], []>} : vector<24x336xf32>, vector<336x192xf32>, vector<24x192xf32> -> vector<24x192xf32>
    %cst_62 = arith.constant dense<0.000000e+00> : vector<192xf32>
    %134 = vector.multi_reduction <add>, %133, %cst_62 [0] : vector<24x192xf32> to vector<192xf32>
    %135 = vector.shape_cast %134 : vector<192xf32> to vector<1x192xf32>
    %136 = arith.mulf %133, %133 : vector<24x192xf32>
    %cst_63 = arith.constant dense<0.000000e+00> : vector<192xf32>
    %137 = vector.multi_reduction <add>, %136, %cst_63 [0] : vector<24x192xf32> to vector<192xf32>
    %138 = vector.shape_cast %137 : vector<192xf32> to vector<1x192xf32>
    %139 = tpu.concatenate %135, %138 in 0 : vector<1x192xf32>, vector<1x192xf32> -> vector<2x192xf32>
    %c0_64 = arith.constant 0 : index
    %c0_65 = arith.constant 0 : index
    %140 = vector.load %arg16[%c0_64, %c0_65] : memref<192x16xf32, #tpu.memory_space<vmem>>, vector<192x16xf32>
    %cst_66 = arith.constant dense<0.000000e+00> : vector<2x16xf32>
    %141 = tpu.matmul %139, %140, %cst_66 {dimension_numbers = #tpu.dot_dimension_numbers<[1], [0], [0], [1], [0, 0, 1, 1], [], []>} : vector<2x192xf32>, vector<192x16xf32>, vector<2x16xf32> -> vector<2x16xf32>
    %cst_67 = arith.constant 0.00347222225 : f32
    %142 = vector.broadcast %cst_67 : f32 to vector<2x16xf32>
    %143 = arith.mulf %141, %142 : vector<2x16xf32>
    %144 = vector.extract_strided_slice %143 {offsets = [0, 0], sizes = [1, 16], strides = [1, 1]} : vector<2x16xf32> to vector<1x16xf32>
    %145 = vector.extract_strided_slice %143 {offsets = [1, 0], sizes = [1, 16], strides = [1, 1]} : vector<2x16xf32> to vector<1x16xf32>
    %146 = arith.mulf %144, %144 : vector<1x16xf32>
    %147 = arith.subf %145, %146 : vector<1x16xf32>
    %cst_68 = arith.constant 0.000000e+00 : f32
    %148 = vector.broadcast %cst_68 : f32 to vector<1x16xf32>
    %149 = arith.maximumf %147, %148 : vector<1x16xf32>
    %c0_69 = arith.constant 0 : index
    %c0_70 = arith.constant 0 : index
    %150 = vector.load %arg14[%c0_69, %c0_70] : memref<1x16xf32, #tpu.memory_space<vmem>>, vector<1x16xf32>
    %cst_71 = arith.constant 9.99999974E-6 : f32
    %151 = vector.broadcast %cst_71 : f32 to vector<1x16xf32>
    %152 = arith.addf %149, %151 : vector<1x16xf32>
    %153 = math.rsqrt %152 : vector<1x16xf32>
    %154 = arith.mulf %150, %153 : vector<1x16xf32>
    %c0_72 = arith.constant 0 : index
    %c0_73 = arith.constant 0 : index
    %155 = vector.load %arg15[%c0_72, %c0_73] : memref<1x16xf32, #tpu.memory_space<vmem>>, vector<1x16xf32>
    %156 = arith.mulf %144, %154 : vector<1x16xf32>
    %157 = arith.subf %155, %156 : vector<1x16xf32>
    %158 = tpu.concatenate %154, %157 in 0 : vector<1x16xf32>, vector<1x16xf32> -> vector<2x16xf32>
    %c0_74 = arith.constant 0 : index
    %c0_75 = arith.constant 0 : index
    %159 = vector.load %arg17[%c0_74, %c0_75] : memref<16x192xf32, #tpu.memory_space<vmem>>, vector<16x192xf32>
    %cst_76 = arith.constant dense<0.000000e+00> : vector<2x192xf32>
    %160 = tpu.matmul %158, %159, %cst_76 {dimension_numbers = #tpu.dot_dimension_numbers<[1], [0], [0], [1], [0, 0, 1, 1], [], []>} : vector<2x16xf32>, vector<16x192xf32>, vector<2x192xf32> -> vector<2x192xf32>
    %161 = vector.extract_strided_slice %160 {offsets = [0, 0], sizes = [1, 192], strides = [1, 1]} : vector<2x192xf32> to vector<1x192xf32>
    %162 = vector.broadcast %161 : vector<1x192xf32> to vector<24x192xf32>
    %163 = arith.mulf %133, %162 : vector<24x192xf32>
    %164 = vector.extract_strided_slice %160 {offsets = [1, 0], sizes = [1, 192], strides = [1, 1]} : vector<2x192xf32> to vector<1x192xf32>
    %165 = vector.broadcast %164 : vector<1x192xf32> to vector<24x192xf32>
    %166 = arith.addf %163, %165 : vector<24x192xf32>
    %cst_77 = arith.constant 0.000000e+00 : f32
    %167 = vector.broadcast %cst_77 : f32 to vector<24x192xf32>
    %168 = arith.cmpf ogt, %166, %167 : vector<24x192xf32>
    %cst_78 = arith.constant 0.000000e+00 : f32
    %169 = vector.broadcast %cst_78 : f32 to vector<24x192xf32>
    %170 = arith.minimumf %166, %169 : vector<24x192xf32>
    %171 = math.exp %170 : vector<24x192xf32>
    %cst_79 = arith.constant 1.000000e+00 : f32
    %172 = vector.broadcast %cst_79 : f32 to vector<24x192xf32>
    %173 = arith.subf %171, %172 : vector<24x192xf32>
    %cst_80 = arith.constant 1.000000e+00 : f32
    %174 = vector.broadcast %cst_80 : f32 to vector<24x192xf32>
    %175 = arith.mulf %174, %173 : vector<24x192xf32>
    %176 = arith.select %168, %166, %175 : vector<24x192xi1>, vector<24x192xf32>
    %177 = vector.extract_strided_slice %176 {offsets = [0, 0], sizes = [10, 192], strides = [1, 1]} : vector<24x192xf32> to vector<10x192xf32>
    %178 = vector.extract_strided_slice %176 {offsets = [1, 0], sizes = [10, 192], strides = [1, 1]} : vector<24x192xf32> to vector<10x192xf32>
    %179 = vector.extract_strided_slice %176 {offsets = [2, 0], sizes = [10, 192], strides = [1, 1]} : vector<24x192xf32> to vector<10x192xf32>
    %180 = tpu.concatenate %177, %178, %179 in 1 : vector<10x192xf32>, vector<10x192xf32>, vector<10x192xf32> -> vector<10x576xf32>
    %181 = vector.extract_strided_slice %176 {offsets = [12, 0], sizes = [10, 192], strides = [1, 1]} : vector<24x192xf32> to vector<10x192xf32>
    %182 = vector.extract_strided_slice %176 {offsets = [13, 0], sizes = [10, 192], strides = [1, 1]} : vector<24x192xf32> to vector<10x192xf32>
    %183 = vector.extract_strided_slice %176 {offsets = [14, 0], sizes = [10, 192], strides = [1, 1]} : vector<24x192xf32> to vector<10x192xf32>
    %184 = tpu.concatenate %181, %182, %183 in 1 : vector<10x192xf32>, vector<10x192xf32>, vector<10x192xf32> -> vector<10x576xf32>
    %185 = tpu.concatenate %180, %184 in 0 : vector<10x576xf32>, vector<10x576xf32> -> vector<20x576xf32>
    %c0_81 = arith.constant 0 : index
    %c0_82 = arith.constant 0 : index
    %186 = vector.load %arg18[%c0_81, %c0_82] : memref<576x160xf32, #tpu.memory_space<vmem>>, vector<576x160xf32>
    %cst_83 = arith.constant dense<0.000000e+00> : vector<20x160xf32>
    %187 = tpu.matmul %185, %186, %cst_83 {dimension_numbers = #tpu.dot_dimension_numbers<[1], [0], [0], [1], [0, 0, 1, 1], [], []>} : vector<20x576xf32>, vector<576x160xf32>, vector<20x160xf32> -> vector<20x160xf32>
    %cst_84 = arith.constant dense<0.000000e+00> : vector<160xf32>
    %188 = vector.multi_reduction <add>, %187, %cst_84 [0] : vector<20x160xf32> to vector<160xf32>
    %189 = vector.shape_cast %188 : vector<160xf32> to vector<1x160xf32>
    %190 = arith.mulf %187, %187 : vector<20x160xf32>
    %cst_85 = arith.constant dense<0.000000e+00> : vector<160xf32>
    %191 = vector.multi_reduction <add>, %190, %cst_85 [0] : vector<20x160xf32> to vector<160xf32>
    %192 = vector.shape_cast %191 : vector<160xf32> to vector<1x160xf32>
    %193 = tpu.concatenate %189, %192 in 0 : vector<1x160xf32>, vector<1x160xf32> -> vector<2x160xf32>
    %c0_86 = arith.constant 0 : index
    %c0_87 = arith.constant 0 : index
    %194 = vector.load %arg21[%c0_86, %c0_87] : memref<160x16xf32, #tpu.memory_space<vmem>>, vector<160x16xf32>
    %cst_88 = arith.constant dense<0.000000e+00> : vector<2x16xf32>
    %195 = tpu.matmul %193, %194, %cst_88 {dimension_numbers = #tpu.dot_dimension_numbers<[1], [0], [0], [1], [0, 0, 1, 1], [], []>} : vector<2x160xf32>, vector<160x16xf32>, vector<2x16xf32> -> vector<2x16xf32>
    %cst_89 = arith.constant 5.000000e-03 : f32
    %196 = vector.broadcast %cst_89 : f32 to vector<2x16xf32>
    %197 = arith.mulf %195, %196 : vector<2x16xf32>
    %198 = vector.extract_strided_slice %197 {offsets = [0, 0], sizes = [1, 16], strides = [1, 1]} : vector<2x16xf32> to vector<1x16xf32>
    %199 = vector.extract_strided_slice %197 {offsets = [1, 0], sizes = [1, 16], strides = [1, 1]} : vector<2x16xf32> to vector<1x16xf32>
    %200 = arith.mulf %198, %198 : vector<1x16xf32>
    %201 = arith.subf %199, %200 : vector<1x16xf32>
    %cst_90 = arith.constant 0.000000e+00 : f32
    %202 = vector.broadcast %cst_90 : f32 to vector<1x16xf32>
    %203 = arith.maximumf %201, %202 : vector<1x16xf32>
    %c0_91 = arith.constant 0 : index
    %c0_92 = arith.constant 0 : index
    %204 = vector.load %arg19[%c0_91, %c0_92] : memref<1x16xf32, #tpu.memory_space<vmem>>, vector<1x16xf32>
    %cst_93 = arith.constant 9.99999974E-6 : f32
    %205 = vector.broadcast %cst_93 : f32 to vector<1x16xf32>
    %206 = arith.addf %203, %205 : vector<1x16xf32>
    %207 = math.rsqrt %206 : vector<1x16xf32>
    %208 = arith.mulf %204, %207 : vector<1x16xf32>
    %c0_94 = arith.constant 0 : index
    %c0_95 = arith.constant 0 : index
    %209 = vector.load %arg20[%c0_94, %c0_95] : memref<1x16xf32, #tpu.memory_space<vmem>>, vector<1x16xf32>
    %210 = arith.mulf %198, %208 : vector<1x16xf32>
    %211 = arith.subf %209, %210 : vector<1x16xf32>
    %212 = tpu.concatenate %208, %211 in 0 : vector<1x16xf32>, vector<1x16xf32> -> vector<2x16xf32>
    %c0_96 = arith.constant 0 : index
    %c0_97 = arith.constant 0 : index
    %213 = vector.load %arg22[%c0_96, %c0_97] : memref<16x160xf32, #tpu.memory_space<vmem>>, vector<16x160xf32>
    %cst_98 = arith.constant dense<0.000000e+00> : vector<2x160xf32>
    %214 = tpu.matmul %212, %213, %cst_98 {dimension_numbers = #tpu.dot_dimension_numbers<[1], [0], [0], [1], [0, 0, 1, 1], [], []>} : vector<2x16xf32>, vector<16x160xf32>, vector<2x160xf32> -> vector<2x160xf32>
    %215 = vector.extract_strided_slice %214 {offsets = [0, 0], sizes = [1, 160], strides = [1, 1]} : vector<2x160xf32> to vector<1x160xf32>
    %216 = vector.broadcast %215 : vector<1x160xf32> to vector<20x160xf32>
    %217 = arith.mulf %187, %216 : vector<20x160xf32>
    %218 = vector.extract_strided_slice %214 {offsets = [1, 0], sizes = [1, 160], strides = [1, 1]} : vector<2x160xf32> to vector<1x160xf32>
    %219 = vector.broadcast %218 : vector<1x160xf32> to vector<20x160xf32>
    %220 = arith.addf %217, %219 : vector<20x160xf32>
    %cst_99 = arith.constant 0.000000e+00 : f32
    %221 = vector.broadcast %cst_99 : f32 to vector<20x160xf32>
    %222 = arith.cmpf ogt, %220, %221 : vector<20x160xf32>
    %cst_100 = arith.constant 0.000000e+00 : f32
    %223 = vector.broadcast %cst_100 : f32 to vector<20x160xf32>
    %224 = arith.minimumf %220, %223 : vector<20x160xf32>
    %225 = math.exp %224 : vector<20x160xf32>
    %cst_101 = arith.constant 1.000000e+00 : f32
    %226 = vector.broadcast %cst_101 : f32 to vector<20x160xf32>
    %227 = arith.subf %225, %226 : vector<20x160xf32>
    %cst_102 = arith.constant 1.000000e+00 : f32
    %228 = vector.broadcast %cst_102 : f32 to vector<20x160xf32>
    %229 = arith.mulf %228, %227 : vector<20x160xf32>
    %230 = arith.select %222, %220, %229 : vector<20x160xi1>, vector<20x160xf32>
    %c0_103 = arith.constant 0 : index
    %c0_104 = arith.constant 0 : index
    %c0_105 = arith.constant 0 : index
    %231 = vector.load %arg23[%c0_103, %c0_104, %c0_105] : memref<2x10x20xf32, #tpu.memory_space<vmem>>, vector<1x10x20xf32>
    %232 = vector.shape_cast %231 : vector<1x10x20xf32> to vector<10x20xf32>
    %cst_106 = arith.constant dense<0.000000e+00> : vector<10x160xf32>
    %233 = tpu.matmul %232, %230, %cst_106 {dimension_numbers = #tpu.dot_dimension_numbers<[1], [0], [0], [1], [0, 0, 1, 1], [], []>} : vector<10x20xf32>, vector<20x160xf32>, vector<10x160xf32> -> vector<10x160xf32>
    %c1_107 = arith.constant 1 : index
    %c0_108 = arith.constant 0 : index
    %c0_109 = arith.constant 0 : index
    %234 = vector.load %arg23[%c1_107, %c0_108, %c0_109] : memref<2x10x20xf32, #tpu.memory_space<vmem>>, vector<1x10x20xf32>
    %235 = vector.shape_cast %234 : vector<1x10x20xf32> to vector<10x20xf32>
    %cst_110 = arith.constant dense<0.000000e+00> : vector<10x160xf32>
    %236 = tpu.matmul %235, %230, %cst_110 {dimension_numbers = #tpu.dot_dimension_numbers<[1], [0], [0], [1], [0, 0, 1, 1], [], []>} : vector<10x20xf32>, vector<20x160xf32>, vector<10x160xf32> -> vector<10x160xf32>
    %237 = arith.maximumf %233, %236 : vector<10x160xf32>
    %c0_111 = arith.constant 0 : index
    %c0_112 = arith.constant 0 : index
    %c0_113 = arith.constant 0 : index
    %238 = vector.load %arg24[%c0_111, %c0_112, %c0_113] : memref<2x160x80xf32, #tpu.memory_space<vmem>>, vector<1x160x80xf32>
    %239 = vector.shape_cast %238 : vector<1x160x80xf32> to vector<160x80xf32>
    %cst_114 = arith.constant dense<0.000000e+00> : vector<10x80xf32>
    %240 = tpu.matmul %237, %239, %cst_114 {dimension_numbers = #tpu.dot_dimension_numbers<[1], [0], [0], [1], [0, 0, 1, 1], [], []>} : vector<10x160xf32>, vector<160x80xf32>, vector<10x80xf32> -> vector<10x80xf32>
    %c1_115 = arith.constant 1 : index
    %c0_116 = arith.constant 0 : index
    %c0_117 = arith.constant 0 : index
    %241 = vector.load %arg24[%c1_115, %c0_116, %c0_117] : memref<2x160x80xf32, #tpu.memory_space<vmem>>, vector<1x160x80xf32>
    %242 = vector.shape_cast %241 : vector<1x160x80xf32> to vector<160x80xf32>
    %cst_118 = arith.constant dense<0.000000e+00> : vector<10x80xf32>
    %243 = tpu.matmul %237, %242, %cst_118 {dimension_numbers = #tpu.dot_dimension_numbers<[1], [0], [0], [1], [0, 0, 1, 1], [], []>} : vector<10x160xf32>, vector<160x80xf32>, vector<10x80xf32> -> vector<10x80xf32>
    %244 = arith.maximumf %240, %243 : vector<10x80xf32>
    %245 = vector.extract_strided_slice %244 {offsets = [0, 0], sizes = [3, 80], strides = [1, 1]} : vector<10x80xf32> to vector<3x80xf32>
    %246 = vector.extract_strided_slice %244 {offsets = [1, 0], sizes = [3, 80], strides = [1, 1]} : vector<10x80xf32> to vector<3x80xf32>
    %247 = vector.extract_strided_slice %244 {offsets = [2, 0], sizes = [3, 80], strides = [1, 1]} : vector<10x80xf32> to vector<3x80xf32>
    %248 = tpu.concatenate %245, %246, %247 in 1 : vector<3x80xf32>, vector<3x80xf32>, vector<3x80xf32> -> vector<3x240xf32>
    %249 = vector.extract_strided_slice %244 {offsets = [5, 0], sizes = [3, 80], strides = [1, 1]} : vector<10x80xf32> to vector<3x80xf32>
    %250 = vector.extract_strided_slice %244 {offsets = [6, 0], sizes = [3, 80], strides = [1, 1]} : vector<10x80xf32> to vector<3x80xf32>
    %251 = vector.extract_strided_slice %244 {offsets = [7, 0], sizes = [3, 80], strides = [1, 1]} : vector<10x80xf32> to vector<3x80xf32>
    %252 = tpu.concatenate %249, %250, %251 in 1 : vector<3x80xf32>, vector<3x80xf32>, vector<3x80xf32> -> vector<3x240xf32>
    %253 = tpu.concatenate %248, %252 in 0 : vector<3x240xf32>, vector<3x240xf32> -> vector<6x240xf32>
    %c0_119 = arith.constant 0 : index
    %c0_120 = arith.constant 0 : index
    %254 = vector.load %arg25[%c0_119, %c0_120] : memref<240x48xf32, #tpu.memory_space<vmem>>, vector<240x48xf32>
    %cst_121 = arith.constant dense<0.000000e+00> : vector<6x48xf32>
    %255 = tpu.matmul %253, %254, %cst_121 {dimension_numbers = #tpu.dot_dimension_numbers<[1], [0], [0], [1], [0, 0, 1, 1], [], []>} : vector<6x240xf32>, vector<240x48xf32>, vector<6x48xf32> -> vector<6x48xf32>
    %c0_122 = arith.constant 0 : index
    %c0_123 = arith.constant 0 : index
    %256 = vector.load %arg26[%c0_122, %c0_123] : memref<1x48xf32, #tpu.memory_space<vmem>>, vector<1x48xf32>
    %257 = vector.broadcast %256 : vector<1x48xf32> to vector<6x48xf32>
    %258 = arith.addf %255, %257 : vector<6x48xf32>
    %cst_124 = arith.constant 0.000000e+00 : f32
    %259 = vector.broadcast %cst_124 : f32 to vector<6x48xf32>
    %260 = arith.cmpf ogt, %258, %259 : vector<6x48xf32>
    %cst_125 = arith.constant 0.000000e+00 : f32
    %261 = vector.broadcast %cst_125 : f32 to vector<6x48xf32>
    %262 = arith.minimumf %258, %261 : vector<6x48xf32>
    %263 = math.exp %262 : vector<6x48xf32>
    %cst_126 = arith.constant 1.000000e+00 : f32
    %264 = vector.broadcast %cst_126 : f32 to vector<6x48xf32>
    %265 = arith.subf %263, %264 : vector<6x48xf32>
    %cst_127 = arith.constant 1.000000e+00 : f32
    %266 = vector.broadcast %cst_127 : f32 to vector<6x48xf32>
    %267 = arith.mulf %266, %265 : vector<6x48xf32>
    %268 = arith.select %260, %258, %267 : vector<6x48xi1>, vector<6x48xf32>
    %269 = vector.extract_strided_slice %268 {offsets = [0, 0], sizes = [1, 48], strides = [1, 1]} : vector<6x48xf32> to vector<1x48xf32>
    %270 = vector.extract_strided_slice %268 {offsets = [1, 0], sizes = [1, 48], strides = [1, 1]} : vector<6x48xf32> to vector<1x48xf32>
    %271 = vector.extract_strided_slice %268 {offsets = [2, 0], sizes = [1, 48], strides = [1, 1]} : vector<6x48xf32> to vector<1x48xf32>
    %272 = tpu.concatenate %269, %270, %271 in 1 : vector<1x48xf32>, vector<1x48xf32>, vector<1x48xf32> -> vector<1x144xf32>
    %273 = vector.extract_strided_slice %268 {offsets = [3, 0], sizes = [1, 48], strides = [1, 1]} : vector<6x48xf32> to vector<1x48xf32>
    %274 = vector.extract_strided_slice %268 {offsets = [4, 0], sizes = [1, 48], strides = [1, 1]} : vector<6x48xf32> to vector<1x48xf32>
    %275 = vector.extract_strided_slice %268 {offsets = [5, 0], sizes = [1, 48], strides = [1, 1]} : vector<6x48xf32> to vector<1x48xf32>
    %276 = tpu.concatenate %273, %274, %275 in 1 : vector<1x48xf32>, vector<1x48xf32>, vector<1x48xf32> -> vector<1x144xf32>
    %277 = tpu.concatenate %272, %276 in 0 : vector<1x144xf32>, vector<1x144xf32> -> vector<2x144xf32>
    %c0_128 = arith.constant 0 : index
    %c0_129 = arith.constant 0 : index
    %278 = vector.load %arg27[%c0_128, %c0_129] : memref<144x16xf32, #tpu.memory_space<vmem>>, vector<144x16xf32>
    %cst_130 = arith.constant dense<0.000000e+00> : vector<2x16xf32>
    %279 = tpu.matmul %277, %278, %cst_130 {dimension_numbers = #tpu.dot_dimension_numbers<[1], [0], [0], [1], [0, 0, 1, 1], [], []>} : vector<2x144xf32>, vector<144x16xf32>, vector<2x16xf32> -> vector<2x16xf32>
    %c0_131 = arith.constant 0 : index
    %c0_132 = arith.constant 0 : index
    %280 = vector.load %arg28[%c0_131, %c0_132] : memref<1x16xf32, #tpu.memory_space<vmem>>, vector<1x16xf32>
    %281 = vector.broadcast %280 : vector<1x16xf32> to vector<2x16xf32>
    %282 = arith.addf %279, %281 : vector<2x16xf32>
    %cst_133 = arith.constant 0.000000e+00 : f32
    %283 = vector.broadcast %cst_133 : f32 to vector<2x16xf32>
    %284 = arith.cmpf ogt, %282, %283 : vector<2x16xf32>
    %cst_134 = arith.constant 0.000000e+00 : f32
    %285 = vector.broadcast %cst_134 : f32 to vector<2x16xf32>
    %286 = arith.minimumf %282, %285 : vector<2x16xf32>
    %287 = math.exp %286 : vector<2x16xf32>
    %cst_135 = arith.constant 1.000000e+00 : f32
    %288 = vector.broadcast %cst_135 : f32 to vector<2x16xf32>
    %289 = arith.subf %287, %288 : vector<2x16xf32>
    %cst_136 = arith.constant 1.000000e+00 : f32
    %290 = vector.broadcast %cst_136 : f32 to vector<2x16xf32>
    %291 = arith.mulf %290, %289 : vector<2x16xf32>
    %292 = arith.select %284, %282, %291 : vector<2x16xi1>, vector<2x16xf32>
    %c0_137 = arith.constant 0 : index
    %c0_138 = arith.constant 0 : index
    %293 = vector.load %arg29[%c0_137, %c0_138] : memref<16x16xf32, #tpu.memory_space<vmem>>, vector<16x16xf32>
    %c0_139 = arith.constant 0 : index
    %c0_140 = arith.constant 0 : index
    %294 = vector.load %arg30[%c0_139, %c0_140] : memref<1x16xf32, #tpu.memory_space<vmem>>, vector<1x16xf32>
    %c0_141 = arith.constant 0 : index
    %c0_142 = arith.constant 0 : index
    %295 = vector.load %arg31[%c0_141, %c0_142] : memref<16x10xf32, #tpu.memory_space<vmem>>, vector<16x10xf32>
    %c0_143 = arith.constant 0 : index
    %c0_144 = arith.constant 0 : index
    %296 = vector.load %arg32[%c0_143, %c0_144] : memref<1x10xf32, #tpu.memory_space<vmem>>, vector<1x10xf32>
    %cst_145 = arith.constant dense<0.000000e+00> : vector<2x16xf32>
    %297 = tpu.matmul %292, %293, %cst_145 {dimension_numbers = #tpu.dot_dimension_numbers<[1], [0], [0], [1], [0, 0, 1, 1], [], []>} : vector<2x16xf32>, vector<16x16xf32>, vector<2x16xf32> -> vector<2x16xf32>
    %298 = vector.broadcast %294 : vector<1x16xf32> to vector<2x16xf32>
    %299 = arith.addf %297, %298 : vector<2x16xf32>
    %cst_146 = arith.constant 0.000000e+00 : f32
    %300 = vector.broadcast %cst_146 : f32 to vector<2x16xf32>
    %301 = arith.cmpf ogt, %299, %300 : vector<2x16xf32>
    %cst_147 = arith.constant 0.000000e+00 : f32
    %302 = vector.broadcast %cst_147 : f32 to vector<2x16xf32>
    %303 = arith.minimumf %299, %302 : vector<2x16xf32>
    %304 = math.exp %303 : vector<2x16xf32>
    %cst_148 = arith.constant 1.000000e+00 : f32
    %305 = vector.broadcast %cst_148 : f32 to vector<2x16xf32>
    %306 = arith.subf %304, %305 : vector<2x16xf32>
    %cst_149 = arith.constant 1.000000e+00 : f32
    %307 = vector.broadcast %cst_149 : f32 to vector<2x16xf32>
    %308 = arith.mulf %307, %306 : vector<2x16xf32>
    %309 = arith.select %301, %299, %308 : vector<2x16xi1>, vector<2x16xf32>
    %cst_150 = arith.constant dense<0.000000e+00> : vector<2x10xf32>
    %310 = tpu.matmul %309, %295, %cst_150 {dimension_numbers = #tpu.dot_dimension_numbers<[1], [0], [0], [1], [0, 0, 1, 1], [], []>} : vector<2x16xf32>, vector<16x10xf32>, vector<2x10xf32> -> vector<2x10xf32>
    %311 = vector.broadcast %296 : vector<1x10xf32> to vector<2x10xf32>
    %312 = arith.addf %310, %311 : vector<2x10xf32>
    %c0_151 = arith.constant 0 : index
    %c0_152 = arith.constant 0 : index
    %313 = vector.load %arg33[%c0_151, %c0_152] : memref<2x10xf32, #tpu.memory_space<vmem>>, vector<2x10xf32>
    tpu.vector_store %arg33[%c0_151, %c0_152], %312 {strides = array<i32>} : memref<2x10xf32, #tpu.memory_space<vmem>>, vector<2x10xf32>,
    return
  }
}

</mosaic_0001>

<llo_original>
// kernel: forward.1
$region0: #{forward.1}
  #allocation0 [shape = 'u32[]', space=smem, size = 0x4, offset = 0x4, fixed_abs, tag = 'smem constant byte address 0x4 - core index']
  #allocation1 [shape = 'u32[72,128]{1,0:T(1,128)}', space=vmem, size = 0x9000, scoped, tag = 'internal scratch']
  %s0 = inlined_call_operand.smem [shape: u32[34], index: -1, kind: input, shape index: {}]
  %s1 = sld [smem:[%s0]]
  %s2 = scalar_lea.smem %s0, 1
  %s3 = sld [smem:[%s2]]
  %s4 = scalar_lea.smem %s0, 2
  %s5 = sld [smem:[%s4]]
  %s6 = scalar_lea.smem %s0, 3
  %s7 = sld [smem:[%s6]]
  %s8 = scalar_lea.smem %s0, 4
  %s9 = sld [smem:[%s8]]
  %s10 = scalar_lea.smem %s0, 5
  %s11 = sld [smem:[%s10]]
  %s12 = scalar_lea.smem %s0, 6
  %s13 = sld [smem:[%s12]]
  %s14 = scalar_lea.smem %s0, 7
  %s15 = sld [smem:[%s14]]
  %s16 = scalar_lea.smem %s0, 8
  %s17 = sld [smem:[%s16]]
  %s18 = scalar_lea.smem %s0, 9
  %s19 = sld [smem:[%s18]]
  %s20 = scalar_lea.smem %s0, 10
  %s21 = sld [smem:[%s20]]
  %s22 = scalar_lea.smem %s0, 11
  %s23 = sld [smem:[%s22]]
  %s24 = scalar_lea.smem %s0, 12
  %s25 = sld [smem:[%s24]]
  %s26 = scalar_lea.smem %s0, 13
  %s27 = sld [smem:[%s26]]
  %s28 = scalar_lea.smem %s0, 14
  %s29 = sld [smem:[%s28]]
  %s30 = scalar_lea.smem %s0, 15
  %s31 = sld [smem:[%s30]]
  %s32 = scalar_lea.smem %s0, 16
  %s33 = sld [smem:[%s32]]
  %s34 = scalar_lea.smem %s0, 17
  %s35 = sld [smem:[%s34]]
  %s36 = scalar_lea.smem %s0, 18
  %s37 = sld [smem:[%s36]]
  %s38 = scalar_lea.smem %s0, 19
  %s39 = sld [smem:[%s38]]
  %s40 = scalar_lea.smem %s0, 20
  %s41 = sld [smem:[%s40]]
  %s42 = scalar_lea.smem %s0, 21
  %s43 = sld [smem:[%s42]]
  %s44 = scalar_lea.smem %s0, 22
  %s45 = sld [smem:[%s44]]
  %s46 = scalar_lea.smem %s0, 23
  %s47 = sld [smem:[%s46]]
  %s48 = scalar_lea.smem %s0, 24
  %s49 = sld [smem:[%s48]]
  %s50 = scalar_lea.smem %s0, 25
  %s51 = sld [smem:[%s50]]
  %s52 = scalar_lea.smem %s0, 26
  %s53 = sld [smem:[%s52]]
  %s54 = scalar_lea.smem %s0, 27
  %s55 = sld [smem:[%s54]]
  %s56 = scalar_lea.smem %s0, 28
  %s57 = sld [smem:[%s56]]
  %s58 = scalar_lea.smem %s0, 29
  %s59 = sld [smem:[%s58]]
  %s60 = scalar_lea.smem %s0, 30
  %s61 = sld [smem:[%s60]]
  %s62 = scalar_lea.smem %s0, 31
  %s63 = sld [smem:[%s62]]
  %s64 = scalar_lea.smem %s0, 32
  %s65 = sld [smem:[%s64]]
  %s66 = scalar_lea.smem %s0, 33
  %s67 = sld [smem:[%s66]]
  %s68 = sld [smem:[#allocation0]]
  $region142: #{forward.1} parent=0
    _
  %s70 = ssub.s32 1, %s68
  %s71 = scalar_select 0, %s70, %s68
  $region1: #{forward.1} parent=0
    #allocation2 [shape = 'u8[1024]{0}', space=vmem, size = 0x400, scoped, tag = 'output window, operand 0, single buffered']
    #allocation3 [shape = 's32[1]{0}', space=sflag, size = 0x4, scoped, tag = 'scoped memory for forward.1']
    %72 = vsyncpa [#allocation3], 0
    // Predicated region
    $region2: #{forward.1} parent=1 // pred_check
      _
    $region3: #{forward.1} parent=1 // pred_check_branch
      %74 = sbr.rel (0) target = $region5
    $region4: #{forward.1} parent=1 // pred_region
      _
    $region5: #{forward.1} parent=1 // pred_fallthru
      _
    // Predicated region
    $region6: #{forward.1} parent=1 // pred_check
      _
    $region7: #{forward.1} parent=1 // pred_check_branch
      %76 = sbr.rel (0) target = $region9
    $region8: #{forward.1} parent=1 // pred_region
      _
    $region9: #{forward.1} parent=1 // pred_fallthru
      _
    // Predicated region
    $region10: #{forward.1} parent=1 // pred_check
      _
    $region11: #{forward.1} parent=1 // pred_check_branch
      %78 = sbr.rel (0) target = $region13
    $region12: #{forward.1} parent=1 // pred_region
      _
    $region13: #{forward.1} parent=1 // pred_fallthru
      _
    // Predicated region
    $region14: #{forward.1} parent=1 // pred_check
      _
    $region15: #{forward.1} parent=1 // pred_check_branch
      %80 = sbr.rel (0) target = $region17
    $region16: #{forward.1} parent=1 // pred_region
      _
    $region17: #{forward.1} parent=1 // pred_fallthru
      _
    // Predicated region
    $region18: #{forward.1} parent=1 // pred_check
      _
    $region19: #{forward.1} parent=1 // pred_check_branch
      %82 = sbr.rel (0) target = $region21
    $region20: #{forward.1} parent=1 // pred_region
      _
    $region21: #{forward.1} parent=1 // pred_fallthru
      _
    // Predicated region
    $region22: #{forward.1} parent=1 // pred_check
      _
    $region23: #{forward.1} parent=1 // pred_check_branch
      %84 = sbr.rel (0) target = $region25
    $region24: #{forward.1} parent=1 // pred_region
      _
    $region25: #{forward.1} parent=1 // pred_fallthru
      _
    // Predicated region
    $region26: #{forward.1} parent=1 // pred_check
      _
    $region27: #{forward.1} parent=1 // pred_check_branch
      %86 = sbr.rel (0) target = $region29
    $region28: #{forward.1} parent=1 // pred_region
      _
    $region29: #{forward.1} parent=1 // pred_fallthru
      _
    // Predicated region
    $region30: #{forward.1} parent=1 // pred_check
      _
    $region31: #{forward.1} parent=1 // pred_check_branch
      %88 = sbr.rel (0) target = $region33
    $region32: #{forward.1} parent=1 // pred_region
      _
    $region33: #{forward.1} parent=1 // pred_fallthru
      _
    // Predicated region
    $region34: #{forward.1} parent=1 // pred_check
      _
    $region35: #{forward.1} parent=1 // pred_check_branch
      %90 = sbr.rel (0) target = $region37
    $region36: #{forward.1} parent=1 // pred_region
      _
    $region37: #{forward.1} parent=1 // pred_fallthru
      _
    // Predicated region
    $region38: #{forward.1} parent=1 // pred_check
      _
    $region39: #{forward.1} parent=1 // pred_check_branch
      %92 = sbr.rel (0) target = $region41
    $region40: #{forward.1} parent=1 // pred_region
      _
    $region41: #{forward.1} parent=1 // pred_fallthru
      _
    // Predicated region
    $region42: #{forward.1} parent=1 // pred_check
      _
    $region43: #{forward.1} parent=1 // pred_check_branch
      %94 = sbr.rel (0) target = $region45
    $region44: #{forward.1} parent=1 // pred_region
      _
    $region45: #{forward.1} parent=1 // pred_fallthru
      _
    // Predicated region
    $region46: #{forward.1} parent=1 // pred_check
      _
    $region47: #{forward.1} parent=1 // pred_check_branch
      %96 = sbr.rel (0) target = $region49
    $region48: #{forward.1} parent=1 // pred_region
      _
    $region49: #{forward.1} parent=1 // pred_fallthru
      _
    // Predicated region
    $region50: #{forward.1} parent=1 // pred_check
      _
    $region51: #{forward.1} parent=1 // pred_check_branch
      %98 = sbr.rel (0) target = $region53
    $region52: #{forward.1} parent=1 // pred_region
      _
    $region53: #{forward.1} parent=1 // pred_fallthru
      _
    // Predicated region
    $region54: #{forward.1} parent=1 // pred_check
      _
    $region55: #{forward.1} parent=1 // pred_check_branch
      %100 = sbr.rel (0) target = $region57
    $region56: #{forward.1} parent=1 // pred_region
      _
    $region57: #{forward.1} parent=1 // pred_fallthru
      _
    // Predicated region
    $region58: #{forward.1} parent=1 // pred_check
      _
    $region59: #{forward.1} parent=1 // pred_check_branch
      %102 = sbr.rel (0) target = $region61
    $region60: #{forward.1} parent=1 // pred_region
      _
    $region61: #{forward.1} parent=1 // pred_fallthru
      _
    // Predicated region
    $region62: #{forward.1} parent=1 // pred_check
      _
    $region63: #{forward.1} parent=1 // pred_check_branch
      %104 = sbr.rel (0) target = $region65
    $region64: #{forward.1} parent=1 // pred_region
      _
    $region65: #{forward.1} parent=1 // pred_fallthru
      _
    // Predicated region
    $region66: #{forward.1} parent=1 // pred_check
      _
    $region67: #{forward.1} parent=1 // pred_check_branch
      %106 = sbr.rel (0) target = $region69
    $region68: #{forward.1} parent=1 // pred_region
      _
    $region69: #{forward.1} parent=1 // pred_fallthru
      _
    // Predicated region
    $region70: #{forward.1} parent=1 // pred_check
      _
    $region71: #{forward.1} parent=1 // pred_check_branch
      %108 = sbr.rel (0) target = $region73
    $region72: #{forward.1} parent=1 // pred_region
      _
    $region73: #{forward.1} parent=1 // pred_fallthru
      _
    // Predicated region
    $region74: #{forward.1} parent=1 // pred_check
      _
    $region75: #{forward.1} parent=1 // pred_check_branch
      %110 = sbr.rel (0) target = $region77
    $region76: #{forward.1} parent=1 // pred_region
      _
    $region77: #{forward.1} parent=1 // pred_fallthru
      _
    // Predicated region
    $region78: #{forward.1} parent=1 // pred_check
      _
    $region79: #{forward.1} parent=1 // pred_check_branch
      %112 = sbr.rel (0) target = $region81
    $region80: #{forward.1} parent=1 // pred_region
      _
    $region81: #{forward.1} parent=1 // pred_fallthru
      _
    // Predicated region
    $region82: #{forward.1} parent=1 // pred_check
      _
    $region83: #{forward.1} parent=1 // pred_check_branch
      %114 = sbr.rel (0) target = $region85
    $region84: #{forward.1} parent=1 // pred_region
      _
    $region85: #{forward.1} parent=1 // pred_fallthru
      _
    // Predicated region
    $region86: #{forward.1} parent=1 // pred_check
      _
    $region87: #{forward.1} parent=1 // pred_check_branch
      %116 = sbr.rel (0) target = $region89
    $region88: #{forward.1} parent=1 // pred_region
      _
    $region89: #{forward.1} parent=1 // pred_fallthru
      _
    // Predicated region
    $region90: #{forward.1} parent=1 // pred_check
      _
    $region91: #{forward.1} parent=1 // pred_check_branch
      %118 = sbr.rel (0) target = $region93
    $region92: #{forward.1} parent=1 // pred_region
      _
    $region93: #{forward.1} parent=1 // pred_fallthru
      _
    // Predicated region
    $region94: #{forward.1} parent=1 // pred_check
      _
    $region95: #{forward.1} parent=1 // pred_check_branch
      %120 = sbr.rel (0) target = $region97
    $region96: #{forward.1} parent=1 // pred_region
      _
    $region97: #{forward.1} parent=1 // pred_fallthru
      _
    // Predicated region
    $region98: #{forward.1} parent=1 // pred_check
      _
    $region99: #{forward.1} parent=1 // pred_check_branch
      %122 = sbr.rel (0) target = $region101
    $region100: #{forward.1} parent=1 // pred_region
      _
    $region101: #{forward.1} parent=1 // pred_fallthru
      _
    // Predicated region
    $region102: #{forward.1} parent=1 // pred_check
      _
    $region103: #{forward.1} parent=1 // pred_check_branch
      %124 = sbr.rel (0) target = $region105
    $region104: #{forward.1} parent=1 // pred_region
      _
    $region105: #{forward.1} parent=1 // pred_fallthru
      _
    // Predicated region
    $region106: #{forward.1} parent=1 // pred_check
      _
    $region107: #{forward.1} parent=1 // pred_check_branch
      %126 = sbr.rel (0) target = $region109
    $region108: #{forward.1} parent=1 // pred_region
      _
    $region109: #{forward.1} parent=1 // pred_fallthru
      _
    // Predicated region
    $region110: #{forward.1} parent=1 // pred_check
      _
    $region111: #{forward.1} parent=1 // pred_check_branch
      %128 = sbr.rel (0) target = $region113
    $region112: #{forward.1} parent=1 // pred_region
      _
    $region113: #{forward.1} parent=1 // pred_fallthru
      _
    // Predicated region
    $region114: #{forward.1} parent=1 // pred_check
      _
    $region115: #{forward.1} parent=1 // pred_check_branch
      %130 = sbr.rel (0) target = $region117
    $region116: #{forward.1} parent=1 // pred_region
      _
    $region117: #{forward.1} parent=1 // pred_fallthru
      _
    // Predicated region
    $region118: #{forward.1} parent=1 // pred_check
      _
    $region119: #{forward.1} parent=1 // pred_check_branch
      %132 = sbr.rel (0) target = $region121
    $region120: #{forward.1} parent=1 // pred_region
      _
    $region121: #{forward.1} parent=1 // pred_fallthru
      _
    // Predicated region
    $region122: #{forward.1} parent=1 // pred_check
      _
    $region123: #{forward.1} parent=1 // pred_check_branch
      %134 = sbr.rel (0) target = $region125
    $region124: #{forward.1} parent=1 // pred_region
      _
    $region125: #{forward.1} parent=1 // pred_fallthru
      _
    // Predicated region
    $region126: #{forward.1} parent=1 // pred_check
      _
    $region127: #{forward.1} parent=1 // pred_check_branch
      %136 = sbr.rel (0) target = $region129
    $region128: #{forward.1} parent=1 // pred_region
      _
    $region129: #{forward.1} parent=1 // pred_fallthru
      _
    // Predicated region
    $region130: #{forward.1} parent=1 // pred_check
      _
    $region131: #{forward.1} parent=1 // pred_check_branch
      %138 = sbr.rel (0) target = $region133
    $region132: #{forward.1} parent=1 // pred_region
      _
    $region133: #{forward.1} parent=1 // pred_fallthru
      _
    %v139 = vld [vmem:[%s1] sm:$0xff]
    %v140 = vld [vmem:[%s1 + $0x8] sm:$0xff]
    %v141 = vld [vmem:[%s1 + $0x10] sm:$0xff]
    %v142 = vld [vmem:[%s1 + $0x18] sm:$0xff]
    %v143 = vld [vmem:[%s1 + $0x20] sm:$0xff]
    %v144 = vld [vmem:[%s1 + $0x28] sm:$0xff]
    %v145 = vld [vmem:[%s1 + $0x30] sm:$0xff]
    %v146 = vld [vmem:[%s1 + $0x38] sm:$0xff]
    %vm151 = vcmask 1046528
    %v152 = vrot.slane %v139, 1
    %v153 = vrot.slane %v140, 1
    %v154 = vsel %vm151, %v152, %v153
    %v155 = vrot.slane %v141, 1
    %v156 = vsel %vm151, %v153, %v155
    %v157 = vrot.slane %v142, 1
    %v158 = vsel %vm151, %v155, %v157
    %159 = vrot.lane.b32.xlu0 %v154, 96
    %v160 = vpop.permute.xlu0 %159
    %161 = vrot.lane.b32.xlu0 %v156, 96
    %v162 = vpop.permute.xlu0 %161
    %163 = vrot.lane.b32.xlu0 %v158, 96
    %v164 = vpop.permute.xlu0 %163
    %165 = vrot.lane.b32.xlu0 %v157, 96
    %v166 = vpop.permute.xlu0 %165
    %vm171 = vcmask 1045504
    %v172 = vrot.slane %v139, 2
    %v173 = vrot.slane %v140, 2
    %v174 = vsel %vm171, %v172, %v173
    %v175 = vrot.slane %v141, 2
    %v176 = vsel %vm171, %v173, %v175
    %v177 = vrot.slane %v142, 2
    %v178 = vsel %vm171, %v175, %v177
    %179 = vrot.lane.b32.xlu0 %v174, 64
    %v180 = vpop.permute.xlu0 %179
    %181 = vrot.lane.b32.xlu0 %v176, 64
    %v182 = vpop.permute.xlu0 %181
    %183 = vrot.lane.b32.xlu0 %v178, 64
    %v184 = vpop.permute.xlu0 %183
    %185 = vrot.lane.b32.xlu0 %v177, 64
    %v186 = vpop.permute.xlu0 %185
    %vm191 = vcmask 785408
    %v192 = vsel %vm191, %v139, %v160
    %v193 = vsel %vm191, %v140, %v162
    %v194 = vsel %vm191, %v141, %v164
    %v195 = vsel %vm191, %v142, %v166
    %vm196 = vcmask 523264
    %v197 = vsel %vm196, %v160, %v180
    %v198 = vsel %vm196, %v162, %v182
    %v199 = vsel %vm196, %v164, %v184
    %v200 = vsel %vm196, %v166, %v186
    %v205 = vrot.slane %v143, 1
    %v206 = vrot.slane %v144, 1
    %v207 = vsel %vm151, %v205, %v206
    %v208 = vrot.slane %v145, 1
    %v209 = vsel %vm151, %v206, %v208
    %v210 = vrot.slane %v146, 1
    %v211 = vsel %vm151, %v208, %v210
    %212 = vrot.lane.b32.xlu0 %v207, 96
    %v213 = vpop.permute.xlu0 %212
    %214 = vrot.lane.b32.xlu0 %v209, 96
    %v215 = vpop.permute.xlu0 %214
    %216 = vrot.lane.b32.xlu0 %v211, 96
    %v217 = vpop.permute.xlu0 %216
    %218 = vrot.lane.b32.xlu0 %v210, 96
    %v219 = vpop.permute.xlu0 %218
    %v224 = vrot.slane %v143, 2
    %v225 = vrot.slane %v144, 2
    %v226 = vsel %vm171, %v224, %v225
    %v227 = vrot.slane %v145, 2
    %v228 = vsel %vm171, %v225, %v227
    %v229 = vrot.slane %v146, 2
    %v230 = vsel %vm171, %v227, %v229
    %231 = vrot.lane.b32.xlu0 %v226, 64
    %v232 = vpop.permute.xlu0 %231
    %233 = vrot.lane.b32.xlu0 %v228, 64
    %v234 = vpop.permute.xlu0 %233
    %235 = vrot.lane.b32.xlu0 %v230, 64
    %v236 = vpop.permute.xlu0 %235
    %237 = vrot.lane.b32.xlu0 %v229, 64
    %v238 = vpop.permute.xlu0 %237
    %v243 = vsel %vm191, %v143, %v213
    %v244 = vsel %vm191, %v144, %v215
    %v245 = vsel %vm191, %v145, %v217
    %v246 = vsel %vm191, %v146, %v219
    %v247 = vsel %vm196, %v213, %v232
    %v248 = vsel %vm196, %v215, %v234
    %v249 = vsel %vm196, %v217, %v236
    %v250 = vsel %vm196, %v219, %v238
    %v259 = vrot.slane %v243, 2
    %v260 = vrot.slane %v247, 2
    %v261 = vrot.slane %v232, 2
    %v262 = vrot.slane %v244, 2
    %v263 = vsel %vm171, %v259, %v262
    %v264 = vrot.slane %v248, 2
    %v265 = vsel %vm171, %v260, %v264
    %v266 = vrot.slane %v234, 2
    %v267 = vsel %vm171, %v261, %v266
    %v268 = vrot.slane %v245, 2
    %v269 = vsel %vm171, %v262, %v268
    %v270 = vrot.slane %v249, 2
    %v271 = vsel %vm171, %v264, %v270
    %v272 = vrot.slane %v236, 2
    %v273 = vsel %vm171, %v266, %v272
    %v274 = vrot.slane %v246, 2
    %v275 = vsel %vm171, %v268, %v274
    %v276 = vrot.slane %v250, 2
    %v277 = vsel %vm171, %v270, %v276
    %v278 = vrot.slane %v238, 2
    %v279 = vsel %vm171, %v272, %v278
    %v291 = vsel %vm171, %v195, %v259
    %v292 = vsel %vm171, %v200, %v260
    %v293 = vsel %vm171, %v186, %v261
    %v294 = vld [vmem:[%s3] sm:$0xff]
    %v295 = vld [vmem:[%s3 + $0x8] sm:$0xff]
    %v296 = vld [vmem:[%s3 + $0x10] sm:$0xff]
    %v297 = vld [vmem:[%s3 + $0x18] sm:$0xff]
    %v298 = vld [vmem:[%s3 + $0x20] sm:$0xff]
    %v299 = vld [vmem:[%s3 + $0x28] sm:$0xff]
    %v300 = vld [vmem:[%s3 + $0x30] sm:$0xff]
    %v301 = vld [vmem:[%s3 + $0x38] sm:$0xff]
    %v302 = vld [vmem:[%s3 + $0x40] sm:$0xff]
    %v303 = vld [vmem:[%s3 + $0x48] sm:$0xff]
    %v304 = vld [vmem:[%s3 + $0x50] sm:$0xff]
    %v305 = vld [vmem:[%s3 + $0x58] sm:$0xff]
    %v306 = vld [vmem:[%s3 + $0x60] sm:$0xff]
    %v307 = vld [vmem:[%s3 + $0x68] sm:$0xff]
    %v308 = vld [vmem:[%s3 + $0x70] sm:$0xff]
    %v309 = vld [vmem:[%s3 + $0x78] sm:$0xff]
    %v310 = vld [vmem:[%s3 + $0x80] sm:$0xff]
    %v311 = vld [vmem:[%s3 + $0x88] sm:$0xff]
    %v312 = vld [vmem:[%s3 + $0x90] sm:$0xff]
    %v313 = vld [vmem:[%s3 + $0x98] sm:$0xff]
    %v314 = vld [vmem:[%s3 + $0xa0] sm:$0xff]
    %v315 = vld [vmem:[%s3 + $0xa8] sm:$0xff]
    %v316 = vld [vmem:[%s3 + $0xb0] sm:$0xff]
    %v317 = vld [vmem:[%s3 + $0xb8] sm:$0xff]
    %v318 = vld [vmem:[%s3 + $0xc0] sm:$0xff]
    %v319 = vld [vmem:[%s3 + $0xc8] sm:$0xff]
    %v320 = vld [vmem:[%s3 + $0xd0] sm:$0xff]
    %v321 = vld [vmem:[%s3 + $0xd8] sm:$0xff]
    %v322 = vld [vmem:[%s3 + $0xe0] sm:$0xff]
    %v323 = vld [vmem:[%s3 + $0xe8] sm:$0xff]
    %v324 = vld [vmem:[%s3 + $0xf0] sm:$0xff]
    %v325 = vld [vmem:[%s3 + $0xf8] sm:$0xff]
    %v326 = vld [vmem:[%s3 + $0x100] sm:$0xff]
    %v327 = vld [vmem:[%s3 + $0x108] sm:$0xff]
    %v328 = vld [vmem:[%s3 + $0x110] sm:$0xff]
    %v329 = vld [vmem:[%s3 + $0x118] sm:$0xff]
    %v330 = vld [vmem:[%s3 + $0x120] sm:$0xff]
    %v331 = vld [vmem:[%s3 + $0x128] sm:$0xff]
    %v332 = vld [vmem:[%s3 + $0x130] sm:$0xff]
    %v333 = vld [vmem:[%s3 + $0x138] sm:$0xff]
    %v334 = vld [vmem:[%s3 + $0x140] sm:$0xff]
    %v335 = vld [vmem:[%s3 + $0x148] sm:$0xff]
    %v336 = vld [vmem:[%s3 + $0x150] sm:$0xff]
    %v337 = vld [vmem:[%s3 + $0x158] sm:$0xff]
    %v338 = vld [vmem:[%s3 + $0x160] sm:$0xff]
    %v339 = vld [vmem:[%s3 + $0x168] sm:$0xff]
    %v340 = vld [vmem:[%s3 + $0x170] sm:$0xff]
    %v341 = vld [vmem:[%s3 + $0x178] sm:$0xff]
    %v342 = vld [vmem:[%s3 + $0x180] sm:$0xff]
    %v343 = vld [vmem:[%s3 + $0x188] sm:$0xff]
    %v344 = vld [vmem:[%s3 + $0x190] sm:$0xff]
    %v345 = vld [vmem:[%s3 + $0x198] sm:$0xff]
    %v346 = vld [vmem:[%s3 + $0x1a0] sm:$0xff]
    %v347 = vld [vmem:[%s3 + $0x1a8] sm:$0xff]
    %v348 = vld [vmem:[%s3 + $0x1b0] sm:$0xff]
    %v349 = vld [vmem:[%s3 + $0x1b8] sm:$0xff]
    %v350 = vld [vmem:[%s3 + $0x1c0] sm:$0xff]
    %v351 = vld [vmem:[%s3 + $0x1c8] sm:$0xff]
    %v352 = vld [vmem:[%s3 + $0x1d0] sm:$0xff]
    %v353 = vld [vmem:[%s3 + $0x1d8] sm:$0xff]
    %v354 = vld [vmem:[%s3 + $0x1e0] sm:$0xff]
    %v355 = vld [vmem:[%s3 + $0x1e8] sm:$0xff]
    %v356 = vld [vmem:[%s3 + $0x1f0] sm:$0xff]
    %v357 = vld [vmem:[%s3 + $0x1f8] sm:$0xff]
    %v358 = vld [vmem:[%s3 + $0x200] sm:$0xff]
    %v359 = vld [vmem:[%s3 + $0x208] sm:$0xff]
    %v360 = vld [vmem:[%s3 + $0x210] sm:$0xff]
    %v361 = vld [vmem:[%s3 + $0x218] sm:$0xff]
    %v362 = vld [vmem:[%s3 + $0x220] sm:$0xff]
    %v363 = vld [vmem:[%s3 + $0x228] sm:$0xff]
    %v364 = vld [vmem:[%s3 + $0x230] sm:$0xff]
    %v365 = vld [vmem:[%s3 + $0x238] sm:$0xff]
    %vm366 = vcmask 261120
    %v367 = vsel %vm366, %v180, 0
    %v369 = vsel %vm366, %v182, 0
    %v371 = vsel %vm366, %v184, 0
    %v374 = vsel %vm366, %v293, 0
    %v376 = vsel %vm366, %v267, 0
    %v378 = vsel %vm366, %v273, 0
    %v380 = vsel %vm366, %v279, 0
    %v382 = vsel %vm366, %v278, 0
    %384 = vmatpush.msra.mxu0 %v324
    %385 = vmatpush.msra.mxu0 %v322
    %386 = vmatpush.msra.mxu0 %v320
    %387 = vmatpush.msra.mxu0 %v318
    %388 = vmatpush.msra.mxu0 %v316
    %389 = vmatpush.msra.mxu0 %v314
    %390 = vmatpush.msra.mxu0 %v312
    %391 = vmatpush.msra.mxu0 %v310
    %392 = vmatpush.msra.mxu0 %v308
    %393 = vmatpush.msra.mxu0 %v306
    %394 = vmatpush.msra.mxu0 %v304
    %395 = vmatpush.msra.mxu0 %v302
    %396 = vmatpush.msra.mxu0 %v300
    %397 = vmatpush.msra.mxu0 %v298
    %398 = vmatpush.msra.mxu0 %v296
    %399 = vmatpush.msra.mxu0 %v294
    %400 = vmatmul.f32.gmra.mxu0 %v192
    %v401 = vpop.f32.mrf.mxu0
    %v402 = vadd.f32 0.0, %v401
    %403 = vmatmul.f32.gmra.mxu0 %v193
    %v404 = vpop.f32.mrf.mxu0
    %v405 = vadd.f32 0.0, %v404
    %406 = vmatmul.f32.gmra.mxu0 %v194
    %v407 = vpop.f32.mrf.mxu0
    %v408 = vadd.f32 0.0, %v407
    %409 = vmatmul.f32.gmra.mxu0 %v291
    %v410 = vpop.f32.mrf.mxu0
    %v411 = vadd.f32 0.0, %v410
    %412 = vmatmul.f32.gmra.mxu0 %v263
    %v413 = vpop.f32.mrf.mxu0
    %v414 = vadd.f32 0.0, %v413
    %415 = vmatmul.f32.gmra.mxu0 %v269
    %v416 = vpop.f32.mrf.mxu0
    %v417 = vadd.f32 0.0, %v416
    %418 = vmatmul.f32.gmra.mxu0 %v275
    %v419 = vpop.f32.mrf.mxu0
    %v420 = vadd.f32 0.0, %v419
    %421 = vmatmul.f32.gmra.mxu0 %v274
    %v422 = vpop.f32.mrf.mxu0
    %v423 = vadd.f32 0.0, %v422
    %424 = vdwg.mxu0
    %425 = vmatpush.msra.mxu0 %v356
    %426 = vmatpush.msra.mxu0 %v354
    %427 = vmatpush.msra.mxu0 %v352
    %428 = vmatpush.msra.mxu0 %v350
    %429 = vmatpush.msra.mxu0 %v348
    %430 = vmatpush.msra.mxu0 %v346
    %431 = vmatpush.msra.mxu0 %v344
    %432 = vmatpush.msra.mxu0 %v342
    %433 = vmatpush.msra.mxu0 %v340
    %434 = vmatpush.msra.mxu0 %v338
    %435 = vmatpush.msra.mxu0 %v336
    %436 = vmatpush.msra.mxu0 %v334
    %437 = vmatpush.msra.mxu0 %v332
    %438 = vmatpush.msra.mxu0 %v330
    %439 = vmatpush.msra.mxu0 %v328
    %440 = vmatpush.msra.mxu0 %v326
    %441 = vmatmul.f32.gmra.mxu0 %v197
    %v442 = vpop.f32.mrf.mxu0
    %v443 = vadd.f32 %v402, %v442
    %444 = vmatmul.f32.gmra.mxu0 %v198
    %v445 = vpop.f32.mrf.mxu0
    %v446 = vadd.f32 %v405, %v445
    %447 = vmatmul.f32.gmra.mxu0 %v199
    %v448 = vpop.f32.mrf.mxu0
    %v449 = vadd.f32 %v408, %v448
    %450 = vmatmul.f32.gmra.mxu0 %v292
    %v451 = vpop.f32.mrf.mxu0
    %v452 = vadd.f32 %v411, %v451
    %453 = vmatmul.f32.gmra.mxu0 %v265
    %v454 = vpop.f32.mrf.mxu0
    %v455 = vadd.f32 %v414, %v454
    %456 = vmatmul.f32.gmra.mxu0 %v271
    %v457 = vpop.f32.mrf.mxu0
    %v458 = vadd.f32 %v417, %v457
    %459 = vmatmul.f32.gmra.mxu0 %v277
    %v460 = vpop.f32.mrf.mxu0
    %v461 = vadd.f32 %v420, %v460
    %462 = vmatmul.f32.gmra.mxu0 %v276
    %v463 = vpop.f32.mrf.mxu0
    %v464 = vadd.f32 %v423, %v463
    %465 = vdwg.mxu0
    %466 = vmatpush.msra.mxu0 0.0
    %467 = vmatpush.msra.mxu0 0.0
    %468 = vmatpush.msra.mxu0 0.0
    %469 = vmatpush.msra.mxu0 0.0
    %470 = vmatpush.msra.mxu0 0.0
    %471 = vmatpush.msra.mxu0 0.0
    %472 = vmatpush.msra.mxu0 0.0
    %473 = vmatpush.msra.mxu0 0.0
    %474 = vmatpush.msra.mxu0 0.0
    %475 = vmatpush.msra.mxu0 0.0
    %476 = vmatpush.msra.mxu0 0.0
    %477 = vmatpush.msra.mxu0 0.0
    %478 = vmatpush.msra.mxu0 %v364
    %479 = vmatpush.msra.mxu0 %v362
    %480 = vmatpush.msra.mxu0 %v360
    %481 = vmatpush.msra.mxu0 %v358
    %482 = vmatmul.f32.gmra.mxu0 %v367
    %v483 = vpop.f32.mrf.mxu0
    %v484 = vadd.f32 %v443, %v483
    %485 = vmatmul.f32.gmra.mxu0 %v369
    %v486 = vpop.f32.mrf.mxu0
    %v487 = vadd.f32 %v446, %v486
    %488 = vmatmul.f32.gmra.mxu0 %v371
    %v489 = vpop.f32.mrf.mxu0
    %v490 = vadd.f32 %v449, %v489
    %491 = vmatmul.f32.gmra.mxu0 %v374
    %v492 = vpop.f32.mrf.mxu0
    %v493 = vadd.f32 %v452, %v492
    %494 = vmatmul.f32.gmra.mxu0 %v376
    %v495 = vpop.f32.mrf.mxu0
    %v496 = vadd.f32 %v455, %v495
    %497 = vmatmul.f32.gmra.mxu0 %v378
    %v498 = vpop.f32.mrf.mxu0
    %v499 = vadd.f32 %v458, %v498
    %500 = vmatmul.f32.gmra.mxu0 %v380
    %v501 = vpop.f32.mrf.mxu0
    %v502 = vadd.f32 %v461, %v501
    %503 = vmatmul.f32.gmra.mxu0 %v382
    %v504 = vpop.f32.mrf.mxu0
    %v505 = vadd.f32 %v464, %v504
    %506 = vdwg.mxu0
    %507 = vmatpush.msra.mxu0 %v325
    %508 = vmatpush.msra.mxu0 %v323
    %509 = vmatpush.msra.mxu0 %v321
    %510 = vmatpush.msra.mxu0 %v319
    %511 = vmatpush.msra.mxu0 %v317
    %512 = vmatpush.msra.mxu0 %v315
    %513 = vmatpush.msra.mxu0 %v313
    %514 = vmatpush.msra.mxu0 %v311
    %515 = vmatpush.msra.mxu0 %v309
    %516 = vmatpush.msra.mxu0 %v307
    %517 = vmatpush.msra.mxu0 %v305
    %518 = vmatpush.msra.mxu0 %v303
    %519 = vmatpush.msra.mxu0 %v301
    %520 = vmatpush.msra.mxu0 %v299
    %521 = vmatpush.msra.mxu0 %v297
    %522 = vmatpush.msra.mxu0 %v295
    %523 = vmatmul.f32.gmra.mxu0 %v192
    %v524 = vpop.f32.mrf.mxu0
    %v525 = vadd.f32 0.0, %v524
    %526 = vmatmul.f32.gmra.mxu0 %v193
    %v527 = vpop.f32.mrf.mxu0
    %v528 = vadd.f32 0.0, %v527
    %529 = vmatmul.f32.gmra.mxu0 %v194
    %v530 = vpop.f32.mrf.mxu0
    %v531 = vadd.f32 0.0, %v530
    %532 = vmatmul.f32.gmra.mxu0 %v291
    %v533 = vpop.f32.mrf.mxu0
    %v534 = vadd.f32 0.0, %v533
    %535 = vmatmul.f32.gmra.mxu0 %v263
    %v536 = vpop.f32.mrf.mxu0
    %v537 = vadd.f32 0.0, %v536
    %538 = vmatmul.f32.gmra.mxu0 %v269
    %v539 = vpop.f32.mrf.mxu0
    %v540 = vadd.f32 0.0, %v539
    %541 = vmatmul.f32.gmra.mxu0 %v275
    %v542 = vpop.f32.mrf.mxu0
    %v543 = vadd.f32 0.0, %v542
    %544 = vmatmul.f32.gmra.mxu0 %v274
    %v545 = vpop.f32.mrf.mxu0
    %v546 = vadd.f32 0.0, %v545
    %547 = vdwg.mxu0
    %548 = vmatpush.msra.mxu0 %v357
    %549 = vmatpush.msra.mxu0 %v355
    %550 = vmatpush.msra.mxu0 %v353
    %551 = vmatpush.msra.mxu0 %v351
    %552 = vmatpush.msra.mxu0 %v349
    %553 = vmatpush.msra.mxu0 %v347
    %554 = vmatpush.msra.mxu0 %v345
    %555 = vmatpush.msra.mxu0 %v343
    %556 = vmatpush.msra.mxu0 %v341
    %557 = vmatpush.msra.mxu0 %v339
    %558 = vmatpush.msra.mxu0 %v337
    %559 = vmatpush.msra.mxu0 %v335
    %560 = vmatpush.msra.mxu0 %v333
    %561 = vmatpush.msra.mxu0 %v331
    %562 = vmatpush.msra.mxu0 %v329
    %563 = vmatpush.msra.mxu0 %v327
    %564 = vmatmul.f32.gmra.mxu0 %v197
    %v565 = vpop.f32.mrf.mxu0
    %v566 = vadd.f32 %v525, %v565
    %567 = vmatmul.f32.gmra.mxu0 %v198
    %v568 = vpop.f32.mrf.mxu0
    %v569 = vadd.f32 %v528, %v568
    %570 = vmatmul.f32.gmra.mxu0 %v199
    %v571 = vpop.f32.mrf.mxu0
    %v572 = vadd.f32 %v531, %v571
    %573 = vmatmul.f32.gmra.mxu0 %v292
    %v574 = vpop.f32.mrf.mxu0
    %v575 = vadd.f32 %v534, %v574
    %576 = vmatmul.f32.gmra.mxu0 %v265
    %v577 = vpop.f32.mrf.mxu0
    %v578 = vadd.f32 %v537, %v577
    %579 = vmatmul.f32.gmra.mxu0 %v271
    %v580 = vpop.f32.mrf.mxu0
    %v581 = vadd.f32 %v540, %v580
    %582 = vmatmul.f32.gmra.mxu0 %v277
    %v583 = vpop.f32.mrf.mxu0
    %v584 = vadd.f32 %v543, %v583
    %585 = vmatmul.f32.gmra.mxu0 %v276
    %v586 = vpop.f32.mrf.mxu0
    %v587 = vadd.f32 %v546, %v586
    %588 = vdwg.mxu0
    %589 = vmatpush.msra.mxu0 0.0
    %590 = vmatpush.msra.mxu0 0.0
    %591 = vmatpush.msra.mxu0 0.0
    %592 = vmatpush.msra.mxu0 0.0
    %593 = vmatpush.msra.mxu0 0.0
    %594 = vmatpush.msra.mxu0 0.0
    %595 = vmatpush.msra.mxu0 0.0
    %596 = vmatpush.msra.mxu0 0.0
    %597 = vmatpush.msra.mxu0 0.0
    %598 = vmatpush.msra.mxu0 0.0
    %599 = vmatpush.msra.mxu0 0.0
    %600 = vmatpush.msra.mxu0 0.0
    %601 = vmatpush.msra.mxu0 %v365
    %602 = vmatpush.msra.mxu0 %v363
    %603 = vmatpush.msra.mxu0 %v361
    %604 = vmatpush.msra.mxu0 %v359
    %605 = vmatmul.f32.gmra.mxu0 %v367
    %v606 = vpop.f32.mrf.mxu0
    %v607 = vadd.f32 %v566, %v606
    %608 = vmatmul.f32.gmra.mxu0 %v369
    %v609 = vpop.f32.mrf.mxu0
    %v610 = vadd.f32 %v569, %v609
    %611 = vmatmul.f32.gmra.mxu0 %v371
    %v612 = vpop.f32.mrf.mxu0
    %v613 = vadd.f32 %v572, %v612
    %614 = vmatmul.f32.gmra.mxu0 %v374
    %v615 = vpop.f32.mrf.mxu0
    %v616 = vadd.f32 %v575, %v615
    %617 = vmatmul.f32.gmra.mxu0 %v376
    %v618 = vpop.f32.mrf.mxu0
    %v619 = vadd.f32 %v578, %v618
    %620 = vmatmul.f32.gmra.mxu0 %v378
    %v621 = vpop.f32.mrf.mxu0
    %v622 = vadd.f32 %v581, %v621
    %623 = vmatmul.f32.gmra.mxu0 %v380
    %v624 = vpop.f32.mrf.mxu0
    %v625 = vadd.f32 %v584, %v624
    %626 = vmatmul.f32.gmra.mxu0 %v382
    %v627 = vpop.f32.mrf.mxu0
    %v628 = vadd.f32 %v587, %v627
    %629 = vdwg.mxu0
    %v630 = vadd.f32 %v484, %v487
    %v631 = vadd.f32 %v630, %v490
    %v632 = vadd.f32 %v631, %v493
    %v633 = vadd.f32 %v632, %v496
    %v634 = vadd.f32 %v633, %v499
    %v635 = vadd.f32 %v634, %v502
    %vm636 = vcmask 1043456
    %v637 = vsel %vm636, %v505, 0.0
    %v638 = vadd.f32 %v635, %v637
    %v639 = vrot.slane %v638, 4
    %v640 = vadd.f32 %v638, %v639
    %v641 = vrot.slane %v640, 2
    %v642 = vadd.f32 %v640, %v641
    %v643 = vrot.slane %v642, 1
    %v644 = vadd.f32 %v642, %v643
    %vm645 = vcmask 916480
    %v646 = vsel %vm645, %v607, 0.0
    %v647 = vsel %vm645, %v610, 0.0
    %v648 = vadd.f32 %v646, %v647
    %v649 = vsel %vm645, %v613, 0.0
    %v650 = vadd.f32 %v648, %v649
    %v651 = vsel %vm645, %v616, 0.0
    %v652 = vadd.f32 %v650, %v651
    %v653 = vsel %vm645, %v619, 0.0
    %v654 = vadd.f32 %v652, %v653
    %v655 = vsel %vm645, %v622, 0.0
    %v656 = vadd.f32 %v654, %v655
    %v657 = vsel %vm645, %v625, 0.0
    %v658 = vadd.f32 %v656, %v657
    %vm659 = vcmask 912384
    %v660 = vsel %vm659, %v628, 0.0
    %v661 = vadd.f32 %v658, %v660
    %v662 = vrot.slane %v661, 4
    %v663 = vadd.f32 %v661, %v662
    %v664 = vrot.slane %v663, 2
    %v665 = vadd.f32 %v663, %v664
    %v666 = vrot.slane %v665, 1
    %v667 = vadd.f32 %v665, %v666
    %v668 = vmul.f32 %v484, %v484
    %v669 = vmul.f32 %v607, %v607
    %v670 = vmul.f32 %v487, %v487
    %v671 = vmul.f32 %v610, %v610
    %v672 = vmul.f32 %v490, %v490
    %v673 = vmul.f32 %v613, %v613
    %v674 = vmul.f32 %v493, %v493
    %v675 = vmul.f32 %v616, %v616
    %v676 = vmul.f32 %v496, %v496
    %v677 = vmul.f32 %v619, %v619
    %v678 = vmul.f32 %v499, %v499
    %v679 = vmul.f32 %v622, %v622
    %v680 = vmul.f32 %v502, %v502
    %v681 = vmul.f32 %v625, %v625
    %v682 = vmul.f32 %v505, %v505
    %v683 = vmul.f32 %v628, %v628
    %v684 = vadd.f32 %v668, %v670
    %v685 = vadd.f32 %v684, %v672
    %v686 = vadd.f32 %v685, %v674
    %v687 = vadd.f32 %v686, %v676
    %v688 = vadd.f32 %v687, %v678
    %v689 = vadd.f32 %v688, %v680
    %v690 = vsel %vm636, %v682, 0.0
    %v691 = vadd.f32 %v689, %v690
    %v692 = vrot.slane %v691, 4
    %v693 = vadd.f32 %v691, %v692
    %v694 = vrot.slane %v693, 2
    %v695 = vadd.f32 %v693, %v694
    %v696 = vrot.slane %v695, 1
    %v697 = vadd.f32 %v695, %v696
    %v698 = vsel %vm645, %v669, 0.0
    %v699 = vsel %vm645, %v671, 0.0
    %v700 = vadd.f32 %v698, %v699
    %v701 = vsel %vm645, %v673, 0.0
    %v702 = vadd.f32 %v700, %v701
    %v703 = vsel %vm645, %v675, 0.0
    %v704 = vadd.f32 %v702, %v703
    %v705 = vsel %vm645, %v677, 0.0
    %v706 = vadd.f32 %v704, %v705
    %v707 = vsel %vm645, %v679, 0.0
    %v708 = vadd.f32 %v706, %v707
    %v709 = vsel %vm645, %v681, 0.0
    %v710 = vadd.f32 %v708, %v709
    %v711 = vsel %vm659, %v683, 0.0
    %v712 = vadd.f32 %v710, %v711
    %v713 = vrot.slane %v712, 4
    %v714 = vadd.f32 %v712, %v713
    %v715 = vrot.slane %v714, 2
    %v716 = vadd.f32 %v714, %v715
    %v717 = vrot.slane %v716, 1
    %v718 = vadd.f32 %v716, %v717
    %vm719 = vcmask 1040384
    %v720 = vsel %vm719, %v644, %v697
    %v721 = vsel %vm719, %v667, %v718
    %v722 = vld [vmem:[%s9] sm:$0xff]
    %v723 = vld [vmem:[%s9 + $0x8] sm:$0xff]
    %v724 = vld [vmem:[%s9 + $0x10] sm:$0xff]
    %v725 = vld [vmem:[%s9 + $0x18] sm:$0xff]
    %v726 = vld [vmem:[%s9 + $0x20] sm:$0xff]
    %v727 = vld [vmem:[%s9 + $0x28] sm:$0xff]
    %v728 = vld [vmem:[%s9 + $0x30] sm:$0xff]
    %v729 = vld [vmem:[%s9 + $0x38] sm:$0xff]
    %v730 = vld [vmem:[%s9 + $0x40] sm:$0xff]
    %v731 = vld [vmem:[%s9 + $0x48] sm:$0xff]
    %v732 = vld [vmem:[%s9 + $0x50] sm:$0xff]
    %v733 = vld [vmem:[%s9 + $0x58] sm:$0xff]
    %v734 = vld [vmem:[%s9 + $0x60] sm:$0xff]
    %v735 = vld [vmem:[%s9 + $0x68] sm:$0xff]
    %v736 = vld [vmem:[%s9 + $0x70] sm:$0xff]
    %v737 = vld [vmem:[%s9 + $0x78] sm:$0xff]
    %v738 = vld [vmem:[%s9 + $0x80] sm:$0xff]
    %v739 = vld [vmem:[%s9 + $0x88] sm:$0xff]
    %v740 = vld [vmem:[%s9 + $0x90] sm:$0xff]
    %v741 = vld [vmem:[%s9 + $0x98] sm:$0xff]
    %v742 = vld [vmem:[%s9 + $0xa0] sm:$0xff]
    %v743 = vld [vmem:[%s9 + $0xa8] sm:$0xff]
    %v744 = vld [vmem:[%s9 + $0xb0] sm:$0xff]
    %v745 = vld [vmem:[%s9 + $0xb8] sm:$0xff]
    %v746 = vld [vmem:[%s9 + $0xc0] sm:$0xff]
    %v747 = vld [vmem:[%s9 + $0xc8] sm:$0xff]
    %v748 = vld [vmem:[%s9 + $0xd0] sm:$0xff]
    %v749 = vld [vmem:[%s9 + $0xd8] sm:$0xff]
    %v750 = vld [vmem:[%s9 + $0xe0] sm:$0xff]
    %v751 = vld [vmem:[%s9 + $0xe8] sm:$0xff]
    %v753 = vsel %vm645, %v721, 0
    %755 = vmatpush.msra.mxu0 %v737
    %756 = vmatpush.msra.mxu0 %v736
    %757 = vmatpush.msra.mxu0 %v735
    %758 = vmatpush.msra.mxu0 %v734
    %759 = vmatpush.msra.mxu0 %v733
    %760 = vmatpush.msra.mxu0 %v732
    %761 = vmatpush.msra.mxu0 %v731
    %762 = vmatpush.msra.mxu0 %v730
    %763 = vmatpush.msra.mxu0 %v729
    %764 = vmatpush.msra.mxu0 %v728
    %765 = vmatpush.msra.mxu0 %v727
    %766 = vmatpush.msra.mxu0 %v726
    %767 = vmatpush.msra.mxu0 %v725
    %768 = vmatpush.msra.mxu0 %v724
    %769 = vmatpush.msra.mxu0 %v723
    %770 = vmatpush.msra.mxu0 %v722
    %771 = vmatmul.f32.gmra.mxu0 %v720
    %v772 = vpop.f32.mrf.mxu0
    %v773 = vadd.f32 0.0, %v772
    %774 = vdwg.mxu0
    %775 = vmatpush.msra.mxu0 0.0
    %776 = vmatpush.msra.mxu0 0.0
    %777 = vmatpush.msra.mxu0 %v751
    %778 = vmatpush.msra.mxu0 %v750
    %779 = vmatpush.msra.mxu0 %v749
    %780 = vmatpush.msra.mxu0 %v748
    %781 = vmatpush.msra.mxu0 %v747
    %782 = vmatpush.msra.mxu0 %v746
    %783 = vmatpush.msra.mxu0 %v745
    %784 = vmatpush.msra.mxu0 %v744
    %785 = vmatpush.msra.mxu0 %v743
    %786 = vmatpush.msra.mxu0 %v742
    %787 = vmatpush.msra.mxu0 %v741
    %788 = vmatpush.msra.mxu0 %v740
    %789 = vmatpush.msra.mxu0 %v739
    %790 = vmatpush.msra.mxu0 %v738
    %791 = vmatmul.f32.gmra.mxu0 %v753
    %v792 = vpop.f32.mrf.mxu0
    %v793 = vadd.f32 %v773, %v792
    %794 = vdwg.mxu0
    %v795 = vmul.f32 %v793, 0.00055555557
    %v796 = vmul.f32 %v795, %v795
    %v798 = vrot.slane %v796, 7
    %v800 = vsub.f32 %v795, %v798
    %v801 = vmax.f32 %v800, 0.0
    %v802 = vld [vmem:[%s5] sm:$0x1]
    %v803 = vadd.f32 %v801, 1e-05
    %v804 = vrsqrt.pop %v803
    %v805 = vmul.f32 %v804, %v803
    %v806 = vmul.f32 %v805, %v804
    %v807 = vmul.f32 0.5, %v806
    %v808 = vsub.f32 1.5, %v807
    %v809 = vmul.f32 %v804, %v808
    %vm810 = vweird.f32 %v803
    %vm811 = vweird.f32 %v804
    %vm812 = vmor %vm810, %vm811
    %v813 = vsel %vm812, %v804, %v809
    %815 = vst [vmem:[#allocation1] sm:$0xff] %v813
    %s816 = scalar_lea.vmem [#allocation1], 1
    %v817 = vld [vmem:[%s816] ss:$9 sm:$0xff]
    %v819 = vmul.f32 %v802, %v817
    %v820 = vld [vmem:[%s7] sm:$0x1]
    %v821 = vmul.f32 %v795, %v819
    %v822 = vsub.f32 %v820, %v821
    %v824 = vperm.slane %v822, 0
    %v826 = vsel %vm719, %v819, %v824
    %v827 = vld [vmem:[%s11] sm:$0xff]
    %v828 = vld [vmem:[%s11 + $0x8] sm:$0xff]
    %vm829 = vcmask 64512
    %v831 = vsel %vm829, %v826, 0
    %833 = vmatpush.msra.mxu0 0.0
    %834 = vmatpush.msra.mxu0 0.0
    %835 = vmatpush.msra.mxu0 0.0
    %836 = vmatpush.msra.mxu0 0.0
    %837 = vmatpush.msra.mxu0 0.0
    %838 = vmatpush.msra.mxu0 0.0
    %839 = vmatpush.msra.mxu0 0.0
    %840 = vmatpush.msra.mxu0 0.0
    %841 = vmatpush.msra.mxu0 0.0
    %842 = vmatpush.msra.mxu0 0.0
    %843 = vmatpush.msra.mxu0 0.0
    %844 = vmatpush.msra.mxu0 0.0
    %845 = vmatpush.msra.mxu0 0.0
    %846 = vmatpush.msra.mxu0 0.0
    %847 = vmatpush.msra.mxu0 0.0
    %848 = vmatpush.msra.mxu0 %v827
    %849 = vmatmul.f32.gmra.mxu0 %v831
    %v850 = vpop.f32.mrf.mxu0
    %v851 = vadd.f32 0.0, %v850
    %852 = vdwg.mxu0
    %853 = vmatpush.msra.mxu0 0.0
    %854 = vmatpush.msra.mxu0 0.0
    %855 = vmatpush.msra.mxu0 0.0
    %856 = vmatpush.msra.mxu0 0.0
    %857 = vmatpush.msra.mxu0 0.0
    %858 = vmatpush.msra.mxu0 0.0
    %859 = vmatpush.msra.mxu0 0.0
    %860 = vmatpush.msra.mxu0 0.0
    %861 = vmatpush.msra.mxu0 0.0
    %862 = vmatpush.msra.mxu0 0.0
    %863 = vmatpush.msra.mxu0 0.0
    %864 = vmatpush.msra.mxu0 0.0
    %865 = vmatpush.msra.mxu0 0.0
    %866 = vmatpush.msra.mxu0 0.0
    %867 = vmatpush.msra.mxu0 0.0
    %868 = vmatpush.msra.mxu0 %v828
    %869 = vmatmul.f32.gmra.mxu0 %v831
    %v870 = vpop.f32.mrf.mxu0
    %v871 = vadd.f32 0.0, %v870
    %872 = vdwg.mxu0
    %v873 = vperm.slane %v851, 0
    %v874 = vperm.slane %v871, 0
    %v875 = vmul.f32 %v484, %v873
    %v876 = vmul.f32 %v607, %v874
    %v877 = vmul.f32 %v487, %v873
    %v878 = vmul.f32 %v610, %v874
    %v879 = vmul.f32 %v490, %v873
    %v880 = vmul.f32 %v613, %v874
    %v881 = vmul.f32 %v493, %v873
    %v882 = vmul.f32 %v616, %v874
    %v883 = vmul.f32 %v496, %v873
    %v884 = vmul.f32 %v619, %v874
    %v885 = vmul.f32 %v499, %v873
    %v886 = vmul.f32 %v622, %v874
    %v887 = vmul.f32 %v502, %v873
    %v888 = vmul.f32 %v625, %v874
    %v889 = vmul.f32 %v505, %v873
    %v890 = vmul.f32 %v628, %v874
    %v891 = vperm.slane %v851, 1
    %v892 = vperm.slane %v871, 1
    %v893 = vadd.f32 %v875, %v891
    %v894 = vadd.f32 %v876, %v892
    %v895 = vadd.f32 %v877, %v891
    %v896 = vadd.f32 %v878, %v892
    %v897 = vadd.f32 %v879, %v891
    %v898 = vadd.f32 %v880, %v892
    %v899 = vadd.f32 %v881, %v891
    %v900 = vadd.f32 %v882, %v892
    %v901 = vadd.f32 %v883, %v891
    %v902 = vadd.f32 %v884, %v892
    %v903 = vadd.f32 %v885, %v891
    %v904 = vadd.f32 %v886, %v892
    %v905 = vadd.f32 %v887, %v891
    %v906 = vadd.f32 %v888, %v892
    %v907 = vadd.f32 %v889, %v891
    %v908 = vadd.f32 %v890, %v892
    %vm909 = vcmp.gt.f32.partialorder %v893, 0.0
    %vm910 = vcmp.gt.f32.partialorder %v894, 0.0
    %vm911 = vcmp.gt.f32.partialorder %v895, 0.0
    %vm912 = vcmp.gt.f32.partialorder %v896, 0.0
    %vm913 = vcmp.gt.f32.partialorder %v897, 0.0
    %vm914 = vcmp.gt.f32.partialorder %v898, 0.0
    %vm915 = vcmp.gt.f32.partialorder %v899, 0.0
    %vm916 = vcmp.gt.f32.partialorder %v900, 0.0
    %vm917 = vcmp.gt.f32.partialorder %v901, 0.0
    %vm918 = vcmp.gt.f32.partialorder %v902, 0.0
    %vm919 = vcmp.gt.f32.partialorder %v903, 0.0
    %vm920 = vcmp.gt.f32.partialorder %v904, 0.0
    %vm921 = vcmp.gt.f32.partialorder %v905, 0.0
    %vm922 = vcmp.gt.f32.partialorder %v906, 0.0
    %vm923 = vcmp.gt.f32.partialorder %v907, 0.0
    %vm924 = vcmp.gt.f32.partialorder %v908, 0.0
    %v925 = vmin.f32 %v893, 0.0
    %v926 = vmin.f32 %v894, 0.0
    %v927 = vmin.f32 %v895, 0.0
    %v928 = vmin.f32 %v896, 0.0
    %v929 = vmin.f32 %v897, 0.0
    %v930 = vmin.f32 %v898, 0.0
    %v931 = vmin.f32 %v899, 0.0
    %v932 = vmin.f32 %v900, 0.0
    %v933 = vmin.f32 %v901, 0.0
    %v934 = vmin.f32 %v902, 0.0
    %v935 = vmin.f32 %v903, 0.0
    %v936 = vmin.f32 %v904, 0.0
    %v937 = vmin.f32 %v905, 0.0
    %v938 = vmin.f32 %v906, 0.0
    %v939 = vmin.f32 %v907, 0.0
    %v940 = vmin.f32 %v908, 0.0
    %v941 = vmul.f32 %v925, 1.442695
    %v942 = vpow.pop %v941
    %v943 = vmul.f32 %v926, 1.442695
    %v944 = vpow.pop %v943
    %v945 = vmul.f32 %v927, 1.442695
    %v946 = vpow.pop %v945
    %v947 = vmul.f32 %v928, 1.442695
    %v948 = vpow.pop %v947
    %v949 = vmul.f32 %v929, 1.442695
    %v950 = vpow.pop %v949
    %v951 = vmul.f32 %v930, 1.442695
    %v952 = vpow.pop %v951
    %v953 = vmul.f32 %v931, 1.442695
    %v954 = vpow.pop %v953
    %v955 = vmul.f32 %v932, 1.442695
    %v956 = vpow.pop %v955
    %v957 = vmul.f32 %v933, 1.442695
    %v958 = vpow.pop %v957
    %v959 = vmul.f32 %v934, 1.442695
    %v960 = vpow.pop %v959
    %v961 = vmul.f32 %v935, 1.442695
    %v962 = vpow.pop %v961
    %v963 = vmul.f32 %v936, 1.442695
    %v964 = vpow.pop %v963
    %v965 = vmul.f32 %v937, 1.442695
    %v966 = vpow.pop %v965
    %v967 = vmul.f32 %v938, 1.442695
    %v968 = vpow.pop %v967
    %v969 = vmul.f32 %v939, 1.442695
    %v970 = vpow.pop %v969
    %v971 = vmul.f32 %v940, 1.442695
    %v972 = vpow.pop %v971
    %v973 = vsub.f32 %v942, 1.0
    %v974 = vsub.f32 %v944, 1.0
    %v975 = vsub.f32 %v946, 1.0
    %v976 = vsub.f32 %v948, 1.0
    %v977 = vsub.f32 %v950, 1.0
    %v978 = vsub.f32 %v952, 1.0
    %v979 = vsub.f32 %v954, 1.0
    %v980 = vsub.f32 %v956, 1.0
    %v981 = vsub.f32 %v958, 1.0
    %v982 = vsub.f32 %v960, 1.0
    %v983 = vsub.f32 %v962, 1.0
    %v984 = vsub.f32 %v964, 1.0
    %v985 = vsub.f32 %v966, 1.0
    %v986 = vsub.f32 %v968, 1.0
    %v987 = vsub.f32 %v970, 1.0
    %v988 = vsub.f32 %v972, 1.0
    %v989 = vsel %vm909, %v893, %v973
    %v990 = vsel %vm910, %v894, %v974
    %v991 = vsel %vm911, %v895, %v975
    %v992 = vsel %vm912, %v896, %v976
    %v993 = vsel %vm913, %v897, %v977
    %v994 = vsel %vm914, %v898, %v978
    %v995 = vsel %vm915, %v899, %v979
    %v996 = vsel %vm916, %v900, %v980
    %v997 = vsel %vm917, %v901, %v981
    %v998 = vsel %vm918, %v902, %v982
    %v999 = vsel %vm919, %v903, %v983
    %v1000 = vsel %vm920, %v904, %v984
    %v1001 = vsel %vm921, %v905, %v985
    %v1002 = vsel %vm922, %v906, %v986
    %v1003 = vsel %vm923, %v907, %v987
    %v1004 = vsel %vm924, %v908, %v988
    %v1013 = vrot.slane %v989, 1
    %v1014 = vrot.slane %v991, 1
    %v1015 = vsel %vm151, %v1013, %v1014
    %v1016 = vrot.slane %v990, 1
    %v1017 = vrot.slane %v992, 1
    %v1018 = vsel %vm151, %v1016, %v1017
    %v1019 = vrot.slane %v993, 1
    %v1020 = vsel %vm151, %v1014, %v1019
    %v1021 = vrot.slane %v994, 1
    %v1022 = vsel %vm151, %v1017, %v1021
    %v1023 = vrot.slane %v995, 1
    %v1024 = vsel %vm151, %v1019, %v1023
    %v1025 = vrot.slane %v996, 1
    %v1026 = vsel %vm151, %v1021, %v1025
    %1027 = vrot.lane.b32.xlu0 %v1015, 112
    %v1028 = vpop.permute.xlu0 %1027
    %1029 = vrot.lane.b32.xlu0 %v1018, 112
    %v1030 = vpop.permute.xlu0 %1029
    %1031 = vrot.lane.b32.xlu0 %v1020, 112
    %v1032 = vpop.permute.xlu0 %1031
    %1033 = vrot.lane.b32.xlu0 %v1022, 112
    %v1034 = vpop.permute.xlu0 %1033
    %1035 = vrot.lane.b32.xlu0 %v1024, 112
    %v1036 = vpop.permute.xlu0 %1035
    %1037 = vrot.lane.b32.xlu0 %v1026, 112
    %v1038 = vpop.permute.xlu0 %1037
    %1039 = vrot.lane.b32.xlu0 %v1023, 112
    %v1040 = vpop.permute.xlu0 %1039
    %1041 = vrot.lane.b32.xlu0 %v1025, 112
    %v1042 = vpop.permute.xlu0 %1041
    %v1043 = vsel %vm645, %v1028, %v1030
    %v1044 = vsel %vm645, %v1032, %v1034
    %v1045 = vsel %vm645, %v1036, %v1038
    %v1046 = vsel %vm645, %v1040, %v1042
    %v1059 = vrot.slane %v989, 2
    %v1060 = vrot.slane %v991, 2
    %v1061 = vsel %vm171, %v1059, %v1060
    %v1062 = vrot.slane %v990, 2
    %v1063 = vrot.slane %v992, 2
    %v1064 = vsel %vm171, %v1062, %v1063
    %v1065 = vrot.slane %v993, 2
    %v1066 = vsel %vm171, %v1060, %v1065
    %v1067 = vrot.slane %v994, 2
    %v1068 = vsel %vm171, %v1063, %v1067
    %v1069 = vrot.slane %v995, 2
    %v1070 = vsel %vm171, %v1065, %v1069
    %v1071 = vrot.slane %v996, 2
    %v1072 = vsel %vm171, %v1067, %v1071
    %1073 = vrot.lane.b32.xlu0 %v1061, 96
    %v1074 = vpop.permute.xlu0 %1073
    %1075 = vrot.lane.b32.xlu0 %v1064, 96
    %v1076 = vpop.permute.xlu0 %1075
    %1077 = vrot.lane.b32.xlu0 %v1066, 96
    %v1078 = vpop.permute.xlu0 %1077
    %1079 = vrot.lane.b32.xlu0 %v1068, 96
    %v1080 = vpop.permute.xlu0 %1079
    %1081 = vrot.lane.b32.xlu0 %v1070, 96
    %v1082 = vpop.permute.xlu0 %1081
    %1083 = vrot.lane.b32.xlu0 %v1072, 96
    %v1084 = vpop.permute.xlu0 %1083
    %1085 = vrot.lane.b32.xlu0 %v1069, 96
    %v1086 = vpop.permute.xlu0 %1085
    %1087 = vrot.lane.b32.xlu0 %v1071, 96
    %v1088 = vpop.permute.xlu0 %1087
    %v1089 = vsel %vm191, %v1074, %v1076
    %v1090 = vsel %vm191, %v1078, %v1080
    %v1091 = vsel %vm191, %v1082, %v1084
    %v1092 = vsel %vm191, %v1086, %v1088
    %v1102 = vsel %vm645, %v990, %v1028
    %v1103 = vsel %vm645, %v992, %v1032
    %v1104 = vsel %vm645, %v994, %v1036
    %v1105 = vsel %vm645, %v996, %v1040
    %v1106 = vsel %vm191, %v1030, %v1074
    %v1107 = vsel %vm191, %v1034, %v1078
    %v1108 = vsel %vm191, %v1038, %v1082
    %v1109 = vsel %vm191, %v1042, %v1086
    %v1118 = vrot.slane %v997, 1
    %v1119 = vsel %vm151, %v1023, %v1118
    %v1120 = vrot.slane %v998, 1
    %v1121 = vsel %vm151, %v1025, %v1120
    %v1122 = vrot.slane %v999, 1
    %v1123 = vsel %vm151, %v1118, %v1122
    %v1124 = vrot.slane %v1000, 1
    %v1125 = vsel %vm151, %v1120, %v1124
    %v1126 = vrot.slane %v1001, 1
    %v1127 = vsel %vm151, %v1122, %v1126
    %v1128 = vrot.slane %v1002, 1
    %v1129 = vsel %vm151, %v1124, %v1128
    %v1130 = vrot.slane %v1003, 1
    %v1131 = vsel %vm151, %v1126, %v1130
    %v1132 = vrot.slane %v1004, 1
    %v1133 = vsel %vm151, %v1128, %v1132
    %1134 = vrot.lane.b32.xlu0 %v1119, 112
    %v1135 = vpop.permute.xlu0 %1134
    %1136 = vrot.lane.b32.xlu0 %v1121, 112
    %v1137 = vpop.permute.xlu0 %1136
    %1138 = vrot.lane.b32.xlu0 %v1123, 112
    %v1139 = vpop.permute.xlu0 %1138
    %1140 = vrot.lane.b32.xlu0 %v1125, 112
    %v1141 = vpop.permute.xlu0 %1140
    %1142 = vrot.lane.b32.xlu0 %v1127, 112
    %v1143 = vpop.permute.xlu0 %1142
    %1144 = vrot.lane.b32.xlu0 %v1129, 112
    %v1145 = vpop.permute.xlu0 %1144
    %1146 = vrot.lane.b32.xlu0 %v1131, 112
    %v1147 = vpop.permute.xlu0 %1146
    %1148 = vrot.lane.b32.xlu0 %v1133, 112
    %v1149 = vpop.permute.xlu0 %1148
    %1150 = vrot.lane.b32.xlu0 %v1130, 112
    %v1151 = vpop.permute.xlu0 %1150
    %1152 = vrot.lane.b32.xlu0 %v1132, 112
    %v1153 = vpop.permute.xlu0 %1152
    %v1154 = vsel %vm645, %v1135, %v1137
    %v1155 = vsel %vm645, %v1139, %v1141
    %v1156 = vsel %vm645, %v1143, %v1145
    %v1157 = vsel %vm645, %v1147, %v1149
    %v1158 = vsel %vm645, %v1151, %v1153
    %v1169 = vrot.slane %v997, 2
    %v1170 = vrot.slane %v998, 2
    %v1171 = vrot.slane %v999, 2
    %v1172 = vsel %vm171, %v1169, %v1171
    %v1173 = vrot.slane %v1000, 2
    %v1174 = vsel %vm171, %v1170, %v1173
    %v1175 = vrot.slane %v1001, 2
    %v1176 = vsel %vm171, %v1171, %v1175
    %v1177 = vrot.slane %v1002, 2
    %v1178 = vsel %vm171, %v1173, %v1177
    %v1179 = vrot.slane %v1003, 2
    %v1180 = vsel %vm171, %v1175, %v1179
    %v1181 = vrot.slane %v1004, 2
    %v1182 = vsel %vm171, %v1177, %v1181
    %1183 = vrot.lane.b32.xlu0 %v1169, 96
    %v1184 = vpop.permute.xlu0 %1183
    %1185 = vrot.lane.b32.xlu0 %v1170, 96
    %v1186 = vpop.permute.xlu0 %1185
    %1187 = vrot.lane.b32.xlu0 %v1172, 96
    %v1188 = vpop.permute.xlu0 %1187
    %1189 = vrot.lane.b32.xlu0 %v1174, 96
    %v1190 = vpop.permute.xlu0 %1189
    %1191 = vrot.lane.b32.xlu0 %v1176, 96
    %v1192 = vpop.permute.xlu0 %1191
    %1193 = vrot.lane.b32.xlu0 %v1178, 96
    %v1194 = vpop.permute.xlu0 %1193
    %1195 = vrot.lane.b32.xlu0 %v1180, 96
    %v1196 = vpop.permute.xlu0 %1195
    %1197 = vrot.lane.b32.xlu0 %v1182, 96
    %v1198 = vpop.permute.xlu0 %1197
    %1199 = vrot.lane.b32.xlu0 %v1179, 96
    %v1200 = vpop.permute.xlu0 %1199
    %1201 = vrot.lane.b32.xlu0 %v1181, 96
    %v1202 = vpop.permute.xlu0 %1201
    %v1203 = vsel %vm191, %v1184, %v1186
    %v1204 = vsel %vm191, %v1188, %v1190
    %v1205 = vsel %vm191, %v1192, %v1194
    %v1206 = vsel %vm191, %v1196, %v1198
    %v1207 = vsel %vm191, %v1200, %v1202
    %v1213 = vsel %vm645, %v996, %v1135
    %v1214 = vsel %vm645, %v998, %v1139
    %v1215 = vsel %vm645, %v1000, %v1143
    %v1216 = vsel %vm645, %v1002, %v1147
    %v1217 = vsel %vm645, %v1004, %v1151
    %v1218 = vsel %vm191, %v1137, %v1184
    %v1219 = vsel %vm191, %v1141, %v1188
    %v1220 = vsel %vm191, %v1145, %v1192
    %v1221 = vsel %vm191, %v1149, %v1196
    %v1222 = vsel %vm191, %v1153, %v1200
    %v1233 = vsel %vm171, %v1069, %v1169
    %v1234 = vrot.slane %v1213, 2
    %v1235 = vrot.slane %v1214, 2
    %v1236 = vsel %vm171, %v1234, %v1235
    %v1237 = vrot.slane %v1154, 2
    %v1238 = vrot.slane %v1155, 2
    %v1239 = vsel %vm171, %v1237, %v1238
    %v1240 = vrot.slane %v1218, 2
    %v1241 = vrot.slane %v1219, 2
    %v1242 = vsel %vm171, %v1240, %v1241
    %v1243 = vrot.slane %v1203, 2
    %v1244 = vrot.slane %v1204, 2
    %v1245 = vsel %vm171, %v1243, %v1244
    %v1246 = vrot.slane %v1186, 2
    %v1247 = vrot.slane %v1190, 2
    %v1248 = vsel %vm171, %v1246, %v1247
    %v1249 = vrot.slane %v1215, 2
    %v1250 = vsel %vm171, %v1235, %v1249
    %v1251 = vrot.slane %v1156, 2
    %v1252 = vsel %vm171, %v1238, %v1251
    %v1253 = vrot.slane %v1220, 2
    %v1254 = vsel %vm171, %v1241, %v1253
    %v1255 = vrot.slane %v1205, 2
    %v1256 = vsel %vm171, %v1244, %v1255
    %v1257 = vrot.slane %v1194, 2
    %v1258 = vsel %vm171, %v1247, %v1257
    %v1259 = vrot.slane %v1216, 2
    %v1260 = vsel %vm171, %v1249, %v1259
    %v1261 = vrot.slane %v1157, 2
    %v1262 = vsel %vm171, %v1251, %v1261
    %v1263 = vrot.slane %v1221, 2
    %v1264 = vsel %vm171, %v1253, %v1263
    %v1265 = vrot.slane %v1206, 2
    %v1266 = vsel %vm171, %v1255, %v1265
    %v1267 = vrot.slane %v1198, 2
    %v1268 = vsel %vm171, %v1257, %v1267
    %v1269 = vrot.slane %v1217, 2
    %v1270 = vsel %vm171, %v1259, %v1269
    %v1271 = vrot.slane %v1158, 2
    %v1272 = vsel %vm171, %v1261, %v1271
    %v1273 = vrot.slane %v1222, 2
    %v1274 = vsel %vm171, %v1263, %v1273
    %v1275 = vrot.slane %v1207, 2
    %v1276 = vsel %vm171, %v1265, %v1275
    %v1277 = vrot.slane %v1202, 2
    %v1278 = vsel %vm171, %v1267, %v1277
    %v1300 = vsel %vm636, %v995, %v1233
    %v1301 = vsel %vm636, %v1105, %v1236
    %v1302 = vsel %vm636, %v1046, %v1239
    %v1303 = vsel %vm636, %v1109, %v1242
    %v1304 = vsel %vm636, %v1092, %v1245
    %v1305 = vsel %vm636, %v1088, %v1248
    %v1306 = vld [vmem:[%s13] sm:$0xff]
    %v1307 = vld [vmem:[%s13 + $0x8] sm:$0xff]
    %v1308 = vld [vmem:[%s13 + $0x10] sm:$0xff]
    %v1309 = vld [vmem:[%s13 + $0x18] sm:$0xff]
    %v1310 = vld [vmem:[%s13 + $0x20] sm:$0xff]
    %v1311 = vld [vmem:[%s13 + $0x28] sm:$0xff]
    %v1312 = vld [vmem:[%s13 + $0x30] sm:$0xff]
    %v1313 = vld [vmem:[%s13 + $0x38] sm:$0xff]
    %v1314 = vld [vmem:[%s13 + $0x40] sm:$0xff]
    %v1315 = vld [vmem:[%s13 + $0x48] sm:$0xff]
    %v1316 = vld [vmem:[%s13 + $0x50] sm:$0xff]
    %v1317 = vld [vmem:[%s13 + $0x58] sm:$0xff]
    %v1318 = vld [vmem:[%s13 + $0x60] sm:$0xff]
    %v1319 = vld [vmem:[%s13 + $0x68] sm:$0xff]
    %v1320 = vld [vmem:[%s13 + $0x70] sm:$0xff]
    %v1321 = vld [vmem:[%s13 + $0x78] sm:$0xff]
    %v1322 = vld [vmem:[%s13 + $0x80] sm:$0xff]
    %v1323 = vld [vmem:[%s13 + $0x88] sm:$0xff]
    %v1324 = vld [vmem:[%s13 + $0x90] sm:$0xff]
    %v1325 = vld [vmem:[%s13 + $0x98] sm:$0xff]
    %v1326 = vld [vmem:[%s13 + $0xa0] sm:$0xff]
    %v1327 = vld [vmem:[%s13 + $0xa8] sm:$0xff]
    %v1328 = vld [vmem:[%s13 + $0xb0] sm:$0xff]
    %v1329 = vld [vmem:[%s13 + $0xb8] sm:$0xff]
    %v1330 = vld [vmem:[%s13 + $0xc0] sm:$0xff]
    %v1331 = vld [vmem:[%s13 + $0xc8] sm:$0xff]
    %v1332 = vld [vmem:[%s13 + $0xd0] sm:$0xff]
    %v1333 = vld [vmem:[%s13 + $0xd8] sm:$0xff]
    %v1334 = vld [vmem:[%s13 + $0xe0] sm:$0xff]
    %v1335 = vld [vmem:[%s13 + $0xe8] sm:$0xff]
    %v1336 = vld [vmem:[%s13 + $0xf0] sm:$0xff]
    %v1337 = vld [vmem:[%s13 + $0xf8] sm:$0xff]
    %v1338 = vld [vmem:[%s13 + $0x100] sm:$0xff]
    %v1339 = vld [vmem:[%s13 + $0x108] sm:$0xff]
    %v1340 = vld [vmem:[%s13 + $0x110] sm:$0xff]
    %v1341 = vld [vmem:[%s13 + $0x118] sm:$0xff]
    %v1342 = vld [vmem:[%s13 + $0x120] sm:$0xff]
    %v1343 = vld [vmem:[%s13 + $0x128] sm:$0xff]
    %v1344 = vld [vmem:[%s13 + $0x130] sm:$0xff]
    %v1345 = vld [vmem:[%s13 + $0x138] sm:$0xff]
    %v1346 = vld [vmem:[%s13 + $0x140] sm:$0xff]
    %v1347 = vld [vmem:[%s13 + $0x148] sm:$0xff]
    %v1348 = vld [vmem:[%s13 + $0x150] sm:$0xff]
    %v1349 = vld [vmem:[%s13 + $0x158] sm:$0xff]
    %v1350 = vld [vmem:[%s13 + $0x160] sm:$0xff]
    %v1351 = vld [vmem:[%s13 + $0x168] sm:$0xff]
    %v1352 = vld [vmem:[%s13 + $0x170] sm:$0xff]
    %v1353 = vld [vmem:[%s13 + $0x178] sm:$0xff]
    %v1354 = vld [vmem:[%s13 + $0x180] sm:$0xff]
    %v1355 = vld [vmem:[%s13 + $0x188] sm:$0xff]
    %v1356 = vld [vmem:[%s13 + $0x190] sm:$0xff]
    %v1357 = vld [vmem:[%s13 + $0x198] sm:$0xff]
    %v1358 = vld [vmem:[%s13 + $0x1a0] sm:$0xff]
    %v1359 = vld [vmem:[%s13 + $0x1a8] sm:$0xff]
    %v1360 = vld [vmem:[%s13 + $0x1b0] sm:$0xff]
    %v1361 = vld [vmem:[%s13 + $0x1b8] sm:$0xff]
    %v1362 = vld [vmem:[%s13 + $0x1c0] sm:$0xff]
    %v1363 = vld [vmem:[%s13 + $0x1c8] sm:$0xff]
    %v1364 = vld [vmem:[%s13 + $0x1d0] sm:$0xff]
    %v1365 = vld [vmem:[%s13 + $0x1d8] sm:$0xff]
    %v1366 = vld [vmem:[%s13 + $0x1e0] sm:$0xff]
    %v1367 = vld [vmem:[%s13 + $0x1e8] sm:$0xff]
    %v1368 = vld [vmem:[%s13 + $0x1f0] sm:$0xff]
    %v1369 = vld [vmem:[%s13 + $0x1f8] sm:$0xff]
    %v1370 = vld [vmem:[%s13 + $0x200] sm:$0xff]
    %v1371 = vld [vmem:[%s13 + $0x208] sm:$0xff]
    %v1372 = vld [vmem:[%s13 + $0x210] sm:$0xff]
    %v1373 = vld [vmem:[%s13 + $0x218] sm:$0xff]
    %v1374 = vld [vmem:[%s13 + $0x220] sm:$0xff]
    %v1375 = vld [vmem:[%s13 + $0x228] sm:$0xff]
    %v1376 = vld [vmem:[%s13 + $0x230] sm:$0xff]
    %v1377 = vld [vmem:[%s13 + $0x238] sm:$0xff]
    %v1378 = vld [vmem:[%s13 + $0x240] sm:$0xff]
    %v1379 = vld [vmem:[%s13 + $0x248] sm:$0xff]
    %v1380 = vld [vmem:[%s13 + $0x250] sm:$0xff]
    %v1381 = vld [vmem:[%s13 + $0x258] sm:$0xff]
    %v1382 = vld [vmem:[%s13 + $0x260] sm:$0xff]
    %v1383 = vld [vmem:[%s13 + $0x268] sm:$0xff]
    %v1384 = vld [vmem:[%s13 + $0x270] sm:$0xff]
    %v1385 = vld [vmem:[%s13 + $0x278] sm:$0xff]
    %v1386 = vld [vmem:[%s13 + $0x280] sm:$0xff]
    %v1387 = vld [vmem:[%s13 + $0x288] sm:$0xff]
    %v1388 = vld [vmem:[%s13 + $0x290] sm:$0xff]
    %v1389 = vld [vmem:[%s13 + $0x298] sm:$0xff]
    %v1390 = vld [vmem:[%s13 + $0x2a0] sm:$0xff]
    %v1391 = vld [vmem:[%s13 + $0x2a8] sm:$0xff]
    %v1392 = vld [vmem:[%s13 + $0x2b0] sm:$0xff]
    %v1393 = vld [vmem:[%s13 + $0x2b8] sm:$0xff]
    %v1394 = vld [vmem:[%s13 + $0x2c0] sm:$0xff]
    %v1395 = vld [vmem:[%s13 + $0x2c8] sm:$0xff]
    %v1396 = vld [vmem:[%s13 + $0x2d0] sm:$0xff]
    %v1397 = vld [vmem:[%s13 + $0x2d8] sm:$0xff]
    %v1398 = vld [vmem:[%s13 + $0x2e0] sm:$0xff]
    %v1399 = vld [vmem:[%s13 + $0x2e8] sm:$0xff]
    %v1400 = vld [vmem:[%s13 + $0x2f0] sm:$0xff]
    %v1401 = vld [vmem:[%s13 + $0x2f8] sm:$0xff]
    %v1402 = vld [vmem:[%s13 + $0x300] sm:$0xff]
    %v1403 = vld [vmem:[%s13 + $0x308] sm:$0xff]
    %v1404 = vld [vmem:[%s13 + $0x310] sm:$0xff]
    %v1405 = vld [vmem:[%s13 + $0x318] sm:$0xff]
    %v1406 = vld [vmem:[%s13 + $0x320] sm:$0xff]
    %v1407 = vld [vmem:[%s13 + $0x328] sm:$0xff]
    %v1408 = vld [vmem:[%s13 + $0x330] sm:$0xff]
    %v1409 = vld [vmem:[%s13 + $0x338] sm:$0xff]
    %v1410 = vld [vmem:[%s13 + $0x340] sm:$0xff]
    %v1411 = vld [vmem:[%s13 + $0x348] sm:$0xff]
    %v1412 = vld [vmem:[%s13 + $0x350] sm:$0xff]
    %v1413 = vld [vmem:[%s13 + $0x358] sm:$0xff]
    %v1414 = vld [vmem:[%s13 + $0x360] sm:$0xff]
    %v1415 = vld [vmem:[%s13 + $0x368] sm:$0xff]
    %v1416 = vld [vmem:[%s13 + $0x370] sm:$0xff]
    %v1417 = vld [vmem:[%s13 + $0x378] sm:$0xff]
    %v1418 = vld [vmem:[%s13 + $0x380] sm:$0xff]
    %v1419 = vld [vmem:[%s13 + $0x388] sm:$0xff]
    %v1420 = vld [vmem:[%s13 + $0x390] sm:$0xff]
    %v1421 = vld [vmem:[%s13 + $0x398] sm:$0xff]
    %v1422 = vld [vmem:[%s13 + $0x3a0] sm:$0xff]
    %v1423 = vld [vmem:[%s13 + $0x3a8] sm:$0xff]
    %v1424 = vld [vmem:[%s13 + $0x3b0] sm:$0xff]
    %v1425 = vld [vmem:[%s13 + $0x3b8] sm:$0xff]
    %v1426 = vld [vmem:[%s13 + $0x3c0] sm:$0xff]
    %v1427 = vld [vmem:[%s13 + $0x3c8] sm:$0xff]
    %v1428 = vld [vmem:[%s13 + $0x3d0] sm:$0xff]
    %v1429 = vld [vmem:[%s13 + $0x3d8] sm:$0xff]
    %v1430 = vld [vmem:[%s13 + $0x3e0] sm:$0xff]
    %v1431 = vld [vmem:[%s13 + $0x3e8] sm:$0xff]
    %v1432 = vld [vmem:[%s13 + $0x3f0] sm:$0xff]
    %v1433 = vld [vmem:[%s13 + $0x3f8] sm:$0xff]
    %v1434 = vld [vmem:[%s13 + $0x400] sm:$0xff]
    %v1435 = vld [vmem:[%s13 + $0x408] sm:$0xff]
    %v1436 = vld [vmem:[%s13 + $0x410] sm:$0xff]
    %v1437 = vld [vmem:[%s13 + $0x418] sm:$0xff]
    %v1438 = vld [vmem:[%s13 + $0x420] sm:$0xff]
    %v1439 = vld [vmem:[%s13 + $0x428] sm:$0xff]
    %v1440 = vld [vmem:[%s13 + $0x430] sm:$0xff]
    %v1441 = vld [vmem:[%s13 + $0x438] sm:$0xff]
    %v1442 = vld [vmem:[%s13 + $0x440] sm:$0xff]
    %v1443 = vld [vmem:[%s13 + $0x448] sm:$0xff]
    %v1444 = vld [vmem:[%s13 + $0x450] sm:$0xff]
    %v1445 = vld [vmem:[%s13 + $0x458] sm:$0xff]
    %v1446 = vld [vmem:[%s13 + $0x460] sm:$0xff]
    %v1447 = vld [vmem:[%s13 + $0x468] sm:$0xff]
    %v1448 = vld [vmem:[%s13 + $0x470] sm:$0xff]
    %v1449 = vld [vmem:[%s13 + $0x478] sm:$0xff]
    %v1450 = vld [vmem:[%s13 + $0x480] sm:$0xff]
    %v1451 = vld [vmem:[%s13 + $0x488] sm:$0xff]
    %v1452 = vld [vmem:[%s13 + $0x490] sm:$0xff]
    %v1453 = vld [vmem:[%s13 + $0x498] sm:$0xff]
    %v1454 = vld [vmem:[%s13 + $0x4a0] sm:$0xff]
    %v1455 = vld [vmem:[%s13 + $0x4a8] sm:$0xff]
    %v1456 = vld [vmem:[%s13 + $0x4b0] sm:$0xff]
    %v1457 = vld [vmem:[%s13 + $0x4b8] sm:$0xff]
    %v1458 = vld [vmem:[%s13 + $0x4c0] sm:$0xff]
    %v1459 = vld [vmem:[%s13 + $0x4c8] sm:$0xff]
    %v1460 = vld [vmem:[%s13 + $0x4d0] sm:$0xff]
    %v1461 = vld [vmem:[%s13 + $0x4d8] sm:$0xff]
    %v1462 = vld [vmem:[%s13 + $0x4e0] sm:$0xff]
    %v1463 = vld [vmem:[%s13 + $0x4e8] sm:$0xff]
    %v1464 = vld [vmem:[%s13 + $0x4f0] sm:$0xff]
    %v1465 = vld [vmem:[%s13 + $0x4f8] sm:$0xff]
    %v1466 = vld [vmem:[%s13 + $0x500] sm:$0xff]
    %v1467 = vld [vmem:[%s13 + $0x508] sm:$0xff]
    %v1468 = vld [vmem:[%s13 + $0x510] sm:$0xff]
    %v1469 = vld [vmem:[%s13 + $0x518] sm:$0xff]
    %v1470 = vld [vmem:[%s13 + $0x520] sm:$0xff]
    %v1471 = vld [vmem:[%s13 + $0x528] sm:$0xff]
    %v1472 = vld [vmem:[%s13 + $0x530] sm:$0xff]
    %v1473 = vld [vmem:[%s13 + $0x538] sm:$0xff]
    %v1474 = vld [vmem:[%s13 + $0x540] sm:$0xff]
    %v1475 = vld [vmem:[%s13 + $0x548] sm:$0xff]
    %v1476 = vld [vmem:[%s13 + $0x550] sm:$0xff]
    %v1477 = vld [vmem:[%s13 + $0x558] sm:$0xff]
    %v1478 = vld [vmem:[%s13 + $0x560] sm:$0xff]
    %v1479 = vld [vmem:[%s13 + $0x568] sm:$0xff]
    %v1480 = vld [vmem:[%s13 + $0x570] sm:$0xff]
    %v1481 = vld [vmem:[%s13 + $0x578] sm:$0xff]
    %v1482 = vld [vmem:[%s13 + $0x580] sm:$0xff]
    %v1483 = vld [vmem:[%s13 + $0x588] sm:$0xff]
    %v1484 = vld [vmem:[%s13 + $0x590] sm:$0xff]
    %v1485 = vld [vmem:[%s13 + $0x598] sm:$0xff]
    %vm1486 = vcmask 654336
    %v1487 = vsel %vm1486, %v1076, 0
    %v1489 = vsel %vm1486, %v1080, 0
    %v1491 = vsel %vm1486, %v1084, 0
    %v1494 = vsel %vm1486, %v1305, 0
    %v1496 = vsel %vm1486, %v1258, 0
    %v1498 = vsel %vm1486, %v1268, 0
    %v1500 = vsel %vm1486, %v1278, 0
    %1502 = vmatpush.msra.mxu0 %v1336
    %1503 = vmatpush.msra.mxu0 %v1334
    %1504 = vmatpush.msra.mxu0 %v1332
    %1505 = vmatpush.msra.mxu0 %v1330
    %1506 = vmatpush.msra.mxu0 %v1328
    %1507 = vmatpush.msra.mxu0 %v1326
    %1508 = vmatpush.msra.mxu0 %v1324
    %1509 = vmatpush.msra.mxu0 %v1322
    %1510 = vmatpush.msra.mxu0 %v1320
    %1511 = vmatpush.msra.mxu0 %v1318
    %1512 = vmatpush.msra.mxu0 %v1316
    %1513 = vmatpush.msra.mxu0 %v1314
    %1514 = vmatpush.msra.mxu0 %v1312
    %1515 = vmatpush.msra.mxu0 %v1310
    %1516 = vmatpush.msra.mxu0 %v1308
    %1517 = vmatpush.msra.mxu0 %v1306
    %1518 = vmatmul.f32.gmra.mxu0 %v989
    %v1519 = vpop.f32.mrf.mxu0
    %v1520 = vadd.f32 0.0, %v1519
    %1521 = vmatmul.f32.gmra.mxu0 %v991
    %v1522 = vpop.f32.mrf.mxu0
    %v1523 = vadd.f32 0.0, %v1522
    %1524 = vmatmul.f32.gmra.mxu0 %v993
    %v1525 = vpop.f32.mrf.mxu0
    %v1526 = vadd.f32 0.0, %v1525
    %1527 = vmatmul.f32.gmra.mxu0 %v1300
    %v1528 = vpop.f32.mrf.mxu0
    %v1529 = vadd.f32 0.0, %v1528
    %1530 = vmatmul.f32.gmra.mxu0 %v1172
    %v1531 = vpop.f32.mrf.mxu0
    %v1532 = vadd.f32 0.0, %v1531
    %1533 = vmatmul.f32.gmra.mxu0 %v1176
    %v1534 = vpop.f32.mrf.mxu0
    %v1535 = vadd.f32 0.0, %v1534
    %1536 = vmatmul.f32.gmra.mxu0 %v1180
    %v1537 = vpop.f32.mrf.mxu0
    %v1538 = vadd.f32 0.0, %v1537
    %1539 = vdwg.mxu0
    %1540 = vmatpush.msra.mxu0 %v1368
    %1541 = vmatpush.msra.mxu0 %v1366
    %1542 = vmatpush.msra.mxu0 %v1364
    %1543 = vmatpush.msra.mxu0 %v1362
    %1544 = vmatpush.msra.mxu0 %v1360
    %1545 = vmatpush.msra.mxu0 %v1358
    %1546 = vmatpush.msra.mxu0 %v1356
    %1547 = vmatpush.msra.mxu0 %v1354
    %1548 = vmatpush.msra.mxu0 %v1352
    %1549 = vmatpush.msra.mxu0 %v1350
    %1550 = vmatpush.msra.mxu0 %v1348
    %1551 = vmatpush.msra.mxu0 %v1346
    %1552 = vmatpush.msra.mxu0 %v1344
    %1553 = vmatpush.msra.mxu0 %v1342
    %1554 = vmatpush.msra.mxu0 %v1340
    %1555 = vmatpush.msra.mxu0 %v1338
    %1556 = vmatmul.f32.gmra.mxu0 %v1102
    %v1557 = vpop.f32.mrf.mxu0
    %v1558 = vadd.f32 %v1520, %v1557
    %1559 = vmatmul.f32.gmra.mxu0 %v1103
    %v1560 = vpop.f32.mrf.mxu0
    %v1561 = vadd.f32 %v1523, %v1560
    %1562 = vmatmul.f32.gmra.mxu0 %v1104
    %v1563 = vpop.f32.mrf.mxu0
    %v1564 = vadd.f32 %v1526, %v1563
    %1565 = vmatmul.f32.gmra.mxu0 %v1301
    %v1566 = vpop.f32.mrf.mxu0
    %v1567 = vadd.f32 %v1529, %v1566
    %1568 = vmatmul.f32.gmra.mxu0 %v1250
    %v1569 = vpop.f32.mrf.mxu0
    %v1570 = vadd.f32 %v1532, %v1569
    %1571 = vmatmul.f32.gmra.mxu0 %v1260
    %v1572 = vpop.f32.mrf.mxu0
    %v1573 = vadd.f32 %v1535, %v1572
    %1574 = vmatmul.f32.gmra.mxu0 %v1270
    %v1575 = vpop.f32.mrf.mxu0
    %v1576 = vadd.f32 %v1538, %v1575
    %1577 = vdwg.mxu0
    %1578 = vmatpush.msra.mxu0 %v1400
    %1579 = vmatpush.msra.mxu0 %v1398
    %1580 = vmatpush.msra.mxu0 %v1396
    %1581 = vmatpush.msra.mxu0 %v1394
    %1582 = vmatpush.msra.mxu0 %v1392
    %1583 = vmatpush.msra.mxu0 %v1390
    %1584 = vmatpush.msra.mxu0 %v1388
    %1585 = vmatpush.msra.mxu0 %v1386
    %1586 = vmatpush.msra.mxu0 %v1384
    %1587 = vmatpush.msra.mxu0 %v1382
    %1588 = vmatpush.msra.mxu0 %v1380
    %1589 = vmatpush.msra.mxu0 %v1378
    %1590 = vmatpush.msra.mxu0 %v1376
    %1591 = vmatpush.msra.mxu0 %v1374
    %1592 = vmatpush.msra.mxu0 %v1372
    %1593 = vmatpush.msra.mxu0 %v1370
    %1594 = vmatmul.f32.gmra.mxu0 %v1043
    %v1595 = vpop.f32.mrf.mxu0
    %v1596 = vadd.f32 %v1558, %v1595
    %1597 = vmatmul.f32.gmra.mxu0 %v1044
    %v1598 = vpop.f32.mrf.mxu0
    %v1599 = vadd.f32 %v1561, %v1598
    %1600 = vmatmul.f32.gmra.mxu0 %v1045
    %v1601 = vpop.f32.mrf.mxu0
    %v1602 = vadd.f32 %v1564, %v1601
    %1603 = vmatmul.f32.gmra.mxu0 %v1302
    %v1604 = vpop.f32.mrf.mxu0
    %v1605 = vadd.f32 %v1567, %v1604
    %1606 = vmatmul.f32.gmra.mxu0 %v1252
    %v1607 = vpop.f32.mrf.mxu0
    %v1608 = vadd.f32 %v1570, %v1607
    %1609 = vmatmul.f32.gmra.mxu0 %v1262
    %v1610 = vpop.f32.mrf.mxu0
    %v1611 = vadd.f32 %v1573, %v1610
    %1612 = vmatmul.f32.gmra.mxu0 %v1272
    %v1613 = vpop.f32.mrf.mxu0
    %v1614 = vadd.f32 %v1576, %v1613
    %1615 = vdwg.mxu0
    %1616 = vmatpush.msra.mxu0 %v1432
    %1617 = vmatpush.msra.mxu0 %v1430
    %1618 = vmatpush.msra.mxu0 %v1428
    %1619 = vmatpush.msra.mxu0 %v1426
    %1620 = vmatpush.msra.mxu0 %v1424
    %1621 = vmatpush.msra.mxu0 %v1422
    %1622 = vmatpush.msra.mxu0 %v1420
    %1623 = vmatpush.msra.mxu0 %v1418
    %1624 = vmatpush.msra.mxu0 %v1416
    %1625 = vmatpush.msra.mxu0 %v1414
    %1626 = vmatpush.msra.mxu0 %v1412
    %1627 = vmatpush.msra.mxu0 %v1410
    %1628 = vmatpush.msra.mxu0 %v1408
    %1629 = vmatpush.msra.mxu0 %v1406
    %1630 = vmatpush.msra.mxu0 %v1404
    %1631 = vmatpush.msra.mxu0 %v1402
    %1632 = vmatmul.f32.gmra.mxu0 %v1106
    %v1633 = vpop.f32.mrf.mxu0
    %v1634 = vadd.f32 %v1596, %v1633
    %1635 = vmatmul.f32.gmra.mxu0 %v1107
    %v1636 = vpop.f32.mrf.mxu0
    %v1637 = vadd.f32 %v1599, %v1636
    %1638 = vmatmul.f32.gmra.mxu0 %v1108
    %v1639 = vpop.f32.mrf.mxu0
    %v1640 = vadd.f32 %v1602, %v1639
    %1641 = vmatmul.f32.gmra.mxu0 %v1303
    %v1642 = vpop.f32.mrf.mxu0
    %v1643 = vadd.f32 %v1605, %v1642
    %1644 = vmatmul.f32.gmra.mxu0 %v1254
    %v1645 = vpop.f32.mrf.mxu0
    %v1646 = vadd.f32 %v1608, %v1645
    %1647 = vmatmul.f32.gmra.mxu0 %v1264
    %v1648 = vpop.f32.mrf.mxu0
    %v1649 = vadd.f32 %v1611, %v1648
    %1650 = vmatmul.f32.gmra.mxu0 %v1274
    %v1651 = vpop.f32.mrf.mxu0
    %v1652 = vadd.f32 %v1614, %v1651
    %1653 = vdwg.mxu0
    %1654 = vmatpush.msra.mxu0 %v1464
    %1655 = vmatpush.msra.mxu0 %v1462
    %1656 = vmatpush.msra.mxu0 %v1460
    %1657 = vmatpush.msra.mxu0 %v1458
    %1658 = vmatpush.msra.mxu0 %v1456
    %1659 = vmatpush.msra.mxu0 %v1454
    %1660 = vmatpush.msra.mxu0 %v1452
    %1661 = vmatpush.msra.mxu0 %v1450
    %1662 = vmatpush.msra.mxu0 %v1448
    %1663 = vmatpush.msra.mxu0 %v1446
    %1664 = vmatpush.msra.mxu0 %v1444
    %1665 = vmatpush.msra.mxu0 %v1442
    %1666 = vmatpush.msra.mxu0 %v1440
    %1667 = vmatpush.msra.mxu0 %v1438
    %1668 = vmatpush.msra.mxu0 %v1436
    %1669 = vmatpush.msra.mxu0 %v1434
    %1670 = vmatmul.f32.gmra.mxu0 %v1089
    %v1671 = vpop.f32.mrf.mxu0
    %v1672 = vadd.f32 %v1634, %v1671
    %1673 = vmatmul.f32.gmra.mxu0 %v1090
    %v1674 = vpop.f32.mrf.mxu0
    %v1675 = vadd.f32 %v1637, %v1674
    %1676 = vmatmul.f32.gmra.mxu0 %v1091
    %v1677 = vpop.f32.mrf.mxu0
    %v1678 = vadd.f32 %v1640, %v1677
    %1679 = vmatmul.f32.gmra.mxu0 %v1304
    %v1680 = vpop.f32.mrf.mxu0
    %v1681 = vadd.f32 %v1643, %v1680
    %1682 = vmatmul.f32.gmra.mxu0 %v1256
    %v1683 = vpop.f32.mrf.mxu0
    %v1684 = vadd.f32 %v1646, %v1683
    %1685 = vmatmul.f32.gmra.mxu0 %v1266
    %v1686 = vpop.f32.mrf.mxu0
    %v1687 = vadd.f32 %v1649, %v1686
    %1688 = vmatmul.f32.gmra.mxu0 %v1276
    %v1689 = vpop.f32.mrf.mxu0
    %v1690 = vadd.f32 %v1652, %v1689
    %1691 = vdwg.mxu0
    %1692 = vmatpush.msra.mxu0 0.0
    %1693 = vmatpush.msra.mxu0 0.0
    %1694 = vmatpush.msra.mxu0 0.0
    %1695 = vmatpush.msra.mxu0 0.0
    %1696 = vmatpush.msra.mxu0 0.0
    %1697 = vmatpush.msra.mxu0 0.0
    %1698 = vmatpush.msra.mxu0 %v1484
    %1699 = vmatpush.msra.mxu0 %v1482
    %1700 = vmatpush.msra.mxu0 %v1480
    %1701 = vmatpush.msra.mxu0 %v1478
    %1702 = vmatpush.msra.mxu0 %v1476
    %1703 = vmatpush.msra.mxu0 %v1474
    %1704 = vmatpush.msra.mxu0 %v1472
    %1705 = vmatpush.msra.mxu0 %v1470
    %1706 = vmatpush.msra.mxu0 %v1468
    %1707 = vmatpush.msra.mxu0 %v1466
    %1708 = vmatmul.f32.gmra.mxu0 %v1487
    %v1709 = vpop.f32.mrf.mxu0
    %v1710 = vadd.f32 %v1672, %v1709
    %1711 = vmatmul.f32.gmra.mxu0 %v1489
    %v1712 = vpop.f32.mrf.mxu0
    %v1713 = vadd.f32 %v1675, %v1712
    %1714 = vmatmul.f32.gmra.mxu0 %v1491
    %v1715 = vpop.f32.mrf.mxu0
    %v1716 = vadd.f32 %v1678, %v1715
    %1717 = vmatmul.f32.gmra.mxu0 %v1494
    %v1718 = vpop.f32.mrf.mxu0
    %v1719 = vadd.f32 %v1681, %v1718
    %1720 = vmatmul.f32.gmra.mxu0 %v1496
    %v1721 = vpop.f32.mrf.mxu0
    %v1722 = vadd.f32 %v1684, %v1721
    %1723 = vmatmul.f32.gmra.mxu0 %v1498
    %v1724 = vpop.f32.mrf.mxu0
    %v1725 = vadd.f32 %v1687, %v1724
    %1726 = vmatmul.f32.gmra.mxu0 %v1500
    %v1727 = vpop.f32.mrf.mxu0
    %v1728 = vadd.f32 %v1690, %v1727
    %1729 = vdwg.mxu0
    %1730 = vmatpush.msra.mxu0 %v1337
    %1731 = vmatpush.msra.mxu0 %v1335
    %1732 = vmatpush.msra.mxu0 %v1333
    %1733 = vmatpush.msra.mxu0 %v1331
    %1734 = vmatpush.msra.mxu0 %v1329
    %1735 = vmatpush.msra.mxu0 %v1327
    %1736 = vmatpush.msra.mxu0 %v1325
    %1737 = vmatpush.msra.mxu0 %v1323
    %1738 = vmatpush.msra.mxu0 %v1321
    %1739 = vmatpush.msra.mxu0 %v1319
    %1740 = vmatpush.msra.mxu0 %v1317
    %1741 = vmatpush.msra.mxu0 %v1315
    %1742 = vmatpush.msra.mxu0 %v1313
    %1743 = vmatpush.msra.mxu0 %v1311
    %1744 = vmatpush.msra.mxu0 %v1309
    %1745 = vmatpush.msra.mxu0 %v1307
    %1746 = vmatmul.f32.gmra.mxu0 %v989
    %v1747 = vpop.f32.mrf.mxu0
    %v1748 = vadd.f32 0.0, %v1747
    %1749 = vmatmul.f32.gmra.mxu0 %v991
    %v1750 = vpop.f32.mrf.mxu0
    %v1751 = vadd.f32 0.0, %v1750
    %1752 = vmatmul.f32.gmra.mxu0 %v993
    %v1753 = vpop.f32.mrf.mxu0
    %v1754 = vadd.f32 0.0, %v1753
    %1755 = vmatmul.f32.gmra.mxu0 %v1300
    %v1756 = vpop.f32.mrf.mxu0
    %v1757 = vadd.f32 0.0, %v1756
    %1758 = vmatmul.f32.gmra.mxu0 %v1172
    %v1759 = vpop.f32.mrf.mxu0
    %v1760 = vadd.f32 0.0, %v1759
    %1761 = vmatmul.f32.gmra.mxu0 %v1176
    %v1762 = vpop.f32.mrf.mxu0
    %v1763 = vadd.f32 0.0, %v1762
    %1764 = vmatmul.f32.gmra.mxu0 %v1180
    %v1765 = vpop.f32.mrf.mxu0
    %v1766 = vadd.f32 0.0, %v1765
    %1767 = vdwg.mxu0
    %1768 = vmatpush.msra.mxu0 %v1369
    %1769 = vmatpush.msra.mxu0 %v1367
    %1770 = vmatpush.msra.mxu0 %v1365
    %1771 = vmatpush.msra.mxu0 %v1363
    %1772 = vmatpush.msra.mxu0 %v1361
    %1773 = vmatpush.msra.mxu0 %v1359
    %1774 = vmatpush.msra.mxu0 %v1357
    %1775 = vmatpush.msra.mxu0 %v1355
    %1776 = vmatpush.msra.mxu0 %v1353
    %1777 = vmatpush.msra.mxu0 %v1351
    %1778 = vmatpush.msra.mxu0 %v1349
    %1779 = vmatpush.msra.mxu0 %v1347
    %1780 = vmatpush.msra.mxu0 %v1345
    %1781 = vmatpush.msra.mxu0 %v1343
    %1782 = vmatpush.msra.mxu0 %v1341
    %1783 = vmatpush.msra.mxu0 %v1339
    %1784 = vmatmul.f32.gmra.mxu0 %v1102
    %v1785 = vpop.f32.mrf.mxu0
    %v1786 = vadd.f32 %v1748, %v1785
    %1787 = vmatmul.f32.gmra.mxu0 %v1103
    %v1788 = vpop.f32.mrf.mxu0
    %v1789 = vadd.f32 %v1751, %v1788
    %1790 = vmatmul.f32.gmra.mxu0 %v1104
    %v1791 = vpop.f32.mrf.mxu0
    %v1792 = vadd.f32 %v1754, %v1791
    %1793 = vmatmul.f32.gmra.mxu0 %v1301
    %v1794 = vpop.f32.mrf.mxu0
    %v1795 = vadd.f32 %v1757, %v1794
    %1796 = vmatmul.f32.gmra.mxu0 %v1250
    %v1797 = vpop.f32.mrf.mxu0
    %v1798 = vadd.f32 %v1760, %v1797
    %1799 = vmatmul.f32.gmra.mxu0 %v1260
    %v1800 = vpop.f32.mrf.mxu0
    %v1801 = vadd.f32 %v1763, %v1800
    %1802 = vmatmul.f32.gmra.mxu0 %v1270
    %v1803 = vpop.f32.mrf.mxu0
    %v1804 = vadd.f32 %v1766, %v1803
    %1805 = vdwg.mxu0
    %1806 = vmatpush.msra.mxu0 %v1401
    %1807 = vmatpush.msra.mxu0 %v1399
    %1808 = vmatpush.msra.mxu0 %v1397
    %1809 = vmatpush.msra.mxu0 %v1395
    %1810 = vmatpush.msra.mxu0 %v1393
    %1811 = vmatpush.msra.mxu0 %v1391
    %1812 = vmatpush.msra.mxu0 %v1389
    %1813 = vmatpush.msra.mxu0 %v1387
    %1814 = vmatpush.msra.mxu0 %v1385
    %1815 = vmatpush.msra.mxu0 %v1383
    %1816 = vmatpush.msra.mxu0 %v1381
    %1817 = vmatpush.msra.mxu0 %v1379
    %1818 = vmatpush.msra.mxu0 %v1377
    %1819 = vmatpush.msra.mxu0 %v1375
    %1820 = vmatpush.msra.mxu0 %v1373
    %1821 = vmatpush.msra.mxu0 %v1371
    %1822 = vmatmul.f32.gmra.mxu0 %v1043
    %v1823 = vpop.f32.mrf.mxu0
    %v1824 = vadd.f32 %v1786, %v1823
    %1825 = vmatmul.f32.gmra.mxu0 %v1044
    %v1826 = vpop.f32.mrf.mxu0
    %v1827 = vadd.f32 %v1789, %v1826
    %1828 = vmatmul.f32.gmra.mxu0 %v1045
    %v1829 = vpop.f32.mrf.mxu0
    %v1830 = vadd.f32 %v1792, %v1829
    %1831 = vmatmul.f32.gmra.mxu0 %v1302
    %v1832 = vpop.f32.mrf.mxu0
    %v1833 = vadd.f32 %v1795, %v1832
    %1834 = vmatmul.f32.gmra.mxu0 %v1252
    %v1835 = vpop.f32.mrf.mxu0
    %v1836 = vadd.f32 %v1798, %v1835
    %1837 = vmatmul.f32.gmra.mxu0 %v1262
    %v1838 = vpop.f32.mrf.mxu0
    %v1839 = vadd.f32 %v1801, %v1838
    %1840 = vmatmul.f32.gmra.mxu0 %v1272
    %v1841 = vpop.f32.mrf.mxu0
    %v1842 = vadd.f32 %v1804, %v1841
    %1843 = vdwg.mxu0
    %1844 = vmatpush.msra.mxu0 %v1433
    %1845 = vmatpush.msra.mxu0 %v1431
    %1846 = vmatpush.msra.mxu0 %v1429
    %1847 = vmatpush.msra.mxu0 %v1427
    %1848 = vmatpush.msra.mxu0 %v1425
    %1849 = vmatpush.msra.mxu0 %v1423
    %1850 = vmatpush.msra.mxu0 %v1421
    %1851 = vmatpush.msra.mxu0 %v1419
    %1852 = vmatpush.msra.mxu0 %v1417
    %1853 = vmatpush.msra.mxu0 %v1415
    %1854 = vmatpush.msra.mxu0 %v1413
    %1855 = vmatpush.msra.mxu0 %v1411
    %1856 = vmatpush.msra.mxu0 %v1409
    %1857 = vmatpush.msra.mxu0 %v1407
    %1858 = vmatpush.msra.mxu0 %v1405
    %1859 = vmatpush.msra.mxu0 %v1403
    %1860 = vmatmul.f32.gmra.mxu0 %v1106
    %v1861 = vpop.f32.mrf.mxu0
    %v1862 = vadd.f32 %v1824, %v1861
    %1863 = vmatmul.f32.gmra.mxu0 %v1107
    %v1864 = vpop.f32.mrf.mxu0
    %v1865 = vadd.f32 %v1827, %v1864
    %1866 = vmatmul.f32.gmra.mxu0 %v1108
    %v1867 = vpop.f32.mrf.mxu0
    %v1868 = vadd.f32 %v1830, %v1867
    %1869 = vmatmul.f32.gmra.mxu0 %v1303
    %v1870 = vpop.f32.mrf.mxu0
    %v1871 = vadd.f32 %v1833, %v1870
    %1872 = vmatmul.f32.gmra.mxu0 %v1254
    %v1873 = vpop.f32.mrf.mxu0
    %v1874 = vadd.f32 %v1836, %v1873
    %1875 = vmatmul.f32.gmra.mxu0 %v1264
    %v1876 = vpop.f32.mrf.mxu0
    %v1877 = vadd.f32 %v1839, %v1876
    %1878 = vmatmul.f32.gmra.mxu0 %v1274
    %v1879 = vpop.f32.mrf.mxu0
    %v1880 = vadd.f32 %v1842, %v1879
    %1881 = vdwg.mxu0
    %1882 = vmatpush.msra.mxu0 %v1465
    %1883 = vmatpush.msra.mxu0 %v1463
    %1884 = vmatpush.msra.mxu0 %v1461
    %1885 = vmatpush.msra.mxu0 %v1459
    %1886 = vmatpush.msra.mxu0 %v1457
    %1887 = vmatpush.msra.mxu0 %v1455
    %1888 = vmatpush.msra.mxu0 %v1453
    %1889 = vmatpush.msra.mxu0 %v1451
    %1890 = vmatpush.msra.mxu0 %v1449
    %1891 = vmatpush.msra.mxu0 %v1447
    %1892 = vmatpush.msra.mxu0 %v1445
    %1893 = vmatpush.msra.mxu0 %v1443
    %1894 = vmatpush.msra.mxu0 %v1441
    %1895 = vmatpush.msra.mxu0 %v1439
    %1896 = vmatpush.msra.mxu0 %v1437
    %1897 = vmatpush.msra.mxu0 %v1435
    %1898 = vmatmul.f32.gmra.mxu0 %v1089
    %v1899 = vpop.f32.mrf.mxu0
    %v1900 = vadd.f32 %v1862, %v1899
    %1901 = vmatmul.f32.gmra.mxu0 %v1090
    %v1902 = vpop.f32.mrf.mxu0
    %v1903 = vadd.f32 %v1865, %v1902
    %1904 = vmatmul.f32.gmra.mxu0 %v1091
    %v1905 = vpop.f32.mrf.mxu0
    %v1906 = vadd.f32 %v1868, %v1905
    %1907 = vmatmul.f32.gmra.mxu0 %v1304
    %v1908 = vpop.f32.mrf.mxu0
    %v1909 = vadd.f32 %v1871, %v1908
    %1910 = vmatmul.f32.gmra.mxu0 %v1256
    %v1911 = vpop.f32.mrf.mxu0
    %v1912 = vadd.f32 %v1874, %v1911
    %1913 = vmatmul.f32.gmra.mxu0 %v1266
    %v1914 = vpop.f32.mrf.mxu0
    %v1915 = vadd.f32 %v1877, %v1914
    %1916 = vmatmul.f32.gmra.mxu0 %v1276
    %v1917 = vpop.f32.mrf.mxu0
    %v1918 = vadd.f32 %v1880, %v1917
    %1919 = vdwg.mxu0
    %1920 = vmatpush.msra.mxu0 0.0
    %1921 = vmatpush.msra.mxu0 0.0
    %1922 = vmatpush.msra.mxu0 0.0
    %1923 = vmatpush.msra.mxu0 0.0
    %1924 = vmatpush.msra.mxu0 0.0
    %1925 = vmatpush.msra.mxu0 0.0
    %1926 = vmatpush.msra.mxu0 %v1485
    %1927 = vmatpush.msra.mxu0 %v1483
    %1928 = vmatpush.msra.mxu0 %v1481
    %1929 = vmatpush.msra.mxu0 %v1479
    %1930 = vmatpush.msra.mxu0 %v1477
    %1931 = vmatpush.msra.mxu0 %v1475
    %1932 = vmatpush.msra.mxu0 %v1473
    %1933 = vmatpush.msra.mxu0 %v1471
    %1934 = vmatpush.msra.mxu0 %v1469
    %1935 = vmatpush.msra.mxu0 %v1467
    %1936 = vmatmul.f32.gmra.mxu0 %v1487
    %v1937 = vpop.f32.mrf.mxu0
    %v1938 = vadd.f32 %v1900, %v1937
    %1939 = vmatmul.f32.gmra.mxu0 %v1489
    %v1940 = vpop.f32.mrf.mxu0
    %v1941 = vadd.f32 %v1903, %v1940
    %1942 = vmatmul.f32.gmra.mxu0 %v1491
    %v1943 = vpop.f32.mrf.mxu0
    %v1944 = vadd.f32 %v1906, %v1943
    %1945 = vmatmul.f32.gmra.mxu0 %v1494
    %v1946 = vpop.f32.mrf.mxu0
    %v1947 = vadd.f32 %v1909, %v1946
    %1948 = vmatmul.f32.gmra.mxu0 %v1496
    %v1949 = vpop.f32.mrf.mxu0
    %v1950 = vadd.f32 %v1912, %v1949
    %1951 = vmatmul.f32.gmra.mxu0 %v1498
    %v1952 = vpop.f32.mrf.mxu0
    %v1953 = vadd.f32 %v1915, %v1952
    %1954 = vmatmul.f32.gmra.mxu0 %v1500
    %v1955 = vpop.f32.mrf.mxu0
    %v1956 = vadd.f32 %v1918, %v1955
    %1957 = vdwg.mxu0
    %v1958 = vadd.f32 %v1710, %v1713
    %v1959 = vadd.f32 %v1958, %v1716
    %v1960 = vadd.f32 %v1959, %v1719
    %v1961 = vadd.f32 %v1960, %v1722
    %v1962 = vadd.f32 %v1961, %v1725
    %v1963 = vadd.f32 %v1962, %v1728
    %v1964 = vrot.slane %v1963, 4
    %v1965 = vadd.f32 %v1963, %v1964
    %v1966 = vrot.slane %v1965, 2
    %v1967 = vadd.f32 %v1965, %v1966
    %v1968 = vrot.slane %v1967, 1
    %v1969 = vadd.f32 %v1967, %v1968
    %v1970 = vsel %vm191, %v1938, 0.0
    %v1971 = vsel %vm191, %v1941, 0.0
    %v1972 = vadd.f32 %v1970, %v1971
    %v1973 = vsel %vm191, %v1944, 0.0
    %v1974 = vadd.f32 %v1972, %v1973
    %v1975 = vsel %vm191, %v1947, 0.0
    %v1976 = vadd.f32 %v1974, %v1975
    %v1977 = vsel %vm191, %v1950, 0.0
    %v1978 = vadd.f32 %v1976, %v1977
    %v1979 = vsel %vm191, %v1953, 0.0
    %v1980 = vadd.f32 %v1978, %v1979
    %v1981 = vsel %vm191, %v1956, 0.0
    %v1982 = vadd.f32 %v1980, %v1981
    %v1983 = vrot.slane %v1982, 4
    %v1984 = vadd.f32 %v1982, %v1983
    %v1985 = vrot.slane %v1984, 2
    %v1986 = vadd.f32 %v1984, %v1985
    %v1987 = vrot.slane %v1986, 1
    %v1988 = vadd.f32 %v1986, %v1987
    %v1989 = vmul.f32 %v1710, %v1710
    %v1990 = vmul.f32 %v1938, %v1938
    %v1991 = vmul.f32 %v1713, %v1713
    %v1992 = vmul.f32 %v1941, %v1941
    %v1993 = vmul.f32 %v1716, %v1716
    %v1994 = vmul.f32 %v1944, %v1944
    %v1995 = vmul.f32 %v1719, %v1719
    %v1996 = vmul.f32 %v1947, %v1947
    %v1997 = vmul.f32 %v1722, %v1722
    %v1998 = vmul.f32 %v1950, %v1950
    %v1999 = vmul.f32 %v1725, %v1725
    %v2000 = vmul.f32 %v1953, %v1953
    %v2001 = vmul.f32 %v1728, %v1728
    %v2002 = vmul.f32 %v1956, %v1956
    %v2003 = vadd.f32 %v1989, %v1991
    %v2004 = vadd.f32 %v2003, %v1993
    %v2005 = vadd.f32 %v2004, %v1995
    %v2006 = vadd.f32 %v2005, %v1997
    %v2007 = vadd.f32 %v2006, %v1999
    %v2008 = vadd.f32 %v2007, %v2001
    %v2009 = vrot.slane %v2008, 4
    %v2010 = vadd.f32 %v2008, %v2009
    %v2011 = vrot.slane %v2010, 2
    %v2012 = vadd.f32 %v2010, %v2011
    %v2013 = vrot.slane %v2012, 1
    %v2014 = vadd.f32 %v2012, %v2013
    %v2015 = vsel %vm191, %v1990, 0.0
    %v2016 = vsel %vm191, %v1992, 0.0
    %v2017 = vadd.f32 %v2015, %v2016
    %v2018 = vsel %vm191, %v1994, 0.0
    %v2019 = vadd.f32 %v2017, %v2018
    %v2020 = vsel %vm191, %v1996, 0.0
    %v2021 = vadd.f32 %v2019, %v2020
    %v2022 = vsel %vm191, %v1998, 0.0
    %v2023 = vadd.f32 %v2021, %v2022
    %v2024 = vsel %vm191, %v2000, 0.0
    %v2025 = vadd.f32 %v2023, %v2024
    %v2026 = vsel %vm191, %v2002, 0.0
    %v2027 = vadd.f32 %v2025, %v2026
    %v2028 = vrot.slane %v2027, 4
    %v2029 = vadd.f32 %v2027, %v2028
    %v2030 = vrot.slane %v2029, 2
    %v2031 = vadd.f32 %v2029, %v2030
    %v2032 = vrot.slane %v2031, 1
    %v2033 = vadd.f32 %v2031, %v2032
    %v2034 = vsel %vm719, %v1969, %v2014
    %v2035 = vsel %vm719, %v1988, %v2033
    %v2036 = vld [vmem:[%s19] sm:$0xff]
    %v2037 = vld [vmem:[%s19 + $0x8] sm:$0xff]
    %v2038 = vld [vmem:[%s19 + $0x10] sm:$0xff]
    %v2039 = vld [vmem:[%s19 + $0x18] sm:$0xff]
    %v2040 = vld [vmem:[%s19 + $0x20] sm:$0xff]
    %v2041 = vld [vmem:[%s19 + $0x28] sm:$0xff]
    %v2042 = vld [vmem:[%s19 + $0x30] sm:$0xff]
    %v2043 = vld [vmem:[%s19 + $0x38] sm:$0xff]
    %v2044 = vld [vmem:[%s19 + $0x40] sm:$0xff]
    %v2045 = vld [vmem:[%s19 + $0x48] sm:$0xff]
    %v2046 = vld [vmem:[%s19 + $0x50] sm:$0xff]
    %v2047 = vld [vmem:[%s19 + $0x58] sm:$0xff]
    %v2048 = vld [vmem:[%s19 + $0x60] sm:$0xff]
    %v2049 = vld [vmem:[%s19 + $0x68] sm:$0xff]
    %v2050 = vld [vmem:[%s19 + $0x70] sm:$0xff]
    %v2051 = vld [vmem:[%s19 + $0x78] sm:$0xff]
    %v2052 = vld [vmem:[%s19 + $0x80] sm:$0xff]
    %v2053 = vld [vmem:[%s19 + $0x88] sm:$0xff]
    %v2054 = vld [vmem:[%s19 + $0x90] sm:$0xff]
    %v2055 = vld [vmem:[%s19 + $0x98] sm:$0xff]
    %v2056 = vld [vmem:[%s19 + $0xa0] sm:$0xff]
    %v2057 = vld [vmem:[%s19 + $0xa8] sm:$0xff]
    %v2058 = vld [vmem:[%s19 + $0xb0] sm:$0xff]
    %v2059 = vld [vmem:[%s19 + $0xb8] sm:$0xff]
    %v2060 = vld [vmem:[%s19 + $0xc0] sm:$0xff]
    %v2061 = vld [vmem:[%s19 + $0xc8] sm:$0xff]
    %v2062 = vld [vmem:[%s19 + $0xd0] sm:$0xff]
    %v2063 = vld [vmem:[%s19 + $0xd8] sm:$0xff]
    %v2065 = vsel %vm191, %v2035, 0
    %2067 = vmatpush.msra.mxu0 %v2051
    %2068 = vmatpush.msra.mxu0 %v2050
    %2069 = vmatpush.msra.mxu0 %v2049
    %2070 = vmatpush.msra.mxu0 %v2048
    %2071 = vmatpush.msra.mxu0 %v2047
    %2072 = vmatpush.msra.mxu0 %v2046
    %2073 = vmatpush.msra.mxu0 %v2045
    %2074 = vmatpush.msra.mxu0 %v2044
    %2075 = vmatpush.msra.mxu0 %v2043
    %2076 = vmatpush.msra.mxu0 %v2042
    %2077 = vmatpush.msra.mxu0 %v2041
    %2078 = vmatpush.msra.mxu0 %v2040
    %2079 = vmatpush.msra.mxu0 %v2039
    %2080 = vmatpush.msra.mxu0 %v2038
    %2081 = vmatpush.msra.mxu0 %v2037
    %2082 = vmatpush.msra.mxu0 %v2036
    %2083 = vmatmul.f32.gmra.mxu0 %v2034
    %v2084 = vpop.f32.mrf.mxu0
    %v2085 = vadd.f32 0.0, %v2084
    %2086 = vdwg.mxu0
    %2087 = vmatpush.msra.mxu0 0.0
    %2088 = vmatpush.msra.mxu0 0.0
    %2089 = vmatpush.msra.mxu0 0.0
    %2090 = vmatpush.msra.mxu0 0.0
    %2091 = vmatpush.msra.mxu0 %v2063
    %2092 = vmatpush.msra.mxu0 %v2062
    %2093 = vmatpush.msra.mxu0 %v2061
    %2094 = vmatpush.msra.mxu0 %v2060
    %2095 = vmatpush.msra.mxu0 %v2059
    %2096 = vmatpush.msra.mxu0 %v2058
    %2097 = vmatpush.msra.mxu0 %v2057
    %2098 = vmatpush.msra.mxu0 %v2056
    %2099 = vmatpush.msra.mxu0 %v2055
    %2100 = vmatpush.msra.mxu0 %v2054
    %2101 = vmatpush.msra.mxu0 %v2053
    %2102 = vmatpush.msra.mxu0 %v2052
    %2103 = vmatmul.f32.gmra.mxu0 %v2065
    %v2104 = vpop.f32.mrf.mxu0
    %v2105 = vadd.f32 %v2085, %v2104
    %2106 = vdwg.mxu0
    %v2107 = vmul.f32 %v2105, 0.0006377551
    %v2108 = vmul.f32 %v2107, %v2107
    %v2110 = vrot.slane %v2108, 7
    %v2112 = vsub.f32 %v2107, %v2110
    %v2113 = vmax.f32 %v2112, 0.0
    %v2114 = vld [vmem:[%s15] sm:$0x1]
    %v2115 = vadd.f32 %v2113, 1e-05
    %v2116 = vrsqrt.pop %v2115
    %v2117 = vmul.f32 %v2116, %v2115
    %v2118 = vmul.f32 %v2117, %v2116
    %v2119 = vmul.f32 0.5, %v2118
    %v2120 = vsub.f32 1.5, %v2119
    %v2121 = vmul.f32 %v2116, %v2120
    %vm2122 = vweird.f32 %v2115
    %vm2123 = vweird.f32 %v2116
    %vm2124 = vmor %vm2122, %vm2123
    %v2125 = vsel %vm2124, %v2116, %v2121
    %2127 = vst [vmem:[#allocation1] sm:$0xff] %v2125
    %s2128 = scalar_lea.vmem [#allocation1], 1
    %v2129 = vld [vmem:[%s2128] ss:$9 sm:$0xff]
    %v2131 = vmul.f32 %v2114, %v2129
    %v2132 = vld [vmem:[%s17] sm:$0x1]
    %v2133 = vmul.f32 %v2107, %v2131
    %v2134 = vsub.f32 %v2132, %v2133
    %v2136 = vperm.slane %v2134, 0
    %v2138 = vsel %vm719, %v2131, %v2136
    %v2139 = vld [vmem:[%s21] sm:$0xff]
    %v2140 = vld [vmem:[%s21 + $0x8] sm:$0xff]
    %v2142 = vsel %vm829, %v2138, 0
    %2144 = vmatpush.msra.mxu0 0.0
    %2145 = vmatpush.msra.mxu0 0.0
    %2146 = vmatpush.msra.mxu0 0.0
    %2147 = vmatpush.msra.mxu0 0.0
    %2148 = vmatpush.msra.mxu0 0.0
    %2149 = vmatpush.msra.mxu0 0.0
    %2150 = vmatpush.msra.mxu0 0.0
    %2151 = vmatpush.msra.mxu0 0.0
    %2152 = vmatpush.msra.mxu0 0.0
    %2153 = vmatpush.msra.mxu0 0.0
    %2154 = vmatpush.msra.mxu0 0.0
    %2155 = vmatpush.msra.mxu0 0.0
    %2156 = vmatpush.msra.mxu0 0.0
    %2157 = vmatpush.msra.mxu0 0.0
    %2158 = vmatpush.msra.mxu0 0.0
    %2159 = vmatpush.msra.mxu0 %v2139
    %2160 = vmatmul.f32.gmra.mxu0 %v2142
    %v2161 = vpop.f32.mrf.mxu0
    %v2162 = vadd.f32 0.0, %v2161
    %2163 = vdwg.mxu0
    %2164 = vmatpush.msra.mxu0 0.0
    %2165 = vmatpush.msra.mxu0 0.0
    %2166 = vmatpush.msra.mxu0 0.0
    %2167 = vmatpush.msra.mxu0 0.0
    %2168 = vmatpush.msra.mxu0 0.0
    %2169 = vmatpush.msra.mxu0 0.0
    %2170 = vmatpush.msra.mxu0 0.0
    %2171 = vmatpush.msra.mxu0 0.0
    %2172 = vmatpush.msra.mxu0 0.0
    %2173 = vmatpush.msra.mxu0 0.0
    %2174 = vmatpush.msra.mxu0 0.0
    %2175 = vmatpush.msra.mxu0 0.0
    %2176 = vmatpush.msra.mxu0 0.0
    %2177 = vmatpush.msra.mxu0 0.0
    %2178 = vmatpush.msra.mxu0 0.0
    %2179 = vmatpush.msra.mxu0 %v2140
    %2180 = vmatmul.f32.gmra.mxu0 %v2142
    %v2181 = vpop.f32.mrf.mxu0
    %v2182 = vadd.f32 0.0, %v2181
    %2183 = vdwg.mxu0
    %v2184 = vperm.slane %v2162, 0
    %v2185 = vperm.slane %v2182, 0
    %v2186 = vmul.f32 %v1710, %v2184
    %v2187 = vmul.f32 %v1938, %v2185
    %v2188 = vmul.f32 %v1713, %v2184
    %v2189 = vmul.f32 %v1941, %v2185
    %v2190 = vmul.f32 %v1716, %v2184
    %v2191 = vmul.f32 %v1944, %v2185
    %v2192 = vmul.f32 %v1719, %v2184
    %v2193 = vmul.f32 %v1947, %v2185
    %v2194 = vmul.f32 %v1722, %v2184
    %v2195 = vmul.f32 %v1950, %v2185
    %v2196 = vmul.f32 %v1725, %v2184
    %v2197 = vmul.f32 %v1953, %v2185
    %v2198 = vmul.f32 %v1728, %v2184
    %v2199 = vmul.f32 %v1956, %v2185
    %v2200 = vperm.slane %v2162, 1
    %v2201 = vperm.slane %v2182, 1
    %v2202 = vadd.f32 %v2186, %v2200
    %v2203 = vadd.f32 %v2187, %v2201
    %v2204 = vadd.f32 %v2188, %v2200
    %v2205 = vadd.f32 %v2189, %v2201
    %v2206 = vadd.f32 %v2190, %v2200
    %v2207 = vadd.f32 %v2191, %v2201
    %v2208 = vadd.f32 %v2192, %v2200
    %v2209 = vadd.f32 %v2193, %v2201
    %v2210 = vadd.f32 %v2194, %v2200
    %v2211 = vadd.f32 %v2195, %v2201
    %v2212 = vadd.f32 %v2196, %v2200
    %v2213 = vadd.f32 %v2197, %v2201
    %v2214 = vadd.f32 %v2198, %v2200
    %v2215 = vadd.f32 %v2199, %v2201
    %vm2216 = vcmp.gt.f32.partialorder %v2202, 0.0
    %vm2217 = vcmp.gt.f32.partialorder %v2203, 0.0
    %vm2218 = vcmp.gt.f32.partialorder %v2204, 0.0
    %vm2219 = vcmp.gt.f32.partialorder %v2205, 0.0
    %vm2220 = vcmp.gt.f32.partialorder %v2206, 0.0
    %vm2221 = vcmp.gt.f32.partialorder %v2207, 0.0
    %vm2222 = vcmp.gt.f32.partialorder %v2208, 0.0
    %vm2223 = vcmp.gt.f32.partialorder %v2209, 0.0
    %vm2224 = vcmp.gt.f32.partialorder %v2210, 0.0
    %vm2225 = vcmp.gt.f32.partialorder %v2211, 0.0
    %vm2226 = vcmp.gt.f32.partialorder %v2212, 0.0
    %vm2227 = vcmp.gt.f32.partialorder %v2213, 0.0
    %vm2228 = vcmp.gt.f32.partialorder %v2214, 0.0
    %vm2229 = vcmp.gt.f32.partialorder %v2215, 0.0
    %v2230 = vmin.f32 %v2202, 0.0
    %v2231 = vmin.f32 %v2203, 0.0
    %v2232 = vmin.f32 %v2204, 0.0
    %v2233 = vmin.f32 %v2205, 0.0
    %v2234 = vmin.f32 %v2206, 0.0
    %v2235 = vmin.f32 %v2207, 0.0
    %v2236 = vmin.f32 %v2208, 0.0
    %v2237 = vmin.f32 %v2209, 0.0
    %v2238 = vmin.f32 %v2210, 0.0
    %v2239 = vmin.f32 %v2211, 0.0
    %v2240 = vmin.f32 %v2212, 0.0
    %v2241 = vmin.f32 %v2213, 0.0
    %v2242 = vmin.f32 %v2214, 0.0
    %v2243 = vmin.f32 %v2215, 0.0
    %v2244 = vmul.f32 %v2230, 1.442695
    %v2245 = vpow.pop %v2244
    %v2246 = vmul.f32 %v2231, 1.442695
    %v2247 = vpow.pop %v2246
    %v2248 = vmul.f32 %v2232, 1.442695
    %v2249 = vpow.pop %v2248
    %v2250 = vmul.f32 %v2233, 1.442695
    %v2251 = vpow.pop %v2250
    %v2252 = vmul.f32 %v2234, 1.442695
    %v2253 = vpow.pop %v2252
    %v2254 = vmul.f32 %v2235, 1.442695
    %v2255 = vpow.pop %v2254
    %v2256 = vmul.f32 %v2236, 1.442695
    %v2257 = vpow.pop %v2256
    %v2258 = vmul.f32 %v2237, 1.442695
    %v2259 = vpow.pop %v2258
    %v2260 = vmul.f32 %v2238, 1.442695
    %v2261 = vpow.pop %v2260
    %v2262 = vmul.f32 %v2239, 1.442695
    %v2263 = vpow.pop %v2262
    %v2264 = vmul.f32 %v2240, 1.442695
    %v2265 = vpow.pop %v2264
    %v2266 = vmul.f32 %v2241, 1.442695
    %v2267 = vpow.pop %v2266
    %v2268 = vmul.f32 %v2242, 1.442695
    %v2269 = vpow.pop %v2268
    %v2270 = vmul.f32 %v2243, 1.442695
    %v2271 = vpow.pop %v2270
    %v2272 = vsub.f32 %v2245, 1.0
    %v2273 = vsub.f32 %v2247, 1.0
    %v2274 = vsub.f32 %v2249, 1.0
    %v2275 = vsub.f32 %v2251, 1.0
    %v2276 = vsub.f32 %v2253, 1.0
    %v2277 = vsub.f32 %v2255, 1.0
    %v2278 = vsub.f32 %v2257, 1.0
    %v2279 = vsub.f32 %v2259, 1.0
    %v2280 = vsub.f32 %v2261, 1.0
    %v2281 = vsub.f32 %v2263, 1.0
    %v2282 = vsub.f32 %v2265, 1.0
    %v2283 = vsub.f32 %v2267, 1.0
    %v2284 = vsub.f32 %v2269, 1.0
    %v2285 = vsub.f32 %v2271, 1.0
    %v2286 = vsel %vm2216, %v2202, %v2272
    %v2287 = vsel %vm2217, %v2203, %v2273
    %v2288 = vsel %vm2218, %v2204, %v2274
    %v2289 = vsel %vm2219, %v2205, %v2275
    %v2290 = vsel %vm2220, %v2206, %v2276
    %v2291 = vsel %vm2221, %v2207, %v2277
    %v2292 = vsel %vm2222, %v2208, %v2278
    %v2293 = vsel %vm2223, %v2209, %v2279
    %v2294 = vsel %vm2224, %v2210, %v2280
    %v2295 = vsel %vm2225, %v2211, %v2281
    %v2296 = vsel %vm2226, %v2212, %v2282
    %v2297 = vsel %vm2227, %v2213, %v2283
    %v2298 = vsel %vm2228, %v2214, %v2284
    %v2299 = vsel %vm2229, %v2215, %v2285
    %v2300 = vld [vmem:[%s23] sm:$0xff]
    %v2301 = vld [vmem:[%s23 + $0x8] sm:$0xff]
    %v2302 = vld [vmem:[%s23 + $0x10] sm:$0xff]
    %v2303 = vld [vmem:[%s23 + $0x18] sm:$0xf]
    %vm2304 = vcmask 457728
    %v2306 = vsel %vm2304, %v2300, 0
    %v2309 = vsel %vm2304, %v2301, 0
    %v2312 = vsel %vm2304, %v2302, 0
    %v2315 = vsel %vm2304, %v2303, 0
    %2317 = vmatpush.msra.mxu0 0.0
    %2318 = vmatpush.msra.mxu0 0.0
    %2319 = vmatpush.msra.mxu0 0.0
    %2320 = vmatpush.msra.mxu0 0.0
    %2321 = vmatpush.msra.mxu0 0.0
    %2322 = vmatpush.msra.mxu0 0.0
    %2323 = vmatpush.msra.mxu0 0.0
    %2324 = vmatpush.msra.mxu0 0.0
    %2325 = vmatpush.msra.mxu0 0.0
    %2326 = vmatpush.msra.mxu0 %v2298
    %2327 = vmatpush.msra.mxu0 %v2296
    %2328 = vmatpush.msra.mxu0 %v2294
    %2329 = vmatpush.msra.mxu0 %v2292
    %2330 = vmatpush.msra.mxu0 %v2290
    %2331 = vmatpush.msra.mxu0 %v2288
    %2332 = vmatpush.msra.mxu0 %v2286
    %2333 = vmatmul.f32.gmra.mxu0 %v2306
    %v2334 = vpop.f32.mrf.mxu0
    %v2335 = vadd.f32 0.0, %v2334
    %2336 = vmatmul.f32.gmra.mxu0 %v2309
    %v2337 = vpop.f32.mrf.mxu0
    %v2338 = vadd.f32 0.0, %v2337
    %2339 = vmatmul.f32.gmra.mxu0 %v2312
    %v2340 = vpop.f32.mrf.mxu0
    %v2341 = vadd.f32 0.0, %v2340
    %2342 = vmatmul.f32.gmra.mxu0 %v2315
    %v2343 = vpop.f32.mrf.mxu0
    %v2344 = vadd.f32 0.0, %v2343
    %2345 = vdwg.mxu0
    %2346 = vmatpush.msra.mxu0 0.0
    %2347 = vmatpush.msra.mxu0 0.0
    %2348 = vmatpush.msra.mxu0 0.0
    %2349 = vmatpush.msra.mxu0 0.0
    %2350 = vmatpush.msra.mxu0 0.0
    %2351 = vmatpush.msra.mxu0 0.0
    %2352 = vmatpush.msra.mxu0 0.0
    %2353 = vmatpush.msra.mxu0 0.0
    %2354 = vmatpush.msra.mxu0 0.0
    %2355 = vmatpush.msra.mxu0 %v2299
    %2356 = vmatpush.msra.mxu0 %v2297
    %2357 = vmatpush.msra.mxu0 %v2295
    %2358 = vmatpush.msra.mxu0 %v2293
    %2359 = vmatpush.msra.mxu0 %v2291
    %2360 = vmatpush.msra.mxu0 %v2289
    %2361 = vmatpush.msra.mxu0 %v2287
    %2362 = vmatmul.f32.gmra.mxu0 %v2306
    %v2363 = vpop.f32.mrf.mxu0
    %v2364 = vadd.f32 0.0, %v2363
    %2365 = vmatmul.f32.gmra.mxu0 %v2309
    %v2366 = vpop.f32.mrf.mxu0
    %v2367 = vadd.f32 0.0, %v2366
    %2368 = vmatmul.f32.gmra.mxu0 %v2312
    %v2369 = vpop.f32.mrf.mxu0
    %v2370 = vadd.f32 0.0, %v2369
    %2371 = vmatmul.f32.gmra.mxu0 %v2315
    %v2372 = vpop.f32.mrf.mxu0
    %v2373 = vadd.f32 0.0, %v2372
    %2374 = vdwg.mxu0
    %s2375 = scalar_lea.vmem %s23, 32
    %v2376 = vld [vmem:[%s2375] sm:$0xff]
    %v2377 = vld [vmem:[%s2375 + $0x8] sm:$0xff]
    %v2378 = vld [vmem:[%s2375 + $0x10] sm:$0xff]
    %v2379 = vld [vmem:[%s2375 + $0x18] sm:$0xf]
    %v2381 = vsel %vm2304, %v2376, 0
    %v2384 = vsel %vm2304, %v2377, 0
    %v2387 = vsel %vm2304, %v2378, 0
    %v2390 = vsel %vm2304, %v2379, 0
    %2392 = vmatpush.msra.mxu0 0.0
    %2393 = vmatpush.msra.mxu0 0.0
    %2394 = vmatpush.msra.mxu0 0.0
    %2395 = vmatpush.msra.mxu0 0.0
    %2396 = vmatpush.msra.mxu0 0.0
    %2397 = vmatpush.msra.mxu0 0.0
    %2398 = vmatpush.msra.mxu0 0.0
    %2399 = vmatpush.msra.mxu0 0.0
    %2400 = vmatpush.msra.mxu0 0.0
    %2401 = vmatpush.msra.mxu0 %v2298
    %2402 = vmatpush.msra.mxu0 %v2296
    %2403 = vmatpush.msra.mxu0 %v2294
    %2404 = vmatpush.msra.mxu0 %v2292
    %2405 = vmatpush.msra.mxu0 %v2290
    %2406 = vmatpush.msra.mxu0 %v2288
    %2407 = vmatpush.msra.mxu0 %v2286
    %2408 = vmatmul.f32.gmra.mxu0 %v2381
    %v2409 = vpop.f32.mrf.mxu0
    %v2410 = vadd.f32 0.0, %v2409
    %2411 = vmatmul.f32.gmra.mxu0 %v2384
    %v2412 = vpop.f32.mrf.mxu0
    %v2413 = vadd.f32 0.0, %v2412
    %2414 = vmatmul.f32.gmra.mxu0 %v2387
    %v2415 = vpop.f32.mrf.mxu0
    %v2416 = vadd.f32 0.0, %v2415
    %2417 = vmatmul.f32.gmra.mxu0 %v2390
    %v2418 = vpop.f32.mrf.mxu0
    %v2419 = vadd.f32 0.0, %v2418
    %2420 = vdwg.mxu0
    %2421 = vmatpush.msra.mxu0 0.0
    %2422 = vmatpush.msra.mxu0 0.0
    %2423 = vmatpush.msra.mxu0 0.0
    %2424 = vmatpush.msra.mxu0 0.0
    %2425 = vmatpush.msra.mxu0 0.0
    %2426 = vmatpush.msra.mxu0 0.0
    %2427 = vmatpush.msra.mxu0 0.0
    %2428 = vmatpush.msra.mxu0 0.0
    %2429 = vmatpush.msra.mxu0 0.0
    %2430 = vmatpush.msra.mxu0 %v2299
    %2431 = vmatpush.msra.mxu0 %v2297
    %2432 = vmatpush.msra.mxu0 %v2295
    %2433 = vmatpush.msra.mxu0 %v2293
    %2434 = vmatpush.msra.mxu0 %v2291
    %2435 = vmatpush.msra.mxu0 %v2289
    %2436 = vmatpush.msra.mxu0 %v2287
    %2437 = vmatmul.f32.gmra.mxu0 %v2381
    %v2438 = vpop.f32.mrf.mxu0
    %v2439 = vadd.f32 0.0, %v2438
    %2440 = vmatmul.f32.gmra.mxu0 %v2384
    %v2441 = vpop.f32.mrf.mxu0
    %v2442 = vadd.f32 0.0, %v2441
    %2443 = vmatmul.f32.gmra.mxu0 %v2387
    %v2444 = vpop.f32.mrf.mxu0
    %v2445 = vadd.f32 0.0, %v2444
    %2446 = vmatmul.f32.gmra.mxu0 %v2390
    %v2447 = vpop.f32.mrf.mxu0
    %v2448 = vadd.f32 0.0, %v2447
    %2449 = vdwg.mxu0
    %v2450 = vmax.f32 %v2335, %v2410
    %v2451 = vmax.f32 %v2364, %v2439
    %v2452 = vmax.f32 %v2338, %v2413
    %v2453 = vmax.f32 %v2367, %v2442
    %v2454 = vmax.f32 %v2341, %v2416
    %v2455 = vmax.f32 %v2370, %v2445
    %v2456 = vmax.f32 %v2344, %v2419
    %v2457 = vmax.f32 %v2373, %v2448
    %v2458 = vld [vmem:[%s25] sm:$0xff]
    %v2459 = vld [vmem:[%s25 + $0x8] sm:$0xff]
    %v2460 = vld [vmem:[%s25 + $0x10] sm:$0xff]
    %v2461 = vld [vmem:[%s25 + $0x18] sm:$0xff]
    %v2462 = vld [vmem:[%s25 + $0x20] sm:$0xff]
    %v2463 = vld [vmem:[%s25 + $0x28] sm:$0xff]
    %v2464 = vld [vmem:[%s25 + $0x30] sm:$0xff]
    %v2465 = vld [vmem:[%s25 + $0x38] sm:$0xff]
    %v2466 = vld [vmem:[%s25 + $0x40] sm:$0xff]
    %v2467 = vld [vmem:[%s25 + $0x48] sm:$0xff]
    %v2468 = vld [vmem:[%s25 + $0x50] sm:$0xff]
    %v2469 = vld [vmem:[%s25 + $0x58] sm:$0xff]
    %v2470 = vld [vmem:[%s25 + $0x60] sm:$0xff]
    %v2471 = vld [vmem:[%s25 + $0x68] sm:$0xff]
    %v2472 = vld [vmem:[%s25 + $0x70] sm:$0xff]
    %v2473 = vld [vmem:[%s25 + $0x78] sm:$0xff]
    %v2474 = vld [vmem:[%s25 + $0x80] sm:$0xff]
    %v2475 = vld [vmem:[%s25 + $0x88] sm:$0xff]
    %v2476 = vld [vmem:[%s25 + $0x90] sm:$0xff]
    %v2477 = vld [vmem:[%s25 + $0x98] sm:$0xff]
    %v2478 = vld [vmem:[%s25 + $0xa0] sm:$0xff]
    %v2479 = vld [vmem:[%s25 + $0xa8] sm:$0xff]
    %v2480 = vld [vmem:[%s25 + $0xb0] sm:$0xff]
    %v2481 = vld [vmem:[%s25 + $0xb8] sm:$0xff]
    %v2482 = vld [vmem:[%s25 + $0xc0] sm:$0xff]
    %v2483 = vld [vmem:[%s25 + $0xc8] sm:$0xff]
    %v2484 = vld [vmem:[%s25 + $0xd0] sm:$0xff]
    %v2485 = vld [vmem:[%s25 + $0xd8] sm:$0xff]
    %v2487 = vsel %vm191, %v2451, 0
    %v2490 = vsel %vm191, %v2453, 0
    %v2493 = vsel %vm191, %v2455, 0
    %v2496 = vsel %vm191, %v2457, 0
    %2498 = vmatpush.msra.mxu0 %v2473
    %2499 = vmatpush.msra.mxu0 %v2472
    %2500 = vmatpush.msra.mxu0 %v2471
    %2501 = vmatpush.msra.mxu0 %v2470
    %2502 = vmatpush.msra.mxu0 %v2469
    %2503 = vmatpush.msra.mxu0 %v2468
    %2504 = vmatpush.msra.mxu0 %v2467
    %2505 = vmatpush.msra.mxu0 %v2466
    %2506 = vmatpush.msra.mxu0 %v2465
    %2507 = vmatpush.msra.mxu0 %v2464
    %2508 = vmatpush.msra.mxu0 %v2463
    %2509 = vmatpush.msra.mxu0 %v2462
    %2510 = vmatpush.msra.mxu0 %v2461
    %2511 = vmatpush.msra.mxu0 %v2460
    %2512 = vmatpush.msra.mxu0 %v2459
    %2513 = vmatpush.msra.mxu0 %v2458
    %2514 = vmatmul.f32.gmra.mxu0 %v2450
    %v2515 = vpop.f32.mrf.mxu0
    %v2516 = vadd.f32 0.0, %v2515
    %2517 = vmatmul.f32.gmra.mxu0 %v2452
    %v2518 = vpop.f32.mrf.mxu0
    %v2519 = vadd.f32 0.0, %v2518
    %2520 = vmatmul.f32.gmra.mxu0 %v2454
    %v2521 = vpop.f32.mrf.mxu0
    %v2522 = vadd.f32 0.0, %v2521
    %2523 = vmatmul.f32.gmra.mxu0 %v2456
    %v2524 = vpop.f32.mrf.mxu0
    %v2525 = vadd.f32 0.0, %v2524
    %2526 = vdwg.mxu0
    %2527 = vmatpush.msra.mxu0 0.0
    %2528 = vmatpush.msra.mxu0 0.0
    %2529 = vmatpush.msra.mxu0 0.0
    %2530 = vmatpush.msra.mxu0 0.0
    %2531 = vmatpush.msra.mxu0 %v2485
    %2532 = vmatpush.msra.mxu0 %v2484
    %2533 = vmatpush.msra.mxu0 %v2483
    %2534 = vmatpush.msra.mxu0 %v2482
    %2535 = vmatpush.msra.mxu0 %v2481
    %2536 = vmatpush.msra.mxu0 %v2480
    %2537 = vmatpush.msra.mxu0 %v2479
    %2538 = vmatpush.msra.mxu0 %v2478
    %2539 = vmatpush.msra.mxu0 %v2477
    %2540 = vmatpush.msra.mxu0 %v2476
    %2541 = vmatpush.msra.mxu0 %v2475
    %2542 = vmatpush.msra.mxu0 %v2474
    %2543 = vmatmul.f32.gmra.mxu0 %v2487
    %v2544 = vpop.f32.mrf.mxu0
    %v2545 = vadd.f32 %v2516, %v2544
    %2546 = vmatmul.f32.gmra.mxu0 %v2490
    %v2547 = vpop.f32.mrf.mxu0
    %v2548 = vadd.f32 %v2519, %v2547
    %2549 = vmatmul.f32.gmra.mxu0 %v2493
    %v2550 = vpop.f32.mrf.mxu0
    %v2551 = vadd.f32 %v2522, %v2550
    %2552 = vmatmul.f32.gmra.mxu0 %v2496
    %v2553 = vpop.f32.mrf.mxu0
    %v2554 = vadd.f32 %v2525, %v2553
    %2555 = vdwg.mxu0
    %s2556 = scalar_lea.vmem %s25, 224
    %v2557 = vld [vmem:[%s2556] sm:$0xff]
    %v2558 = vld [vmem:[%s2556 + $0x8] sm:$0xff]
    %v2559 = vld [vmem:[%s2556 + $0x10] sm:$0xff]
    %v2560 = vld [vmem:[%s2556 + $0x18] sm:$0xff]
    %v2561 = vld [vmem:[%s2556 + $0x20] sm:$0xff]
    %v2562 = vld [vmem:[%s2556 + $0x28] sm:$0xff]
    %v2563 = vld [vmem:[%s2556 + $0x30] sm:$0xff]
    %v2564 = vld [vmem:[%s2556 + $0x38] sm:$0xff]
    %v2565 = vld [vmem:[%s2556 + $0x40] sm:$0xff]
    %v2566 = vld [vmem:[%s2556 + $0x48] sm:$0xff]
    %v2567 = vld [vmem:[%s2556 + $0x50] sm:$0xff]
    %v2568 = vld [vmem:[%s2556 + $0x58] sm:$0xff]
    %v2569 = vld [vmem:[%s2556 + $0x60] sm:$0xff]
    %v2570 = vld [vmem:[%s2556 + $0x68] sm:$0xff]
    %v2571 = vld [vmem:[%s2556 + $0x70] sm:$0xff]
    %v2572 = vld [vmem:[%s2556 + $0x78] sm:$0xff]
    %v2573 = vld [vmem:[%s2556 + $0x80] sm:$0xff]
    %v2574 = vld [vmem:[%s2556 + $0x88] sm:$0xff]
    %v2575 = vld [vmem:[%s2556 + $0x90] sm:$0xff]
    %v2576 = vld [vmem:[%s2556 + $0x98] sm:$0xff]
    %v2577 = vld [vmem:[%s2556 + $0xa0] sm:$0xff]
    %v2578 = vld [vmem:[%s2556 + $0xa8] sm:$0xff]
    %v2579 = vld [vmem:[%s2556 + $0xb0] sm:$0xff]
    %v2580 = vld [vmem:[%s2556 + $0xb8] sm:$0xff]
    %v2581 = vld [vmem:[%s2556 + $0xc0] sm:$0xff]
    %v2582 = vld [vmem:[%s2556 + $0xc8] sm:$0xff]
    %v2583 = vld [vmem:[%s2556 + $0xd0] sm:$0xff]
    %v2584 = vld [vmem:[%s2556 + $0xd8] sm:$0xff]
    %2585 = vmatpush.msra.mxu0 %v2572
    %2586 = vmatpush.msra.mxu0 %v2571
    %2587 = vmatpush.msra.mxu0 %v2570
    %2588 = vmatpush.msra.mxu0 %v2569
    %2589 = vmatpush.msra.mxu0 %v2568
    %2590 = vmatpush.msra.mxu0 %v2567
    %2591 = vmatpush.msra.mxu0 %v2566
    %2592 = vmatpush.msra.mxu0 %v2565
    %2593 = vmatpush.msra.mxu0 %v2564
    %2594 = vmatpush.msra.mxu0 %v2563
    %2595 = vmatpush.msra.mxu0 %v2562
    %2596 = vmatpush.msra.mxu0 %v2561
    %2597 = vmatpush.msra.mxu0 %v2560
    %2598 = vmatpush.msra.mxu0 %v2559
    %2599 = vmatpush.msra.mxu0 %v2558
    %2600 = vmatpush.msra.mxu0 %v2557
    %2601 = vmatmul.f32.gmra.mxu0 %v2450
    %v2602 = vpop.f32.mrf.mxu0
    %v2603 = vadd.f32 0.0, %v2602
    %2604 = vmatmul.f32.gmra.mxu0 %v2452
    %v2605 = vpop.f32.mrf.mxu0
    %v2606 = vadd.f32 0.0, %v2605
    %2607 = vmatmul.f32.gmra.mxu0 %v2454
    %v2608 = vpop.f32.mrf.mxu0
    %v2609 = vadd.f32 0.0, %v2608
    %2610 = vmatmul.f32.gmra.mxu0 %v2456
    %v2611 = vpop.f32.mrf.mxu0
    %v2612 = vadd.f32 0.0, %v2611
    %2613 = vdwg.mxu0
    %2614 = vmatpush.msra.mxu0 0.0
    %2615 = vmatpush.msra.mxu0 0.0
    %2616 = vmatpush.msra.mxu0 0.0
    %2617 = vmatpush.msra.mxu0 0.0
    %2618 = vmatpush.msra.mxu0 %v2584
    %2619 = vmatpush.msra.mxu0 %v2583
    %2620 = vmatpush.msra.mxu0 %v2582
    %2621 = vmatpush.msra.mxu0 %v2581
    %2622 = vmatpush.msra.mxu0 %v2580
    %2623 = vmatpush.msra.mxu0 %v2579
    %2624 = vmatpush.msra.mxu0 %v2578
    %2625 = vmatpush.msra.mxu0 %v2577
    %2626 = vmatpush.msra.mxu0 %v2576
    %2627 = vmatpush.msra.mxu0 %v2575
    %2628 = vmatpush.msra.mxu0 %v2574
    %2629 = vmatpush.msra.mxu0 %v2573
    %2630 = vmatmul.f32.gmra.mxu0 %v2487
    %v2631 = vpop.f32.mrf.mxu0
    %v2632 = vadd.f32 %v2603, %v2631
    %2633 = vmatmul.f32.gmra.mxu0 %v2490
    %v2634 = vpop.f32.mrf.mxu0
    %v2635 = vadd.f32 %v2606, %v2634
    %2636 = vmatmul.f32.gmra.mxu0 %v2493
    %v2637 = vpop.f32.mrf.mxu0
    %v2638 = vadd.f32 %v2609, %v2637
    %2639 = vmatmul.f32.gmra.mxu0 %v2496
    %v2640 = vpop.f32.mrf.mxu0
    %v2641 = vadd.f32 %v2612, %v2640
    %2642 = vdwg.mxu0
    %v2643 = vmax.f32 %v2545, %v2632
    %v2644 = vmax.f32 %v2548, %v2635
    %v2645 = vmax.f32 %v2551, %v2638
    %v2646 = vmax.f32 %v2554, %v2641
    %v2649 = vrot.slane %v2643, 1
    %v2650 = vrot.slane %v2644, 1
    %v2651 = vsel %vm151, %v2649, %v2650
    %2652 = vrot.lane.b32.xlu0 %v2651, 112
    %v2653 = vpop.permute.xlu0 %2652
    %2654 = vrot.lane.b32.xlu0 %v2650, 112
    %v2655 = vpop.permute.xlu0 %2654
    %v2658 = vrot.slane %v2643, 2
    %v2659 = vrot.slane %v2644, 2
    %v2660 = vsel %vm171, %v2658, %v2659
    %2661 = vrot.lane.b32.xlu0 %v2660, 96
    %v2662 = vpop.permute.xlu0 %2661
    %2663 = vrot.lane.b32.xlu0 %v2659, 96
    %v2664 = vpop.permute.xlu0 %2663
    %v2667 = vsel %vm645, %v2643, %v2653
    %v2668 = vsel %vm645, %v2644, %v2655
    %v2669 = vsel %vm191, %v2653, %v2662
    %v2670 = vsel %vm191, %v2655, %v2664
    %v2673 = vrot.slane %v2645, 1
    %v2674 = vsel %vm151, %v2650, %v2673
    %v2675 = vrot.slane %v2646, 1
    %v2676 = vsel %vm151, %v2673, %v2675
    %2677 = vrot.lane.b32.xlu0 %v2674, 112
    %v2678 = vpop.permute.xlu0 %2677
    %2679 = vrot.lane.b32.xlu0 %v2676, 112
    %v2680 = vpop.permute.xlu0 %2679
    %2681 = vrot.lane.b32.xlu0 %v2675, 112
    %v2682 = vpop.permute.xlu0 %2681
    %v2686 = vrot.slane %v2645, 2
    %v2687 = vrot.slane %v2646, 2
    %v2688 = vsel %vm171, %v2686, %v2687
    %2689 = vrot.lane.b32.xlu0 %v2686, 96
    %v2690 = vpop.permute.xlu0 %2689
    %2691 = vrot.lane.b32.xlu0 %v2688, 96
    %v2692 = vpop.permute.xlu0 %2691
    %2693 = vrot.lane.b32.xlu0 %v2687, 96
    %v2694 = vpop.permute.xlu0 %2693
    %v2698 = vsel %vm645, %v2644, %v2678
    %v2699 = vsel %vm645, %v2645, %v2680
    %v2700 = vsel %vm645, %v2646, %v2682
    %v2701 = vsel %vm191, %v2678, %v2690
    %v2702 = vsel %vm191, %v2680, %v2692
    %v2703 = vsel %vm191, %v2682, %v2694
    %v2710 = vrot.slane %v2698, 2
    %v2711 = vrot.slane %v2699, 2
    %v2712 = vsel %vm171, %v2710, %v2711
    %v2713 = vrot.slane %v2701, 2
    %v2714 = vrot.slane %v2702, 2
    %v2715 = vsel %vm171, %v2713, %v2714
    %v2716 = vrot.slane %v2690, 2
    %v2717 = vrot.slane %v2692, 2
    %v2718 = vsel %vm171, %v2716, %v2717
    %v2719 = vrot.slane %v2700, 2
    %v2720 = vsel %vm171, %v2711, %v2719
    %v2721 = vrot.slane %v2703, 2
    %v2722 = vsel %vm171, %v2714, %v2721
    %v2723 = vrot.slane %v2694, 2
    %v2724 = vsel %vm171, %v2717, %v2723
    %v2730 = vsel %vm636, %v2668, %v2712
    %v2731 = vsel %vm636, %v2670, %v2715
    %v2732 = vsel %vm636, %v2664, %v2718
    %v2733 = vld [vmem:[%s27] sm:$0xff]
    %v2734 = vld [vmem:[%s27 + $0x8] sm:$0xff]
    %v2735 = vld [vmem:[%s27 + $0x10] sm:$0xff]
    %v2736 = vld [vmem:[%s27 + $0x18] sm:$0xff]
    %v2737 = vld [vmem:[%s27 + $0x20] sm:$0xff]
    %v2738 = vld [vmem:[%s27 + $0x28] sm:$0xff]
    %v2739 = vld [vmem:[%s27 + $0x30] sm:$0xff]
    %v2740 = vld [vmem:[%s27 + $0x38] sm:$0xff]
    %v2741 = vld [vmem:[%s27 + $0x40] sm:$0xff]
    %v2742 = vld [vmem:[%s27 + $0x48] sm:$0xff]
    %v2743 = vld [vmem:[%s27 + $0x50] sm:$0xff]
    %v2744 = vld [vmem:[%s27 + $0x58] sm:$0xff]
    %v2745 = vld [vmem:[%s27 + $0x60] sm:$0xff]
    %v2746 = vld [vmem:[%s27 + $0x68] sm:$0xff]
    %v2747 = vld [vmem:[%s27 + $0x70] sm:$0xff]
    %v2748 = vld [vmem:[%s27 + $0x78] sm:$0xff]
    %v2749 = vld [vmem:[%s27 + $0x80] sm:$0xff]
    %v2750 = vld [vmem:[%s27 + $0x88] sm:$0xff]
    %v2751 = vld [vmem:[%s27 + $0x90] sm:$0xff]
    %v2752 = vld [vmem:[%s27 + $0x98] sm:$0xff]
    %v2753 = vld [vmem:[%s27 + $0xa0] sm:$0xff]
    %v2754 = vld [vmem:[%s27 + $0xa8] sm:$0xff]
    %v2755 = vld [vmem:[%s27 + $0xb0] sm:$0xff]
    %v2756 = vld [vmem:[%s27 + $0xb8] sm:$0xff]
    %v2757 = vld [vmem:[%s27 + $0xc0] sm:$0xff]
    %v2758 = vld [vmem:[%s27 + $0xc8] sm:$0xff]
    %v2759 = vld [vmem:[%s27 + $0xd0] sm:$0xff]
    %v2760 = vld [vmem:[%s27 + $0xd8] sm:$0xff]
    %v2761 = vld [vmem:[%s27 + $0xe0] sm:$0xff]
    %v2762 = vld [vmem:[%s27 + $0xe8] sm:$0xff]
    %v2763 = vld [vmem:[%s27 + $0xf0] sm:$0xff]
    %v2764 = vld [vmem:[%s27 + $0xf8] sm:$0xff]
    %v2765 = vld [vmem:[%s27 + $0x100] sm:$0xff]
    %v2766 = vld [vmem:[%s27 + $0x108] sm:$0xff]
    %v2767 = vld [vmem:[%s27 + $0x110] sm:$0xff]
    %v2768 = vld [vmem:[%s27 + $0x118] sm:$0xff]
    %v2769 = vld [vmem:[%s27 + $0x120] sm:$0xff]
    %v2770 = vld [vmem:[%s27 + $0x128] sm:$0xff]
    %v2771 = vld [vmem:[%s27 + $0x130] sm:$0xff]
    %v2772 = vld [vmem:[%s27 + $0x138] sm:$0xff]
    %v2773 = vld [vmem:[%s27 + $0x140] sm:$0xff]
    %v2774 = vld [vmem:[%s27 + $0x148] sm:$0xff]
    %v2775 = vld [vmem:[%s27 + $0x150] sm:$0xff]
    %v2776 = vld [vmem:[%s27 + $0x158] sm:$0xff]
    %v2777 = vld [vmem:[%s27 + $0x160] sm:$0xff]
    %v2778 = vld [vmem:[%s27 + $0x168] sm:$0xff]
    %v2779 = vld [vmem:[%s27 + $0x170] sm:$0xff]
    %v2780 = vld [vmem:[%s27 + $0x178] sm:$0xff]
    %v2781 = vld [vmem:[%s27 + $0x180] sm:$0xff]
    %v2782 = vld [vmem:[%s27 + $0x188] sm:$0xff]
    %v2783 = vld [vmem:[%s27 + $0x190] sm:$0xff]
    %v2784 = vld [vmem:[%s27 + $0x198] sm:$0xff]
    %v2785 = vld [vmem:[%s27 + $0x1a0] sm:$0xff]
    %v2786 = vld [vmem:[%s27 + $0x1a8] sm:$0xff]
    %v2787 = vld [vmem:[%s27 + $0x1b0] sm:$0xff]
    %v2788 = vld [vmem:[%s27 + $0x1b8] sm:$0xff]
    %v2789 = vld [vmem:[%s27 + $0x1c0] sm:$0xff]
    %v2790 = vld [vmem:[%s27 + $0x1c8] sm:$0xff]
    %v2791 = vld [vmem:[%s27 + $0x1d0] sm:$0xff]
    %v2792 = vld [vmem:[%s27 + $0x1d8] sm:$0xff]
    %v2793 = vld [vmem:[%s27 + $0x1e0] sm:$0xff]
    %v2794 = vld [vmem:[%s27 + $0x1e8] sm:$0xff]
    %v2795 = vld [vmem:[%s27 + $0x1f0] sm:$0xff]
    %v2796 = vld [vmem:[%s27 + $0x1f8] sm:$0xff]
    %v2797 = vld [vmem:[%s27 + $0x200] sm:$0xff]
    %v2798 = vld [vmem:[%s27 + $0x208] sm:$0xff]
    %v2799 = vld [vmem:[%s27 + $0x210] sm:$0xff]
    %v2800 = vld [vmem:[%s27 + $0x218] sm:$0xff]
    %v2801 = vld [vmem:[%s27 + $0x220] sm:$0xff]
    %v2802 = vld [vmem:[%s27 + $0x228] sm:$0xff]
    %v2803 = vld [vmem:[%s27 + $0x230] sm:$0xff]
    %v2804 = vld [vmem:[%s27 + $0x238] sm:$0xff]
    %v2805 = vld [vmem:[%s27 + $0x240] sm:$0xff]
    %v2806 = vld [vmem:[%s27 + $0x248] sm:$0xff]
    %v2807 = vld [vmem:[%s27 + $0x250] sm:$0xff]
    %v2808 = vld [vmem:[%s27 + $0x258] sm:$0xff]
    %v2809 = vld [vmem:[%s27 + $0x260] sm:$0xff]
    %v2810 = vld [vmem:[%s27 + $0x268] sm:$0xff]
    %v2811 = vld [vmem:[%s27 + $0x270] sm:$0xff]
    %v2812 = vld [vmem:[%s27 + $0x278] sm:$0xff]
    %v2813 = vld [vmem:[%s27 + $0x280] sm:$0xff]
    %v2814 = vld [vmem:[%s27 + $0x288] sm:$0xff]
    %v2815 = vld [vmem:[%s27 + $0x290] sm:$0xff]
    %v2816 = vld [vmem:[%s27 + $0x298] sm:$0xff]
    %v2817 = vsel %vm1486, %v2662, 0
    %v2820 = vsel %vm1486, %v2732, 0
    %v2822 = vsel %vm1486, %v2724, 0
    %2824 = vmatpush.msra.mxu0 %v2763
    %2825 = vmatpush.msra.mxu0 %v2761
    %2826 = vmatpush.msra.mxu0 %v2759
    %2827 = vmatpush.msra.mxu0 %v2757
    %2828 = vmatpush.msra.mxu0 %v2755
    %2829 = vmatpush.msra.mxu0 %v2753
    %2830 = vmatpush.msra.mxu0 %v2751
    %2831 = vmatpush.msra.mxu0 %v2749
    %2832 = vmatpush.msra.mxu0 %v2747
    %2833 = vmatpush.msra.mxu0 %v2745
    %2834 = vmatpush.msra.mxu0 %v2743
    %2835 = vmatpush.msra.mxu0 %v2741
    %2836 = vmatpush.msra.mxu0 %v2739
    %2837 = vmatpush.msra.mxu0 %v2737
    %2838 = vmatpush.msra.mxu0 %v2735
    %2839 = vmatpush.msra.mxu0 %v2733
    %2840 = vmatmul.f32.gmra.mxu0 %v2667
    %v2841 = vpop.f32.mrf.mxu0
    %v2842 = vadd.f32 0.0, %v2841
    %2843 = vmatmul.f32.gmra.mxu0 %v2730
    %v2844 = vpop.f32.mrf.mxu0
    %v2845 = vadd.f32 0.0, %v2844
    %2846 = vmatmul.f32.gmra.mxu0 %v2720
    %v2847 = vpop.f32.mrf.mxu0
    %v2848 = vadd.f32 0.0, %v2847
    %2849 = vdwg.mxu0
    %2850 = vmatpush.msra.mxu0 %v2795
    %2851 = vmatpush.msra.mxu0 %v2793
    %2852 = vmatpush.msra.mxu0 %v2791
    %2853 = vmatpush.msra.mxu0 %v2789
    %2854 = vmatpush.msra.mxu0 %v2787
    %2855 = vmatpush.msra.mxu0 %v2785
    %2856 = vmatpush.msra.mxu0 %v2783
    %2857 = vmatpush.msra.mxu0 %v2781
    %2858 = vmatpush.msra.mxu0 %v2779
    %2859 = vmatpush.msra.mxu0 %v2777
    %2860 = vmatpush.msra.mxu0 %v2775
    %2861 = vmatpush.msra.mxu0 %v2773
    %2862 = vmatpush.msra.mxu0 %v2771
    %2863 = vmatpush.msra.mxu0 %v2769
    %2864 = vmatpush.msra.mxu0 %v2767
    %2865 = vmatpush.msra.mxu0 %v2765
    %2866 = vmatmul.f32.gmra.mxu0 %v2669
    %v2867 = vpop.f32.mrf.mxu0
    %v2868 = vadd.f32 %v2842, %v2867
    %2869 = vmatmul.f32.gmra.mxu0 %v2731
    %v2870 = vpop.f32.mrf.mxu0
    %v2871 = vadd.f32 %v2845, %v2870
    %2872 = vmatmul.f32.gmra.mxu0 %v2722
    %v2873 = vpop.f32.mrf.mxu0
    %v2874 = vadd.f32 %v2848, %v2873
    %2875 = vdwg.mxu0
    %2876 = vmatpush.msra.mxu0 0.0
    %2877 = vmatpush.msra.mxu0 0.0
    %2878 = vmatpush.msra.mxu0 0.0
    %2879 = vmatpush.msra.mxu0 0.0
    %2880 = vmatpush.msra.mxu0 0.0
    %2881 = vmatpush.msra.mxu0 0.0
    %2882 = vmatpush.msra.mxu0 %v2815
    %2883 = vmatpush.msra.mxu0 %v2813
    %2884 = vmatpush.msra.mxu0 %v2811
    %2885 = vmatpush.msra.mxu0 %v2809
    %2886 = vmatpush.msra.mxu0 %v2807
    %2887 = vmatpush.msra.mxu0 %v2805
    %2888 = vmatpush.msra.mxu0 %v2803
    %2889 = vmatpush.msra.mxu0 %v2801
    %2890 = vmatpush.msra.mxu0 %v2799
    %2891 = vmatpush.msra.mxu0 %v2797
    %2892 = vmatmul.f32.gmra.mxu0 %v2817
    %v2893 = vpop.f32.mrf.mxu0
    %v2894 = vadd.f32 %v2868, %v2893
    %2895 = vmatmul.f32.gmra.mxu0 %v2820
    %v2896 = vpop.f32.mrf.mxu0
    %v2897 = vadd.f32 %v2871, %v2896
    %2898 = vmatmul.f32.gmra.mxu0 %v2822
    %v2899 = vpop.f32.mrf.mxu0
    %v2900 = vadd.f32 %v2874, %v2899
    %2901 = vdwg.mxu0
    %2902 = vmatpush.msra.mxu0 %v2764
    %2903 = vmatpush.msra.mxu0 %v2762
    %2904 = vmatpush.msra.mxu0 %v2760
    %2905 = vmatpush.msra.mxu0 %v2758
    %2906 = vmatpush.msra.mxu0 %v2756
    %2907 = vmatpush.msra.mxu0 %v2754
    %2908 = vmatpush.msra.mxu0 %v2752
    %2909 = vmatpush.msra.mxu0 %v2750
    %2910 = vmatpush.msra.mxu0 %v2748
    %2911 = vmatpush.msra.mxu0 %v2746
    %2912 = vmatpush.msra.mxu0 %v2744
    %2913 = vmatpush.msra.mxu0 %v2742
    %2914 = vmatpush.msra.mxu0 %v2740
    %2915 = vmatpush.msra.mxu0 %v2738
    %2916 = vmatpush.msra.mxu0 %v2736
    %2917 = vmatpush.msra.mxu0 %v2734
    %2918 = vmatmul.f32.gmra.mxu0 %v2667
    %v2919 = vpop.f32.mrf.mxu0
    %v2920 = vadd.f32 0.0, %v2919
    %2921 = vmatmul.f32.gmra.mxu0 %v2730
    %v2922 = vpop.f32.mrf.mxu0
    %v2923 = vadd.f32 0.0, %v2922
    %2924 = vmatmul.f32.gmra.mxu0 %v2720
    %v2925 = vpop.f32.mrf.mxu0
    %v2926 = vadd.f32 0.0, %v2925
    %2927 = vdwg.mxu0
    %2928 = vmatpush.msra.mxu0 %v2796
    %2929 = vmatpush.msra.mxu0 %v2794
    %2930 = vmatpush.msra.mxu0 %v2792
    %2931 = vmatpush.msra.mxu0 %v2790
    %2932 = vmatpush.msra.mxu0 %v2788
    %2933 = vmatpush.msra.mxu0 %v2786
    %2934 = vmatpush.msra.mxu0 %v2784
    %2935 = vmatpush.msra.mxu0 %v2782
    %2936 = vmatpush.msra.mxu0 %v2780
    %2937 = vmatpush.msra.mxu0 %v2778
    %2938 = vmatpush.msra.mxu0 %v2776
    %2939 = vmatpush.msra.mxu0 %v2774
    %2940 = vmatpush.msra.mxu0 %v2772
    %2941 = vmatpush.msra.mxu0 %v2770
    %2942 = vmatpush.msra.mxu0 %v2768
    %2943 = vmatpush.msra.mxu0 %v2766
    %2944 = vmatmul.f32.gmra.mxu0 %v2669
    %v2945 = vpop.f32.mrf.mxu0
    %v2946 = vadd.f32 %v2920, %v2945
    %2947 = vmatmul.f32.gmra.mxu0 %v2731
    %v2948 = vpop.f32.mrf.mxu0
    %v2949 = vadd.f32 %v2923, %v2948
    %2950 = vmatmul.f32.gmra.mxu0 %v2722
    %v2951 = vpop.f32.mrf.mxu0
    %v2952 = vadd.f32 %v2926, %v2951
    %2953 = vdwg.mxu0
    %2954 = vmatpush.msra.mxu0 0.0
    %2955 = vmatpush.msra.mxu0 0.0
    %2956 = vmatpush.msra.mxu0 0.0
    %2957 = vmatpush.msra.mxu0 0.0
    %2958 = vmatpush.msra.mxu0 0.0
    %2959 = vmatpush.msra.mxu0 0.0
    %2960 = vmatpush.msra.mxu0 %v2816
    %2961 = vmatpush.msra.mxu0 %v2814
    %2962 = vmatpush.msra.mxu0 %v2812
    %2963 = vmatpush.msra.mxu0 %v2810
    %2964 = vmatpush.msra.mxu0 %v2808
    %2965 = vmatpush.msra.mxu0 %v2806
    %2966 = vmatpush.msra.mxu0 %v2804
    %2967 = vmatpush.msra.mxu0 %v2802
    %2968 = vmatpush.msra.mxu0 %v2800
    %2969 = vmatpush.msra.mxu0 %v2798
    %2970 = vmatmul.f32.gmra.mxu0 %v2817
    %v2971 = vpop.f32.mrf.mxu0
    %v2972 = vadd.f32 %v2946, %v2971
    %2973 = vmatmul.f32.gmra.mxu0 %v2820
    %v2974 = vpop.f32.mrf.mxu0
    %v2975 = vadd.f32 %v2949, %v2974
    %2976 = vmatmul.f32.gmra.mxu0 %v2822
    %v2977 = vpop.f32.mrf.mxu0
    %v2978 = vadd.f32 %v2952, %v2977
    %2979 = vdwg.mxu0
    %v2980 = vadd.f32 %v2894, %v2897
    %v2981 = vadd.f32 %v2980, %v2900
    %v2982 = vrot.slane %v2981, 4
    %v2983 = vadd.f32 %v2981, %v2982
    %v2984 = vrot.slane %v2983, 2
    %v2985 = vadd.f32 %v2983, %v2984
    %v2986 = vrot.slane %v2985, 1
    %v2987 = vadd.f32 %v2985, %v2986
    %v2988 = vsel %vm196, %v2972, 0.0
    %v2989 = vsel %vm196, %v2975, 0.0
    %v2990 = vadd.f32 %v2988, %v2989
    %v2991 = vsel %vm196, %v2978, 0.0
    %v2992 = vadd.f32 %v2990, %v2991
    %v2993 = vrot.slane %v2992, 4
    %v2994 = vadd.f32 %v2992, %v2993
    %v2995 = vrot.slane %v2994, 2
    %v2996 = vadd.f32 %v2994, %v2995
    %v2997 = vrot.slane %v2996, 1
    %v2998 = vadd.f32 %v2996, %v2997
    %v2999 = vmul.f32 %v2894, %v2894
    %v3000 = vmul.f32 %v2972, %v2972
    %v3001 = vmul.f32 %v2897, %v2897
    %v3002 = vmul.f32 %v2975, %v2975
    %v3003 = vmul.f32 %v2900, %v2900
    %v3004 = vmul.f32 %v2978, %v2978
    %v3005 = vadd.f32 %v2999, %v3001
    %v3006 = vadd.f32 %v3005, %v3003
    %v3007 = vrot.slane %v3006, 4
    %v3008 = vadd.f32 %v3006, %v3007
    %v3009 = vrot.slane %v3008, 2
    %v3010 = vadd.f32 %v3008, %v3009
    %v3011 = vrot.slane %v3010, 1
    %v3012 = vadd.f32 %v3010, %v3011
    %v3013 = vsel %vm196, %v3000, 0.0
    %v3014 = vsel %vm196, %v3002, 0.0
    %v3015 = vadd.f32 %v3013, %v3014
    %v3016 = vsel %vm196, %v3004, 0.0
    %v3017 = vadd.f32 %v3015, %v3016
    %v3018 = vrot.slane %v3017, 4
    %v3019 = vadd.f32 %v3017, %v3018
    %v3020 = vrot.slane %v3019, 2
    %v3021 = vadd.f32 %v3019, %v3020
    %v3022 = vrot.slane %v3021, 1
    %v3023 = vadd.f32 %v3021, %v3022
    %v3024 = vsel %vm719, %v2987, %v3012
    %v3025 = vsel %vm719, %v2998, %v3023
    %v3026 = vld [vmem:[%s33] sm:$0xff]
    %v3027 = vld [vmem:[%s33 + $0x8] sm:$0xff]
    %v3028 = vld [vmem:[%s33 + $0x10] sm:$0xff]
    %v3029 = vld [vmem:[%s33 + $0x18] sm:$0xff]
    %v3030 = vld [vmem:[%s33 + $0x20] sm:$0xff]
    %v3031 = vld [vmem:[%s33 + $0x28] sm:$0xff]
    %v3032 = vld [vmem:[%s33 + $0x30] sm:$0xff]
    %v3033 = vld [vmem:[%s33 + $0x38] sm:$0xff]
    %v3034 = vld [vmem:[%s33 + $0x40] sm:$0xff]
    %v3035 = vld [vmem:[%s33 + $0x48] sm:$0xff]
    %v3036 = vld [vmem:[%s33 + $0x50] sm:$0xff]
    %v3037 = vld [vmem:[%s33 + $0x58] sm:$0xff]
    %v3038 = vld [vmem:[%s33 + $0x60] sm:$0xff]
    %v3039 = vld [vmem:[%s33 + $0x68] sm:$0xff]
    %v3040 = vld [vmem:[%s33 + $0x70] sm:$0xff]
    %v3041 = vld [vmem:[%s33 + $0x78] sm:$0xff]
    %v3042 = vld [vmem:[%s33 + $0x80] sm:$0xff]
    %v3043 = vld [vmem:[%s33 + $0x88] sm:$0xff]
    %v3044 = vld [vmem:[%s33 + $0x90] sm:$0xff]
    %v3045 = vld [vmem:[%s33 + $0x98] sm:$0xff]
    %v3046 = vld [vmem:[%s33 + $0xa0] sm:$0xff]
    %v3047 = vld [vmem:[%s33 + $0xa8] sm:$0xff]
    %v3048 = vld [vmem:[%s33 + $0xb0] sm:$0xff]
    %v3049 = vld [vmem:[%s33 + $0xb8] sm:$0xff]
    %v3051 = vsel %vm196, %v3025, 0
    %3053 = vmatpush.msra.mxu0 %v3041
    %3054 = vmatpush.msra.mxu0 %v3040
    %3055 = vmatpush.msra.mxu0 %v3039
    %3056 = vmatpush.msra.mxu0 %v3038
    %3057 = vmatpush.msra.mxu0 %v3037
    %3058 = vmatpush.msra.mxu0 %v3036
    %3059 = vmatpush.msra.mxu0 %v3035
    %3060 = vmatpush.msra.mxu0 %v3034
    %3061 = vmatpush.msra.mxu0 %v3033
    %3062 = vmatpush.msra.mxu0 %v3032
    %3063 = vmatpush.msra.mxu0 %v3031
    %3064 = vmatpush.msra.mxu0 %v3030
    %3065 = vmatpush.msra.mxu0 %v3029
    %3066 = vmatpush.msra.mxu0 %v3028
    %3067 = vmatpush.msra.mxu0 %v3027
    %3068 = vmatpush.msra.mxu0 %v3026
    %3069 = vmatmul.f32.gmra.mxu0 %v3024
    %v3070 = vpop.f32.mrf.mxu0
    %v3071 = vadd.f32 0.0, %v3070
    %3072 = vdwg.mxu0
    %3073 = vmatpush.msra.mxu0 0.0
    %3074 = vmatpush.msra.mxu0 0.0
    %3075 = vmatpush.msra.mxu0 0.0
    %3076 = vmatpush.msra.mxu0 0.0
    %3077 = vmatpush.msra.mxu0 0.0
    %3078 = vmatpush.msra.mxu0 0.0
    %3079 = vmatpush.msra.mxu0 0.0
    %3080 = vmatpush.msra.mxu0 0.0
    %3081 = vmatpush.msra.mxu0 %v3049
    %3082 = vmatpush.msra.mxu0 %v3048
    %3083 = vmatpush.msra.mxu0 %v3047
    %3084 = vmatpush.msra.mxu0 %v3046
    %3085 = vmatpush.msra.mxu0 %v3045
    %3086 = vmatpush.msra.mxu0 %v3044
    %3087 = vmatpush.msra.mxu0 %v3043
    %3088 = vmatpush.msra.mxu0 %v3042
    %3089 = vmatmul.f32.gmra.mxu0 %v3051
    %v3090 = vpop.f32.mrf.mxu0
    %v3091 = vadd.f32 %v3071, %v3090
    %3092 = vdwg.mxu0
    %v3093 = vmul.f32 %v3091, 0.0034722222
    %v3094 = vmul.f32 %v3093, %v3093
    %v3096 = vrot.slane %v3094, 7
    %v3098 = vsub.f32 %v3093, %v3096
    %v3099 = vmax.f32 %v3098, 0.0
    %v3100 = vld [vmem:[%s29] sm:$0x1]
    %v3101 = vadd.f32 %v3099, 1e-05
    %v3102 = vrsqrt.pop %v3101
    %v3103 = vmul.f32 %v3102, %v3101
    %v3104 = vmul.f32 %v3103, %v3102
    %v3105 = vmul.f32 0.5, %v3104
    %v3106 = vsub.f32 1.5, %v3105
    %v3107 = vmul.f32 %v3102, %v3106
    %vm3108 = vweird.f32 %v3101
    %vm3109 = vweird.f32 %v3102
    %vm3110 = vmor %vm3108, %vm3109
    %v3111 = vsel %vm3110, %v3102, %v3107
    %3113 = vst [vmem:[#allocation1] sm:$0xff] %v3111
    %s3114 = scalar_lea.vmem [#allocation1], 1
    %v3115 = vld [vmem:[%s3114] ss:$9 sm:$0xff]
    %v3117 = vmul.f32 %v3100, %v3115
    %v3118 = vld [vmem:[%s31] sm:$0x1]
    %v3119 = vmul.f32 %v3093, %v3117
    %v3120 = vsub.f32 %v3118, %v3119
    %v3122 = vperm.slane %v3120, 0
    %v3124 = vsel %vm719, %v3117, %v3122
    %v3125 = vld [vmem:[%s35] sm:$0xff]
    %v3126 = vld [vmem:[%s35 + $0x8] sm:$0xff]
    %v3127 = vld [vmem:[%s35 + $0x10] sm:$0xff]
    %v3128 = vld [vmem:[%s35 + $0x18] sm:$0xff]
    %vm3129 = vcmask 130048
    %v3131 = vsel %vm3129, %v3124, 0
    %3133 = vmatpush.msra.mxu0 0.0
    %3134 = vmatpush.msra.mxu0 0.0
    %3135 = vmatpush.msra.mxu0 0.0
    %3136 = vmatpush.msra.mxu0 0.0
    %3137 = vmatpush.msra.mxu0 0.0
    %3138 = vmatpush.msra.mxu0 0.0
    %3139 = vmatpush.msra.mxu0 0.0
    %3140 = vmatpush.msra.mxu0 0.0
    %3141 = vmatpush.msra.mxu0 0.0
    %3142 = vmatpush.msra.mxu0 0.0
    %3143 = vmatpush.msra.mxu0 0.0
    %3144 = vmatpush.msra.mxu0 0.0
    %3145 = vmatpush.msra.mxu0 0.0
    %3146 = vmatpush.msra.mxu0 0.0
    %3147 = vmatpush.msra.mxu0 %v3127
    %3148 = vmatpush.msra.mxu0 %v3125
    %3149 = vmatmul.f32.gmra.mxu0 %v3131
    %v3150 = vpop.f32.mrf.mxu0
    %v3151 = vadd.f32 0.0, %v3150
    %3152 = vdwg.mxu0
    %3153 = vmatpush.msra.mxu0 0.0
    %3154 = vmatpush.msra.mxu0 0.0
    %3155 = vmatpush.msra.mxu0 0.0
    %3156 = vmatpush.msra.mxu0 0.0
    %3157 = vmatpush.msra.mxu0 0.0
    %3158 = vmatpush.msra.mxu0 0.0
    %3159 = vmatpush.msra.mxu0 0.0
    %3160 = vmatpush.msra.mxu0 0.0
    %3161 = vmatpush.msra.mxu0 0.0
    %3162 = vmatpush.msra.mxu0 0.0
    %3163 = vmatpush.msra.mxu0 0.0
    %3164 = vmatpush.msra.mxu0 0.0
    %3165 = vmatpush.msra.mxu0 0.0
    %3166 = vmatpush.msra.mxu0 0.0
    %3167 = vmatpush.msra.mxu0 %v3128
    %3168 = vmatpush.msra.mxu0 %v3126
    %3169 = vmatmul.f32.gmra.mxu0 %v3131
    %v3170 = vpop.f32.mrf.mxu0
    %v3171 = vadd.f32 0.0, %v3170
    %3172 = vdwg.mxu0
    %v3173 = vperm.slane %v3151, 0
    %v3174 = vperm.slane %v3171, 0
    %v3175 = vmul.f32 %v2894, %v3173
    %v3176 = vmul.f32 %v2972, %v3174
    %v3177 = vmul.f32 %v2897, %v3173
    %v3178 = vmul.f32 %v2975, %v3174
    %v3179 = vmul.f32 %v2900, %v3173
    %v3180 = vmul.f32 %v2978, %v3174
    %v3181 = vperm.slane %v3151, 1
    %v3182 = vperm.slane %v3171, 1
    %v3183 = vadd.f32 %v3175, %v3181
    %v3184 = vadd.f32 %v3176, %v3182
    %v3185 = vadd.f32 %v3177, %v3181
    %v3186 = vadd.f32 %v3178, %v3182
    %v3187 = vadd.f32 %v3179, %v3181
    %v3188 = vadd.f32 %v3180, %v3182
    %vm3189 = vcmp.gt.f32.partialorder %v3183, 0.0
    %vm3190 = vcmp.gt.f32.partialorder %v3184, 0.0
    %vm3191 = vcmp.gt.f32.partialorder %v3185, 0.0
    %vm3192 = vcmp.gt.f32.partialorder %v3186, 0.0
    %vm3193 = vcmp.gt.f32.partialorder %v3187, 0.0
    %vm3194 = vcmp.gt.f32.partialorder %v3188, 0.0
    %v3195 = vmin.f32 %v3183, 0.0
    %v3196 = vmin.f32 %v3184, 0.0
    %v3197 = vmin.f32 %v3185, 0.0
    %v3198 = vmin.f32 %v3186, 0.0
    %v3199 = vmin.f32 %v3187, 0.0
    %v3200 = vmin.f32 %v3188, 0.0
    %v3201 = vmul.f32 %v3195, 1.442695
    %v3202 = vpow.pop %v3201
    %v3203 = vmul.f32 %v3196, 1.442695
    %v3204 = vpow.pop %v3203
    %v3205 = vmul.f32 %v3197, 1.442695
    %v3206 = vpow.pop %v3205
    %v3207 = vmul.f32 %v3198, 1.442695
    %v3208 = vpow.pop %v3207
    %v3209 = vmul.f32 %v3199, 1.442695
    %v3210 = vpow.pop %v3209
    %v3211 = vmul.f32 %v3200, 1.442695
    %v3212 = vpow.pop %v3211
    %v3213 = vsub.f32 %v3202, 1.0
    %v3214 = vsub.f32 %v3204, 1.0
    %v3215 = vsub.f32 %v3206, 1.0
    %v3216 = vsub.f32 %v3208, 1.0
    %v3217 = vsub.f32 %v3210, 1.0
    %v3218 = vsub.f32 %v3212, 1.0
    %v3219 = vsel %vm3189, %v3183, %v3213
    %v3220 = vsel %vm3190, %v3184, %v3214
    %v3221 = vsel %vm3191, %v3185, %v3215
    %v3222 = vsel %vm3192, %v3186, %v3216
    %v3223 = vsel %vm3193, %v3187, %v3217
    %v3224 = vsel %vm3194, %v3188, %v3218
    %v3229 = vrot.slane %v3219, 1
    %v3230 = vrot.slane %v3221, 1
    %v3231 = vsel %vm151, %v3229, %v3230
    %v3232 = vrot.slane %v3220, 1
    %v3233 = vrot.slane %v3222, 1
    %v3234 = vsel %vm151, %v3232, %v3233
    %3235 = vrot.lane.b32.xlu0 %v3231, 64
    %v3236 = vpop.permute.xlu0 %3235
    %3237 = vrot.lane.b32.xlu0 %v3234, 64
    %v3238 = vpop.permute.xlu0 %3237
    %3239 = vrot.lane.b32.xlu0 %v3230, 64
    %v3240 = vpop.permute.xlu0 %3239
    %3241 = vrot.lane.b32.xlu0 %v3233, 64
    %v3242 = vpop.permute.xlu0 %3241
    %v3243 = vsel %vm196, %v3236, %v3238
    %v3244 = vsel %vm196, %v3240, %v3242
    %v3249 = vrot.slane %v3219, 2
    %v3250 = vrot.slane %v3221, 2
    %v3251 = vsel %vm171, %v3249, %v3250
    %v3252 = vrot.slane %v3220, 2
    %v3253 = vrot.slane %v3222, 2
    %v3254 = vsel %vm171, %v3252, %v3253
    %v3258 = vsel %vm196, %v3220, %v3236
    %v3259 = vsel %vm196, %v3222, %v3240
    %v3262 = vrot.slane %v3223, 1
    %v3263 = vsel %vm151, %v3230, %v3262
    %v3264 = vrot.slane %v3224, 1
    %v3265 = vsel %vm151, %v3233, %v3264
    %3266 = vrot.lane.b32.xlu0 %v3263, 64
    %v3267 = vpop.permute.xlu0 %3266
    %3268 = vrot.lane.b32.xlu0 %v3265, 64
    %v3269 = vpop.permute.xlu0 %3268
    %3270 = vrot.lane.b32.xlu0 %v3262, 64
    %v3271 = vpop.permute.xlu0 %3270
    %3272 = vrot.lane.b32.xlu0 %v3264, 64
    %v3273 = vpop.permute.xlu0 %3272
    %v3274 = vsel %vm196, %v3267, %v3269
    %v3275 = vsel %vm196, %v3271, %v3273
    %v3278 = vrot.slane %v3223, 2
    %v3279 = vsel %vm171, %v3250, %v3278
    %v3280 = vrot.slane %v3224, 2
    %v3281 = vsel %vm171, %v3253, %v3280
    %v3282 = vsel %vm196, %v3222, %v3267
    %v3283 = vsel %vm196, %v3224, %v3271
    %v3286 = vrot.slane %v3282, 2
    %v3287 = vrot.slane %v3283, 2
    %v3288 = vsel %vm171, %v3286, %v3287
    %v3289 = vrot.slane %v3274, 2
    %v3290 = vrot.slane %v3275, 2
    %v3291 = vsel %vm171, %v3289, %v3290
    %v3292 = vrot.slane %v3279, 2
    %v3293 = vrot.slane %v3278, 2
    %v3294 = vsel %vm171, %v3292, %v3293
    %v3295 = vrot.slane %v3281, 2
    %v3296 = vrot.slane %v3280, 2
    %v3297 = vsel %vm171, %v3295, %v3296
    %vm3307 = vcmask 1041408
    %v3308 = vsel %vm3307, %v3221, %v3279
    %v3309 = vsel %vm3307, %v3259, %v3288
    %v3310 = vsel %vm3307, %v3244, %v3291
    %v3311 = vsel %vm3307, %v3250, %v3294
    %v3312 = vsel %vm3307, %v3253, %v3297
    %v3313 = vld [vmem:[%s37] sm:$0xff]
    %v3314 = vld [vmem:[%s37 + $0x8] sm:$0xff]
    %v3315 = vld [vmem:[%s37 + $0x10] sm:$0xff]
    %v3316 = vld [vmem:[%s37 + $0x18] sm:$0xff]
    %v3317 = vld [vmem:[%s37 + $0x20] sm:$0xff]
    %v3318 = vld [vmem:[%s37 + $0x28] sm:$0xff]
    %v3319 = vld [vmem:[%s37 + $0x30] sm:$0xff]
    %v3320 = vld [vmem:[%s37 + $0x38] sm:$0xff]
    %v3321 = vld [vmem:[%s37 + $0x40] sm:$0xff]
    %v3322 = vld [vmem:[%s37 + $0x48] sm:$0xff]
    %v3323 = vld [vmem:[%s37 + $0x50] sm:$0xff]
    %v3324 = vld [vmem:[%s37 + $0x58] sm:$0xff]
    %v3325 = vld [vmem:[%s37 + $0x60] sm:$0xff]
    %v3326 = vld [vmem:[%s37 + $0x68] sm:$0xff]
    %v3327 = vld [vmem:[%s37 + $0x70] sm:$0xff]
    %v3328 = vld [vmem:[%s37 + $0x78] sm:$0xff]
    %v3329 = vld [vmem:[%s37 + $0x80] sm:$0xff]
    %v3330 = vld [vmem:[%s37 + $0x88] sm:$0xff]
    %v3331 = vld [vmem:[%s37 + $0x90] sm:$0xff]
    %v3332 = vld [vmem:[%s37 + $0x98] sm:$0xff]
    %v3333 = vld [vmem:[%s37 + $0xa0] sm:$0xff]
    %v3334 = vld [vmem:[%s37 + $0xa8] sm:$0xff]
    %v3335 = vld [vmem:[%s37 + $0xb0] sm:$0xff]
    %v3336 = vld [vmem:[%s37 + $0xb8] sm:$0xff]
    %v3337 = vld [vmem:[%s37 + $0xc0] sm:$0xff]
    %v3338 = vld [vmem:[%s37 + $0xc8] sm:$0xff]
    %v3339 = vld [vmem:[%s37 + $0xd0] sm:$0xff]
    %v3340 = vld [vmem:[%s37 + $0xd8] sm:$0xff]
    %v3341 = vld [vmem:[%s37 + $0xe0] sm:$0xff]
    %v3342 = vld [vmem:[%s37 + $0xe8] sm:$0xff]
    %v3343 = vld [vmem:[%s37 + $0xf0] sm:$0xff]
    %v3344 = vld [vmem:[%s37 + $0xf8] sm:$0xff]
    %v3345 = vld [vmem:[%s37 + $0x100] sm:$0xff]
    %v3346 = vld [vmem:[%s37 + $0x108] sm:$0xff]
    %v3347 = vld [vmem:[%s37 + $0x110] sm:$0xff]
    %v3348 = vld [vmem:[%s37 + $0x118] sm:$0xff]
    %v3349 = vld [vmem:[%s37 + $0x120] sm:$0xff]
    %v3350 = vld [vmem:[%s37 + $0x128] sm:$0xff]
    %v3351 = vld [vmem:[%s37 + $0x130] sm:$0xff]
    %v3352 = vld [vmem:[%s37 + $0x138] sm:$0xff]
    %v3353 = vld [vmem:[%s37 + $0x140] sm:$0xff]
    %v3354 = vld [vmem:[%s37 + $0x148] sm:$0xff]
    %v3355 = vld [vmem:[%s37 + $0x150] sm:$0xff]
    %v3356 = vld [vmem:[%s37 + $0x158] sm:$0xff]
    %v3357 = vld [vmem:[%s37 + $0x160] sm:$0xff]
    %v3358 = vld [vmem:[%s37 + $0x168] sm:$0xff]
    %v3359 = vld [vmem:[%s37 + $0x170] sm:$0xff]
    %v3360 = vld [vmem:[%s37 + $0x178] sm:$0xff]
    %v3361 = vld [vmem:[%s37 + $0x180] sm:$0xff]
    %v3362 = vld [vmem:[%s37 + $0x188] sm:$0xff]
    %v3363 = vld [vmem:[%s37 + $0x190] sm:$0xff]
    %v3364 = vld [vmem:[%s37 + $0x198] sm:$0xff]
    %v3365 = vld [vmem:[%s37 + $0x1a0] sm:$0xff]
    %v3366 = vld [vmem:[%s37 + $0x1a8] sm:$0xff]
    %v3367 = vld [vmem:[%s37 + $0x1b0] sm:$0xff]
    %v3368 = vld [vmem:[%s37 + $0x1b8] sm:$0xff]
    %v3369 = vld [vmem:[%s37 + $0x1c0] sm:$0xff]
    %v3370 = vld [vmem:[%s37 + $0x1c8] sm:$0xff]
    %v3371 = vld [vmem:[%s37 + $0x1d0] sm:$0xff]
    %v3372 = vld [vmem:[%s37 + $0x1d8] sm:$0xff]
    %v3373 = vld [vmem:[%s37 + $0x1e0] sm:$0xff]
    %v3374 = vld [vmem:[%s37 + $0x1e8] sm:$0xff]
    %v3375 = vld [vmem:[%s37 + $0x1f0] sm:$0xff]
    %v3376 = vld [vmem:[%s37 + $0x1f8] sm:$0xff]
    %v3377 = vld [vmem:[%s37 + $0x200] sm:$0xff]
    %v3378 = vld [vmem:[%s37 + $0x208] sm:$0xff]
    %v3379 = vld [vmem:[%s37 + $0x210] sm:$0xff]
    %v3380 = vld [vmem:[%s37 + $0x218] sm:$0xff]
    %v3381 = vld [vmem:[%s37 + $0x220] sm:$0xff]
    %v3382 = vld [vmem:[%s37 + $0x228] sm:$0xff]
    %v3383 = vld [vmem:[%s37 + $0x230] sm:$0xff]
    %v3384 = vld [vmem:[%s37 + $0x238] sm:$0xff]
    %v3385 = vld [vmem:[%s37 + $0x240] sm:$0xff]
    %v3386 = vld [vmem:[%s37 + $0x248] sm:$0xff]
    %v3387 = vld [vmem:[%s37 + $0x250] sm:$0xff]
    %v3388 = vld [vmem:[%s37 + $0x258] sm:$0xff]
    %v3389 = vld [vmem:[%s37 + $0x260] sm:$0xff]
    %v3390 = vld [vmem:[%s37 + $0x268] sm:$0xff]
    %v3391 = vld [vmem:[%s37 + $0x270] sm:$0xff]
    %v3392 = vld [vmem:[%s37 + $0x278] sm:$0xff]
    %v3393 = vld [vmem:[%s37 + $0x280] sm:$0xff]
    %v3394 = vld [vmem:[%s37 + $0x288] sm:$0xff]
    %v3395 = vld [vmem:[%s37 + $0x290] sm:$0xff]
    %v3396 = vld [vmem:[%s37 + $0x298] sm:$0xff]
    %v3397 = vld [vmem:[%s37 + $0x2a0] sm:$0xff]
    %v3398 = vld [vmem:[%s37 + $0x2a8] sm:$0xff]
    %v3399 = vld [vmem:[%s37 + $0x2b0] sm:$0xff]
    %v3400 = vld [vmem:[%s37 + $0x2b8] sm:$0xff]
    %v3401 = vld [vmem:[%s37 + $0x2c0] sm:$0xff]
    %v3402 = vld [vmem:[%s37 + $0x2c8] sm:$0xff]
    %v3403 = vld [vmem:[%s37 + $0x2d0] sm:$0xff]
    %v3404 = vld [vmem:[%s37 + $0x2d8] sm:$0xff]
    %v3405 = vld [vmem:[%s37 + $0x2e0] sm:$0xff]
    %v3406 = vld [vmem:[%s37 + $0x2e8] sm:$0xff]
    %v3407 = vld [vmem:[%s37 + $0x2f0] sm:$0xff]
    %v3408 = vld [vmem:[%s37 + $0x2f8] sm:$0xff]
    %v3409 = vld [vmem:[%s37 + $0x300] sm:$0xff]
    %v3410 = vld [vmem:[%s37 + $0x308] sm:$0xff]
    %v3411 = vld [vmem:[%s37 + $0x310] sm:$0xff]
    %v3412 = vld [vmem:[%s37 + $0x318] sm:$0xff]
    %v3413 = vld [vmem:[%s37 + $0x320] sm:$0xff]
    %v3414 = vld [vmem:[%s37 + $0x328] sm:$0xff]
    %v3415 = vld [vmem:[%s37 + $0x330] sm:$0xff]
    %v3416 = vld [vmem:[%s37 + $0x338] sm:$0xff]
    %v3417 = vld [vmem:[%s37 + $0x340] sm:$0xff]
    %v3418 = vld [vmem:[%s37 + $0x348] sm:$0xff]
    %v3419 = vld [vmem:[%s37 + $0x350] sm:$0xff]
    %v3420 = vld [vmem:[%s37 + $0x358] sm:$0xff]
    %v3421 = vld [vmem:[%s37 + $0x360] sm:$0xff]
    %v3422 = vld [vmem:[%s37 + $0x368] sm:$0xff]
    %v3423 = vld [vmem:[%s37 + $0x370] sm:$0xff]
    %v3424 = vld [vmem:[%s37 + $0x378] sm:$0xff]
    %v3425 = vld [vmem:[%s37 + $0x380] sm:$0xff]
    %v3426 = vld [vmem:[%s37 + $0x388] sm:$0xff]
    %v3427 = vld [vmem:[%s37 + $0x390] sm:$0xff]
    %v3428 = vld [vmem:[%s37 + $0x398] sm:$0xff]
    %v3429 = vld [vmem:[%s37 + $0x3a0] sm:$0xff]
    %v3430 = vld [vmem:[%s37 + $0x3a8] sm:$0xff]
    %v3431 = vld [vmem:[%s37 + $0x3b0] sm:$0xff]
    %v3432 = vld [vmem:[%s37 + $0x3b8] sm:$0xff]
    %v3433 = vld [vmem:[%s37 + $0x3c0] sm:$0xff]
    %v3434 = vld [vmem:[%s37 + $0x3c8] sm:$0xff]
    %v3435 = vld [vmem:[%s37 + $0x3d0] sm:$0xff]
    %v3436 = vld [vmem:[%s37 + $0x3d8] sm:$0xff]
    %v3437 = vld [vmem:[%s37 + $0x3e0] sm:$0xff]
    %v3438 = vld [vmem:[%s37 + $0x3e8] sm:$0xff]
    %v3439 = vld [vmem:[%s37 + $0x3f0] sm:$0xff]
    %v3440 = vld [vmem:[%s37 + $0x3f8] sm:$0xff]
    %v3441 = vld [vmem:[%s37 + $0x400] sm:$0xff]
    %v3442 = vld [vmem:[%s37 + $0x408] sm:$0xff]
    %v3443 = vld [vmem:[%s37 + $0x410] sm:$0xff]
    %v3444 = vld [vmem:[%s37 + $0x418] sm:$0xff]
    %v3445 = vld [vmem:[%s37 + $0x420] sm:$0xff]
    %v3446 = vld [vmem:[%s37 + $0x428] sm:$0xff]
    %v3447 = vld [vmem:[%s37 + $0x430] sm:$0xff]
    %v3448 = vld [vmem:[%s37 + $0x438] sm:$0xff]
    %v3449 = vld [vmem:[%s37 + $0x440] sm:$0xff]
    %v3450 = vld [vmem:[%s37 + $0x448] sm:$0xff]
    %v3451 = vld [vmem:[%s37 + $0x450] sm:$0xff]
    %v3452 = vld [vmem:[%s37 + $0x458] sm:$0xff]
    %v3453 = vld [vmem:[%s37 + $0x460] sm:$0xff]
    %v3454 = vld [vmem:[%s37 + $0x468] sm:$0xff]
    %v3455 = vld [vmem:[%s37 + $0x470] sm:$0xff]
    %v3456 = vld [vmem:[%s37 + $0x478] sm:$0xff]
    %v3457 = vsel %vm196, %v3254, 0
    %v3460 = vsel %vm196, %v3312, 0
    %v3462 = vsel %vm196, %v3296, 0
    %3464 = vmatpush.msra.mxu0 %v3343
    %3465 = vmatpush.msra.mxu0 %v3341
    %3466 = vmatpush.msra.mxu0 %v3339
    %3467 = vmatpush.msra.mxu0 %v3337
    %3468 = vmatpush.msra.mxu0 %v3335
    %3469 = vmatpush.msra.mxu0 %v3333
    %3470 = vmatpush.msra.mxu0 %v3331
    %3471 = vmatpush.msra.mxu0 %v3329
    %3472 = vmatpush.msra.mxu0 %v3327
    %3473 = vmatpush.msra.mxu0 %v3325
    %3474 = vmatpush.msra.mxu0 %v3323
    %3475 = vmatpush.msra.mxu0 %v3321
    %3476 = vmatpush.msra.mxu0 %v3319
    %3477 = vmatpush.msra.mxu0 %v3317
    %3478 = vmatpush.msra.mxu0 %v3315
    %3479 = vmatpush.msra.mxu0 %v3313
    %3480 = vmatmul.f32.gmra.mxu0 %v3219
    %v3481 = vpop.f32.mrf.mxu0
    %v3482 = vadd.f32 0.0, %v3481
    %3483 = vmatmul.f32.gmra.mxu0 %v3308
    %v3484 = vpop.f32.mrf.mxu0
    %v3485 = vadd.f32 0.0, %v3484
    %3486 = vmatmul.f32.gmra.mxu0 %v3278
    %v3487 = vpop.f32.mrf.mxu0
    %v3488 = vadd.f32 0.0, %v3487
    %3489 = vdwg.mxu0
    %3490 = vmatpush.msra.mxu0 %v3375
    %3491 = vmatpush.msra.mxu0 %v3373
    %3492 = vmatpush.msra.mxu0 %v3371
    %3493 = vmatpush.msra.mxu0 %v3369
    %3494 = vmatpush.msra.mxu0 %v3367
    %3495 = vmatpush.msra.mxu0 %v3365
    %3496 = vmatpush.msra.mxu0 %v3363
    %3497 = vmatpush.msra.mxu0 %v3361
    %3498 = vmatpush.msra.mxu0 %v3359
    %3499 = vmatpush.msra.mxu0 %v3357
    %3500 = vmatpush.msra.mxu0 %v3355
    %3501 = vmatpush.msra.mxu0 %v3353
    %3502 = vmatpush.msra.mxu0 %v3351
    %3503 = vmatpush.msra.mxu0 %v3349
    %3504 = vmatpush.msra.mxu0 %v3347
    %3505 = vmatpush.msra.mxu0 %v3345
    %3506 = vmatmul.f32.gmra.mxu0 %v3258
    %v3507 = vpop.f32.mrf.mxu0
    %v3508 = vadd.f32 %v3482, %v3507
    %3509 = vmatmul.f32.gmra.mxu0 %v3309
    %v3510 = vpop.f32.mrf.mxu0
    %v3511 = vadd.f32 %v3485, %v3510
    %3512 = vmatmul.f32.gmra.mxu0 %v3287
    %v3513 = vpop.f32.mrf.mxu0
    %v3514 = vadd.f32 %v3488, %v3513
    %3515 = vdwg.mxu0
    %3516 = vmatpush.msra.mxu0 %v3407
    %3517 = vmatpush.msra.mxu0 %v3405
    %3518 = vmatpush.msra.mxu0 %v3403
    %3519 = vmatpush.msra.mxu0 %v3401
    %3520 = vmatpush.msra.mxu0 %v3399
    %3521 = vmatpush.msra.mxu0 %v3397
    %3522 = vmatpush.msra.mxu0 %v3395
    %3523 = vmatpush.msra.mxu0 %v3393
    %3524 = vmatpush.msra.mxu0 %v3391
    %3525 = vmatpush.msra.mxu0 %v3389
    %3526 = vmatpush.msra.mxu0 %v3387
    %3527 = vmatpush.msra.mxu0 %v3385
    %3528 = vmatpush.msra.mxu0 %v3383
    %3529 = vmatpush.msra.mxu0 %v3381
    %3530 = vmatpush.msra.mxu0 %v3379
    %3531 = vmatpush.msra.mxu0 %v3377
    %3532 = vmatmul.f32.gmra.mxu0 %v3243
    %v3533 = vpop.f32.mrf.mxu0
    %v3534 = vadd.f32 %v3508, %v3533
    %3535 = vmatmul.f32.gmra.mxu0 %v3310
    %v3536 = vpop.f32.mrf.mxu0
    %v3537 = vadd.f32 %v3511, %v3536
    %3538 = vmatmul.f32.gmra.mxu0 %v3290
    %v3539 = vpop.f32.mrf.mxu0
    %v3540 = vadd.f32 %v3514, %v3539
    %3541 = vdwg.mxu0
    %3542 = vmatpush.msra.mxu0 %v3439
    %3543 = vmatpush.msra.mxu0 %v3437
    %3544 = vmatpush.msra.mxu0 %v3435
    %3545 = vmatpush.msra.mxu0 %v3433
    %3546 = vmatpush.msra.mxu0 %v3431
    %3547 = vmatpush.msra.mxu0 %v3429
    %3548 = vmatpush.msra.mxu0 %v3427
    %3549 = vmatpush.msra.mxu0 %v3425
    %3550 = vmatpush.msra.mxu0 %v3423
    %3551 = vmatpush.msra.mxu0 %v3421
    %3552 = vmatpush.msra.mxu0 %v3419
    %3553 = vmatpush.msra.mxu0 %v3417
    %3554 = vmatpush.msra.mxu0 %v3415
    %3555 = vmatpush.msra.mxu0 %v3413
    %3556 = vmatpush.msra.mxu0 %v3411
    %3557 = vmatpush.msra.mxu0 %v3409
    %3558 = vmatmul.f32.gmra.mxu0 %v3251
    %v3559 = vpop.f32.mrf.mxu0
    %v3560 = vadd.f32 %v3534, %v3559
    %3561 = vmatmul.f32.gmra.mxu0 %v3311
    %v3562 = vpop.f32.mrf.mxu0
    %v3563 = vadd.f32 %v3537, %v3562
    %3564 = vmatmul.f32.gmra.mxu0 %v3293
    %v3565 = vpop.f32.mrf.mxu0
    %v3566 = vadd.f32 %v3540, %v3565
    %3567 = vdwg.mxu0
    %3568 = vmatpush.msra.mxu0 0.0
    %3569 = vmatpush.msra.mxu0 0.0
    %3570 = vmatpush.msra.mxu0 0.0
    %3571 = vmatpush.msra.mxu0 0.0
    %3572 = vmatpush.msra.mxu0 0.0
    %3573 = vmatpush.msra.mxu0 0.0
    %3574 = vmatpush.msra.mxu0 0.0
    %3575 = vmatpush.msra.mxu0 0.0
    %3576 = vmatpush.msra.mxu0 %v3455
    %3577 = vmatpush.msra.mxu0 %v3453
    %3578 = vmatpush.msra.mxu0 %v3451
    %3579 = vmatpush.msra.mxu0 %v3449
    %3580 = vmatpush.msra.mxu0 %v3447
    %3581 = vmatpush.msra.mxu0 %v3445
    %3582 = vmatpush.msra.mxu0 %v3443
    %3583 = vmatpush.msra.mxu0 %v3441
    %3584 = vmatmul.f32.gmra.mxu0 %v3457
    %v3585 = vpop.f32.mrf.mxu0
    %v3586 = vadd.f32 %v3560, %v3585
    %3587 = vmatmul.f32.gmra.mxu0 %v3460
    %v3588 = vpop.f32.mrf.mxu0
    %v3589 = vadd.f32 %v3563, %v3588
    %3590 = vmatmul.f32.gmra.mxu0 %v3462
    %v3591 = vpop.f32.mrf.mxu0
    %v3592 = vadd.f32 %v3566, %v3591
    %3593 = vdwg.mxu0
    %3594 = vmatpush.msra.mxu0 %v3344
    %3595 = vmatpush.msra.mxu0 %v3342
    %3596 = vmatpush.msra.mxu0 %v3340
    %3597 = vmatpush.msra.mxu0 %v3338
    %3598 = vmatpush.msra.mxu0 %v3336
    %3599 = vmatpush.msra.mxu0 %v3334
    %3600 = vmatpush.msra.mxu0 %v3332
    %3601 = vmatpush.msra.mxu0 %v3330
    %3602 = vmatpush.msra.mxu0 %v3328
    %3603 = vmatpush.msra.mxu0 %v3326
    %3604 = vmatpush.msra.mxu0 %v3324
    %3605 = vmatpush.msra.mxu0 %v3322
    %3606 = vmatpush.msra.mxu0 %v3320
    %3607 = vmatpush.msra.mxu0 %v3318
    %3608 = vmatpush.msra.mxu0 %v3316
    %3609 = vmatpush.msra.mxu0 %v3314
    %3610 = vmatmul.f32.gmra.mxu0 %v3219
    %v3611 = vpop.f32.mrf.mxu0
    %v3612 = vadd.f32 0.0, %v3611
    %3613 = vmatmul.f32.gmra.mxu0 %v3308
    %v3614 = vpop.f32.mrf.mxu0
    %v3615 = vadd.f32 0.0, %v3614
    %3616 = vmatmul.f32.gmra.mxu0 %v3278
    %v3617 = vpop.f32.mrf.mxu0
    %v3618 = vadd.f32 0.0, %v3617
    %3619 = vdwg.mxu0
    %3620 = vmatpush.msra.mxu0 %v3376
    %3621 = vmatpush.msra.mxu0 %v3374
    %3622 = vmatpush.msra.mxu0 %v3372
    %3623 = vmatpush.msra.mxu0 %v3370
    %3624 = vmatpush.msra.mxu0 %v3368
    %3625 = vmatpush.msra.mxu0 %v3366
    %3626 = vmatpush.msra.mxu0 %v3364
    %3627 = vmatpush.msra.mxu0 %v3362
    %3628 = vmatpush.msra.mxu0 %v3360
    %3629 = vmatpush.msra.mxu0 %v3358
    %3630 = vmatpush.msra.mxu0 %v3356
    %3631 = vmatpush.msra.mxu0 %v3354
    %3632 = vmatpush.msra.mxu0 %v3352
    %3633 = vmatpush.msra.mxu0 %v3350
    %3634 = vmatpush.msra.mxu0 %v3348
    %3635 = vmatpush.msra.mxu0 %v3346
    %3636 = vmatmul.f32.gmra.mxu0 %v3258
    %v3637 = vpop.f32.mrf.mxu0
    %v3638 = vadd.f32 %v3612, %v3637
    %3639 = vmatmul.f32.gmra.mxu0 %v3309
    %v3640 = vpop.f32.mrf.mxu0
    %v3641 = vadd.f32 %v3615, %v3640
    %3642 = vmatmul.f32.gmra.mxu0 %v3287
    %v3643 = vpop.f32.mrf.mxu0
    %v3644 = vadd.f32 %v3618, %v3643
    %3645 = vdwg.mxu0
    %3646 = vmatpush.msra.mxu0 %v3408
    %3647 = vmatpush.msra.mxu0 %v3406
    %3648 = vmatpush.msra.mxu0 %v3404
    %3649 = vmatpush.msra.mxu0 %v3402
    %3650 = vmatpush.msra.mxu0 %v3400
    %3651 = vmatpush.msra.mxu0 %v3398
    %3652 = vmatpush.msra.mxu0 %v3396
    %3653 = vmatpush.msra.mxu0 %v3394
    %3654 = vmatpush.msra.mxu0 %v3392
    %3655 = vmatpush.msra.mxu0 %v3390
    %3656 = vmatpush.msra.mxu0 %v3388
    %3657 = vmatpush.msra.mxu0 %v3386
    %3658 = vmatpush.msra.mxu0 %v3384
    %3659 = vmatpush.msra.mxu0 %v3382
    %3660 = vmatpush.msra.mxu0 %v3380
    %3661 = vmatpush.msra.mxu0 %v3378
    %3662 = vmatmul.f32.gmra.mxu0 %v3243
    %v3663 = vpop.f32.mrf.mxu0
    %v3664 = vadd.f32 %v3638, %v3663
    %3665 = vmatmul.f32.gmra.mxu0 %v3310
    %v3666 = vpop.f32.mrf.mxu0
    %v3667 = vadd.f32 %v3641, %v3666
    %3668 = vmatmul.f32.gmra.mxu0 %v3290
    %v3669 = vpop.f32.mrf.mxu0
    %v3670 = vadd.f32 %v3644, %v3669
    %3671 = vdwg.mxu0
    %3672 = vmatpush.msra.mxu0 %v3440
    %3673 = vmatpush.msra.mxu0 %v3438
    %3674 = vmatpush.msra.mxu0 %v3436
    %3675 = vmatpush.msra.mxu0 %v3434
    %3676 = vmatpush.msra.mxu0 %v3432
    %3677 = vmatpush.msra.mxu0 %v3430
    %3678 = vmatpush.msra.mxu0 %v3428
    %3679 = vmatpush.msra.mxu0 %v3426
    %3680 = vmatpush.msra.mxu0 %v3424
    %3681 = vmatpush.msra.mxu0 %v3422
    %3682 = vmatpush.msra.mxu0 %v3420
    %3683 = vmatpush.msra.mxu0 %v3418
    %3684 = vmatpush.msra.mxu0 %v3416
    %3685 = vmatpush.msra.mxu0 %v3414
    %3686 = vmatpush.msra.mxu0 %v3412
    %3687 = vmatpush.msra.mxu0 %v3410
    %3688 = vmatmul.f32.gmra.mxu0 %v3251
    %v3689 = vpop.f32.mrf.mxu0
    %v3690 = vadd.f32 %v3664, %v3689
    %3691 = vmatmul.f32.gmra.mxu0 %v3311
    %v3692 = vpop.f32.mrf.mxu0
    %v3693 = vadd.f32 %v3667, %v3692
    %3694 = vmatmul.f32.gmra.mxu0 %v3293
    %v3695 = vpop.f32.mrf.mxu0
    %v3696 = vadd.f32 %v3670, %v3695
    %3697 = vdwg.mxu0
    %3698 = vmatpush.msra.mxu0 0.0
    %3699 = vmatpush.msra.mxu0 0.0
    %3700 = vmatpush.msra.mxu0 0.0
    %3701 = vmatpush.msra.mxu0 0.0
    %3702 = vmatpush.msra.mxu0 0.0
    %3703 = vmatpush.msra.mxu0 0.0
    %3704 = vmatpush.msra.mxu0 0.0
    %3705 = vmatpush.msra.mxu0 0.0
    %3706 = vmatpush.msra.mxu0 %v3456
    %3707 = vmatpush.msra.mxu0 %v3454
    %3708 = vmatpush.msra.mxu0 %v3452
    %3709 = vmatpush.msra.mxu0 %v3450
    %3710 = vmatpush.msra.mxu0 %v3448
    %3711 = vmatpush.msra.mxu0 %v3446
    %3712 = vmatpush.msra.mxu0 %v3444
    %3713 = vmatpush.msra.mxu0 %v3442
    %3714 = vmatmul.f32.gmra.mxu0 %v3457
    %v3715 = vpop.f32.mrf.mxu0
    %v3716 = vadd.f32 %v3690, %v3715
    %3717 = vmatmul.f32.gmra.mxu0 %v3460
    %v3718 = vpop.f32.mrf.mxu0
    %v3719 = vadd.f32 %v3693, %v3718
    %3720 = vmatmul.f32.gmra.mxu0 %v3462
    %v3721 = vpop.f32.mrf.mxu0
    %v3722 = vadd.f32 %v3696, %v3721
    %3723 = vdwg.mxu0
    %v3724 = vadd.f32 %v3586, %v3589
    %v3725 = vsel %vm636, %v3592, 0.0
    %v3726 = vadd.f32 %v3724, %v3725
    %v3727 = vrot.slane %v3726, 4
    %v3728 = vadd.f32 %v3726, %v3727
    %v3729 = vrot.slane %v3728, 2
    %v3730 = vadd.f32 %v3728, %v3729
    %v3731 = vrot.slane %v3730, 1
    %v3732 = vadd.f32 %v3730, %v3731
    %v3733 = vsel %vm366, %v3716, 0.0
    %v3734 = vsel %vm366, %v3719, 0.0
    %v3735 = vadd.f32 %v3733, %v3734
    %vm3736 = vcmask 257024
    %v3737 = vsel %vm3736, %v3722, 0.0
    %v3738 = vadd.f32 %v3735, %v3737
    %v3739 = vrot.slane %v3738, 4
    %v3740 = vadd.f32 %v3738, %v3739
    %v3741 = vrot.slane %v3740, 2
    %v3742 = vadd.f32 %v3740, %v3741
    %v3743 = vrot.slane %v3742, 1
    %v3744 = vadd.f32 %v3742, %v3743
    %v3745 = vmul.f32 %v3586, %v3586
    %v3746 = vmul.f32 %v3716, %v3716
    %v3747 = vmul.f32 %v3589, %v3589
    %v3748 = vmul.f32 %v3719, %v3719
    %v3749 = vmul.f32 %v3592, %v3592
    %v3750 = vmul.f32 %v3722, %v3722
    %v3751 = vadd.f32 %v3745, %v3747
    %v3752 = vsel %vm636, %v3749, 0.0
    %v3753 = vadd.f32 %v3751, %v3752
    %v3754 = vrot.slane %v3753, 4
    %v3755 = vadd.f32 %v3753, %v3754
    %v3756 = vrot.slane %v3755, 2
    %v3757 = vadd.f32 %v3755, %v3756
    %v3758 = vrot.slane %v3757, 1
    %v3759 = vadd.f32 %v3757, %v3758
    %v3760 = vsel %vm366, %v3746, 0.0
    %v3761 = vsel %vm366, %v3748, 0.0
    %v3762 = vadd.f32 %v3760, %v3761
    %v3763 = vsel %vm3736, %v3750, 0.0
    %v3764 = vadd.f32 %v3762, %v3763
    %v3765 = vrot.slane %v3764, 4
    %v3766 = vadd.f32 %v3764, %v3765
    %v3767 = vrot.slane %v3766, 2
    %v3768 = vadd.f32 %v3766, %v3767
    %v3769 = vrot.slane %v3768, 1
    %v3770 = vadd.f32 %v3768, %v3769
    %v3771 = vsel %vm719, %v3732, %v3759
    %v3772 = vsel %vm719, %v3744, %v3770
    %v3773 = vld [vmem:[%s43] sm:$0xff]
    %v3774 = vld [vmem:[%s43 + $0x8] sm:$0xff]
    %v3775 = vld [vmem:[%s43 + $0x10] sm:$0xff]
    %v3776 = vld [vmem:[%s43 + $0x18] sm:$0xff]
    %v3777 = vld [vmem:[%s43 + $0x20] sm:$0xff]
    %v3778 = vld [vmem:[%s43 + $0x28] sm:$0xff]
    %v3779 = vld [vmem:[%s43 + $0x30] sm:$0xff]
    %v3780 = vld [vmem:[%s43 + $0x38] sm:$0xff]
    %v3781 = vld [vmem:[%s43 + $0x40] sm:$0xff]
    %v3782 = vld [vmem:[%s43 + $0x48] sm:$0xff]
    %v3783 = vld [vmem:[%s43 + $0x50] sm:$0xff]
    %v3784 = vld [vmem:[%s43 + $0x58] sm:$0xff]
    %v3785 = vld [vmem:[%s43 + $0x60] sm:$0xff]
    %v3786 = vld [vmem:[%s43 + $0x68] sm:$0xff]
    %v3787 = vld [vmem:[%s43 + $0x70] sm:$0xff]
    %v3788 = vld [vmem:[%s43 + $0x78] sm:$0xff]
    %v3789 = vld [vmem:[%s43 + $0x80] sm:$0xff]
    %v3790 = vld [vmem:[%s43 + $0x88] sm:$0xff]
    %v3791 = vld [vmem:[%s43 + $0x90] sm:$0xff]
    %v3792 = vld [vmem:[%s43 + $0x98] sm:$0xff]
    %v3794 = vsel %vm366, %v3772, 0
    %3796 = vmatpush.msra.mxu0 %v3788
    %3797 = vmatpush.msra.mxu0 %v3787
    %3798 = vmatpush.msra.mxu0 %v3786
    %3799 = vmatpush.msra.mxu0 %v3785
    %3800 = vmatpush.msra.mxu0 %v3784
    %3801 = vmatpush.msra.mxu0 %v3783
    %3802 = vmatpush.msra.mxu0 %v3782
    %3803 = vmatpush.msra.mxu0 %v3781
    %3804 = vmatpush.msra.mxu0 %v3780
    %3805 = vmatpush.msra.mxu0 %v3779
    %3806 = vmatpush.msra.mxu0 %v3778
    %3807 = vmatpush.msra.mxu0 %v3777
    %3808 = vmatpush.msra.mxu0 %v3776
    %3809 = vmatpush.msra.mxu0 %v3775
    %3810 = vmatpush.msra.mxu0 %v3774
    %3811 = vmatpush.msra.mxu0 %v3773
    %3812 = vmatmul.f32.gmra.mxu0 %v3771
    %v3813 = vpop.f32.mrf.mxu0
    %v3814 = vadd.f32 0.0, %v3813
    %3815 = vdwg.mxu0
    %3816 = vmatpush.msra.mxu0 0.0
    %3817 = vmatpush.msra.mxu0 0.0
    %3818 = vmatpush.msra.mxu0 0.0
    %3819 = vmatpush.msra.mxu0 0.0
    %3820 = vmatpush.msra.mxu0 0.0
    %3821 = vmatpush.msra.mxu0 0.0
    %3822 = vmatpush.msra.mxu0 0.0
    %3823 = vmatpush.msra.mxu0 0.0
    %3824 = vmatpush.msra.mxu0 0.0
    %3825 = vmatpush.msra.mxu0 0.0
    %3826 = vmatpush.msra.mxu0 0.0
    %3827 = vmatpush.msra.mxu0 0.0
    %3828 = vmatpush.msra.mxu0 %v3792
    %3829 = vmatpush.msra.mxu0 %v3791
    %3830 = vmatpush.msra.mxu0 %v3790
    %3831 = vmatpush.msra.mxu0 %v3789
    %3832 = vmatmul.f32.gmra.mxu0 %v3794
    %v3833 = vpop.f32.mrf.mxu0
    %v3834 = vadd.f32 %v3814, %v3833
    %3835 = vdwg.mxu0
    %v3836 = vmul.f32 %v3834, 0.005
    %v3837 = vmul.f32 %v3836, %v3836
    %v3839 = vrot.slane %v3837, 7
    %v3841 = vsub.f32 %v3836, %v3839
    %v3842 = vmax.f32 %v3841, 0.0
    %v3843 = vld [vmem:[%s39] sm:$0x1]
    %v3844 = vadd.f32 %v3842, 1e-05
    %v3845 = vrsqrt.pop %v3844
    %v3846 = vmul.f32 %v3845, %v3844
    %v3847 = vmul.f32 %v3846, %v3845
    %v3848 = vmul.f32 0.5, %v3847
    %v3849 = vsub.f32 1.5, %v3848
    %v3850 = vmul.f32 %v3845, %v3849
    %vm3851 = vweird.f32 %v3844
    %vm3852 = vweird.f32 %v3845
    %vm3853 = vmor %vm3851, %vm3852
    %v3854 = vsel %vm3853, %v3845, %v3850
    %3856 = vst [vmem:[#allocation1] sm:$0xff] %v3854
    %s3857 = scalar_lea.vmem [#allocation1], 1
    %v3858 = vld [vmem:[%s3857] ss:$9 sm:$0xff]
    %v3860 = vmul.f32 %v3843, %v3858
    %v3861 = vld [vmem:[%s41] sm:$0x1]
    %v3862 = vmul.f32 %v3836, %v3860
    %v3863 = vsub.f32 %v3861, %v3862
    %v3865 = vperm.slane %v3863, 0
    %v3867 = vsel %vm719, %v3860, %v3865
    %v3868 = vld [vmem:[%s45] sm:$0xff]
    %v3869 = vld [vmem:[%s45 + $0x8] sm:$0xff]
    %v3870 = vld [vmem:[%s45 + $0x10] sm:$0xff]
    %v3871 = vld [vmem:[%s45 + $0x18] sm:$0xff]
    %v3873 = vsel %vm3129, %v3867, 0
    %3875 = vmatpush.msra.mxu0 0.0
    %3876 = vmatpush.msra.mxu0 0.0
    %3877 = vmatpush.msra.mxu0 0.0
    %3878 = vmatpush.msra.mxu0 0.0
    %3879 = vmatpush.msra.mxu0 0.0
    %3880 = vmatpush.msra.mxu0 0.0
    %3881 = vmatpush.msra.mxu0 0.0
    %3882 = vmatpush.msra.mxu0 0.0
    %3883 = vmatpush.msra.mxu0 0.0
    %3884 = vmatpush.msra.mxu0 0.0
    %3885 = vmatpush.msra.mxu0 0.0
    %3886 = vmatpush.msra.mxu0 0.0
    %3887 = vmatpush.msra.mxu0 0.0
    %3888 = vmatpush.msra.mxu0 0.0
    %3889 = vmatpush.msra.mxu0 %v3870
    %3890 = vmatpush.msra.mxu0 %v3868
    %3891 = vmatmul.f32.gmra.mxu0 %v3873
    %v3892 = vpop.f32.mrf.mxu0
    %v3893 = vadd.f32 0.0, %v3892
    %3894 = vdwg.mxu0
    %3895 = vmatpush.msra.mxu0 0.0
    %3896 = vmatpush.msra.mxu0 0.0
    %3897 = vmatpush.msra.mxu0 0.0
    %3898 = vmatpush.msra.mxu0 0.0
    %3899 = vmatpush.msra.mxu0 0.0
    %3900 = vmatpush.msra.mxu0 0.0
    %3901 = vmatpush.msra.mxu0 0.0
    %3902 = vmatpush.msra.mxu0 0.0
    %3903 = vmatpush.msra.mxu0 0.0
    %3904 = vmatpush.msra.mxu0 0.0
    %3905 = vmatpush.msra.mxu0 0.0
    %3906 = vmatpush.msra.mxu0 0.0
    %3907 = vmatpush.msra.mxu0 0.0
    %3908 = vmatpush.msra.mxu0 0.0
    %3909 = vmatpush.msra.mxu0 %v3871
    %3910 = vmatpush.msra.mxu0 %v3869
    %3911 = vmatmul.f32.gmra.mxu0 %v3873
    %v3912 = vpop.f32.mrf.mxu0
    %v3913 = vadd.f32 0.0, %v3912
    %3914 = vdwg.mxu0
    %v3915 = vperm.slane %v3893, 0
    %v3916 = vperm.slane %v3913, 0
    %v3917 = vmul.f32 %v3586, %v3915
    %v3918 = vmul.f32 %v3716, %v3916
    %v3919 = vmul.f32 %v3589, %v3915
    %v3920 = vmul.f32 %v3719, %v3916
    %v3921 = vmul.f32 %v3592, %v3915
    %v3922 = vmul.f32 %v3722, %v3916
    %v3923 = vperm.slane %v3893, 1
    %v3924 = vperm.slane %v3913, 1
    %v3925 = vadd.f32 %v3917, %v3923
    %v3926 = vadd.f32 %v3918, %v3924
    %v3927 = vadd.f32 %v3919, %v3923
    %v3928 = vadd.f32 %v3920, %v3924
    %v3929 = vadd.f32 %v3921, %v3923
    %v3930 = vadd.f32 %v3922, %v3924
    %vm3931 = vcmp.gt.f32.partialorder %v3925, 0.0
    %vm3932 = vcmp.gt.f32.partialorder %v3926, 0.0
    %vm3933 = vcmp.gt.f32.partialorder %v3927, 0.0
    %vm3934 = vcmp.gt.f32.partialorder %v3928, 0.0
    %vm3935 = vcmp.gt.f32.partialorder %v3929, 0.0
    %vm3936 = vcmp.gt.f32.partialorder %v3930, 0.0
    %v3937 = vmin.f32 %v3925, 0.0
    %v3938 = vmin.f32 %v3926, 0.0
    %v3939 = vmin.f32 %v3927, 0.0
    %v3940 = vmin.f32 %v3928, 0.0
    %v3941 = vmin.f32 %v3929, 0.0
    %v3942 = vmin.f32 %v3930, 0.0
    %v3943 = vmul.f32 %v3937, 1.442695
    %v3944 = vpow.pop %v3943
    %v3945 = vmul.f32 %v3938, 1.442695
    %v3946 = vpow.pop %v3945
    %v3947 = vmul.f32 %v3939, 1.442695
    %v3948 = vpow.pop %v3947
    %v3949 = vmul.f32 %v3940, 1.442695
    %v3950 = vpow.pop %v3949
    %v3951 = vmul.f32 %v3941, 1.442695
    %v3952 = vpow.pop %v3951
    %v3953 = vmul.f32 %v3942, 1.442695
    %v3954 = vpow.pop %v3953
    %v3955 = vsub.f32 %v3944, 1.0
    %v3956 = vsub.f32 %v3946, 1.0
    %v3957 = vsub.f32 %v3948, 1.0
    %v3958 = vsub.f32 %v3950, 1.0
    %v3959 = vsub.f32 %v3952, 1.0
    %v3960 = vsub.f32 %v3954, 1.0
    %v3961 = vsel %vm3931, %v3925, %v3955
    %v3962 = vsel %vm3932, %v3926, %v3956
    %v3963 = vsel %vm3933, %v3927, %v3957
    %v3964 = vsel %vm3934, %v3928, %v3958
    %v3965 = vsel %vm3935, %v3929, %v3959
    %v3966 = vsel %vm3936, %v3930, %v3960
    %v3967 = vld [vmem:[%s47] sm:$0xff]
    %v3968 = vld [vmem:[%s47 + $0x8] sm:$0x3]
    %vm3969 = vcmask 162816
    %v3971 = vsel %vm3969, %v3967, 0
    %v3974 = vsel %vm3969, %v3968, 0
    %v3977 = vsel %vm636, %v3965, 0
    %v3980 = vsel %vm636, %v3966, 0
    %3982 = vmatpush.msra.mxu0 0.0
    %3983 = vmatpush.msra.mxu0 0.0
    %3984 = vmatpush.msra.mxu0 0.0
    %3985 = vmatpush.msra.mxu0 0.0
    %3986 = vmatpush.msra.mxu0 0.0
    %3987 = vmatpush.msra.mxu0 0.0
    %3988 = vmatpush.msra.mxu0 0.0
    %3989 = vmatpush.msra.mxu0 0.0
    %3990 = vmatpush.msra.mxu0 0.0
    %3991 = vmatpush.msra.mxu0 0.0
    %3992 = vmatpush.msra.mxu0 0.0
    %3993 = vmatpush.msra.mxu0 0.0
    %3994 = vmatpush.msra.mxu0 0.0
    %3995 = vmatpush.msra.mxu0 %v3977
    %3996 = vmatpush.msra.mxu0 %v3963
    %3997 = vmatpush.msra.mxu0 %v3961
    %3998 = vmatmul.f32.gmra.mxu0 %v3971
    %v3999 = vpop.f32.mrf.mxu0
    %v4000 = vadd.f32 0.0, %v3999
    %4001 = vmatmul.f32.gmra.mxu0 %v3974
    %v4002 = vpop.f32.mrf.mxu0
    %v4003 = vadd.f32 0.0, %v4002
    %4004 = vdwg.mxu0
    %4005 = vmatpush.msra.mxu0 0.0
    %4006 = vmatpush.msra.mxu0 0.0
    %4007 = vmatpush.msra.mxu0 0.0
    %4008 = vmatpush.msra.mxu0 0.0
    %4009 = vmatpush.msra.mxu0 0.0
    %4010 = vmatpush.msra.mxu0 0.0
    %4011 = vmatpush.msra.mxu0 0.0
    %4012 = vmatpush.msra.mxu0 0.0
    %4013 = vmatpush.msra.mxu0 0.0
    %4014 = vmatpush.msra.mxu0 0.0
    %4015 = vmatpush.msra.mxu0 0.0
    %4016 = vmatpush.msra.mxu0 0.0
    %4017 = vmatpush.msra.mxu0 0.0
    %4018 = vmatpush.msra.mxu0 %v3980
    %4019 = vmatpush.msra.mxu0 %v3964
    %4020 = vmatpush.msra.mxu0 %v3962
    %4021 = vmatmul.f32.gmra.mxu0 %v3971
    %v4022 = vpop.f32.mrf.mxu0
    %v4023 = vadd.f32 0.0, %v4022
    %4024 = vmatmul.f32.gmra.mxu0 %v3974
    %v4025 = vpop.f32.mrf.mxu0
    %v4026 = vadd.f32 0.0, %v4025
    %4027 = vdwg.mxu0
    %s4028 = scalar_lea.vmem %s47, 16
    %v4029 = vld [vmem:[%s4028] sm:$0xff]
    %v4030 = vld [vmem:[%s4028 + $0x8] sm:$0x3]
    %v4032 = vsel %vm3969, %v4029, 0
    %v4035 = vsel %vm3969, %v4030, 0
    %4037 = vmatpush.msra.mxu0 0.0
    %4038 = vmatpush.msra.mxu0 0.0
    %4039 = vmatpush.msra.mxu0 0.0
    %4040 = vmatpush.msra.mxu0 0.0
    %4041 = vmatpush.msra.mxu0 0.0
    %4042 = vmatpush.msra.mxu0 0.0
    %4043 = vmatpush.msra.mxu0 0.0
    %4044 = vmatpush.msra.mxu0 0.0
    %4045 = vmatpush.msra.mxu0 0.0
    %4046 = vmatpush.msra.mxu0 0.0
    %4047 = vmatpush.msra.mxu0 0.0
    %4048 = vmatpush.msra.mxu0 0.0
    %4049 = vmatpush.msra.mxu0 0.0
    %4050 = vmatpush.msra.mxu0 %v3977
    %4051 = vmatpush.msra.mxu0 %v3963
    %4052 = vmatpush.msra.mxu0 %v3961
    %4053 = vmatmul.f32.gmra.mxu0 %v4032
    %v4054 = vpop.f32.mrf.mxu0
    %v4055 = vadd.f32 0.0, %v4054
    %4056 = vmatmul.f32.gmra.mxu0 %v4035
    %v4057 = vpop.f32.mrf.mxu0
    %v4058 = vadd.f32 0.0, %v4057
    %4059 = vdwg.mxu0
    %4060 = vmatpush.msra.mxu0 0.0
    %4061 = vmatpush.msra.mxu0 0.0
    %4062 = vmatpush.msra.mxu0 0.0
    %4063 = vmatpush.msra.mxu0 0.0
    %4064 = vmatpush.msra.mxu0 0.0
    %4065 = vmatpush.msra.mxu0 0.0
    %4066 = vmatpush.msra.mxu0 0.0
    %4067 = vmatpush.msra.mxu0 0.0
    %4068 = vmatpush.msra.mxu0 0.0
    %4069 = vmatpush.msra.mxu0 0.0
    %4070 = vmatpush.msra.mxu0 0.0
    %4071 = vmatpush.msra.mxu0 0.0
    %4072 = vmatpush.msra.mxu0 0.0
    %4073 = vmatpush.msra.mxu0 %v3980
    %4074 = vmatpush.msra.mxu0 %v3964
    %4075 = vmatpush.msra.mxu0 %v3962
    %4076 = vmatmul.f32.gmra.mxu0 %v4032
    %v4077 = vpop.f32.mrf.mxu0
    %v4078 = vadd.f32 0.0, %v4077
    %4079 = vmatmul.f32.gmra.mxu0 %v4035
    %v4080 = vpop.f32.mrf.mxu0
    %v4081 = vadd.f32 0.0, %v4080
    %4082 = vdwg.mxu0
    %v4083 = vmax.f32 %v4000, %v4055
    %v4084 = vmax.f32 %v4023, %v4078
    %v4085 = vmax.f32 %v4003, %v4058
    %v4086 = vmax.f32 %v4026, %v4081
    %v4087 = vld [vmem:[%s49] sm:$0xff]
    %v4088 = vld [vmem:[%s49 + $0x8] sm:$0xff]
    %v4089 = vld [vmem:[%s49 + $0x10] sm:$0xff]
    %v4090 = vld [vmem:[%s49 + $0x18] sm:$0xff]
    %v4091 = vld [vmem:[%s49 + $0x20] sm:$0xff]
    %v4092 = vld [vmem:[%s49 + $0x28] sm:$0xff]
    %v4093 = vld [vmem:[%s49 + $0x30] sm:$0xff]
    %v4094 = vld [vmem:[%s49 + $0x38] sm:$0xff]
    %v4095 = vld [vmem:[%s49 + $0x40] sm:$0xff]
    %v4096 = vld [vmem:[%s49 + $0x48] sm:$0xff]
    %v4097 = vld [vmem:[%s49 + $0x50] sm:$0xff]
    %v4098 = vld [vmem:[%s49 + $0x58] sm:$0xff]
    %v4099 = vld [vmem:[%s49 + $0x60] sm:$0xff]
    %v4100 = vld [vmem:[%s49 + $0x68] sm:$0xff]
    %v4101 = vld [vmem:[%s49 + $0x70] sm:$0xff]
    %v4102 = vld [vmem:[%s49 + $0x78] sm:$0xff]
    %v4103 = vld [vmem:[%s49 + $0x80] sm:$0xff]
    %v4104 = vld [vmem:[%s49 + $0x88] sm:$0xff]
    %v4105 = vld [vmem:[%s49 + $0x90] sm:$0xff]
    %v4106 = vld [vmem:[%s49 + $0x98] sm:$0xff]
    %v4108 = vsel %vm366, %v4084, 0
    %v4111 = vsel %vm366, %v4086, 0
    %4113 = vmatpush.msra.mxu0 %v4102
    %4114 = vmatpush.msra.mxu0 %v4101
    %4115 = vmatpush.msra.mxu0 %v4100
    %4116 = vmatpush.msra.mxu0 %v4099
    %4117 = vmatpush.msra.mxu0 %v4098
    %4118 = vmatpush.msra.mxu0 %v4097
    %4119 = vmatpush.msra.mxu0 %v4096
    %4120 = vmatpush.msra.mxu0 %v4095
    %4121 = vmatpush.msra.mxu0 %v4094
    %4122 = vmatpush.msra.mxu0 %v4093
    %4123 = vmatpush.msra.mxu0 %v4092
    %4124 = vmatpush.msra.mxu0 %v4091
    %4125 = vmatpush.msra.mxu0 %v4090
    %4126 = vmatpush.msra.mxu0 %v4089
    %4127 = vmatpush.msra.mxu0 %v4088
    %4128 = vmatpush.msra.mxu0 %v4087
    %4129 = vmatmul.f32.gmra.mxu0 %v4083
    %v4130 = vpop.f32.mrf.mxu0
    %v4131 = vadd.f32 0.0, %v4130
    %4132 = vmatmul.f32.gmra.mxu0 %v4085
    %v4133 = vpop.f32.mrf.mxu0
    %v4134 = vadd.f32 0.0, %v4133
    %4135 = vdwg.mxu0
    %4136 = vmatpush.msra.mxu0 0.0
    %4137 = vmatpush.msra.mxu0 0.0
    %4138 = vmatpush.msra.mxu0 0.0
    %4139 = vmatpush.msra.mxu0 0.0
    %4140 = vmatpush.msra.mxu0 0.0
    %4141 = vmatpush.msra.mxu0 0.0
    %4142 = vmatpush.msra.mxu0 0.0
    %4143 = vmatpush.msra.mxu0 0.0
    %4144 = vmatpush.msra.mxu0 0.0
    %4145 = vmatpush.msra.mxu0 0.0
    %4146 = vmatpush.msra.mxu0 0.0
    %4147 = vmatpush.msra.mxu0 0.0
    %4148 = vmatpush.msra.mxu0 %v4106
    %4149 = vmatpush.msra.mxu0 %v4105
    %4150 = vmatpush.msra.mxu0 %v4104
    %4151 = vmatpush.msra.mxu0 %v4103
    %4152 = vmatmul.f32.gmra.mxu0 %v4108
    %v4153 = vpop.f32.mrf.mxu0
    %v4154 = vadd.f32 %v4131, %v4153
    %4155 = vmatmul.f32.gmra.mxu0 %v4111
    %v4156 = vpop.f32.mrf.mxu0
    %v4157 = vadd.f32 %v4134, %v4156
    %4158 = vdwg.mxu0
    %s4159 = scalar_lea.vmem %s49, 160
    %v4160 = vld [vmem:[%s4159] sm:$0xff]
    %v4161 = vld [vmem:[%s4159 + $0x8] sm:$0xff]
    %v4162 = vld [vmem:[%s4159 + $0x10] sm:$0xff]
    %v4163 = vld [vmem:[%s4159 + $0x18] sm:$0xff]
    %v4164 = vld [vmem:[%s4159 + $0x20] sm:$0xff]
    %v4165 = vld [vmem:[%s4159 + $0x28] sm:$0xff]
    %v4166 = vld [vmem:[%s4159 + $0x30] sm:$0xff]
    %v4167 = vld [vmem:[%s4159 + $0x38] sm:$0xff]
    %v4168 = vld [vmem:[%s4159 + $0x40] sm:$0xff]
    %v4169 = vld [vmem:[%s4159 + $0x48] sm:$0xff]
    %v4170 = vld [vmem:[%s4159 + $0x50] sm:$0xff]
    %v4171 = vld [vmem:[%s4159 + $0x58] sm:$0xff]
    %v4172 = vld [vmem:[%s4159 + $0x60] sm:$0xff]
    %v4173 = vld [vmem:[%s4159 + $0x68] sm:$0xff]
    %v4174 = vld [vmem:[%s4159 + $0x70] sm:$0xff]
    %v4175 = vld [vmem:[%s4159 + $0x78] sm:$0xff]
    %v4176 = vld [vmem:[%s4159 + $0x80] sm:$0xff]
    %v4177 = vld [vmem:[%s4159 + $0x88] sm:$0xff]
    %v4178 = vld [vmem:[%s4159 + $0x90] sm:$0xff]
    %v4179 = vld [vmem:[%s4159 + $0x98] sm:$0xff]
    %4180 = vmatpush.msra.mxu0 %v4175
    %4181 = vmatpush.msra.mxu0 %v4174
    %4182 = vmatpush.msra.mxu0 %v4173
    %4183 = vmatpush.msra.mxu0 %v4172
    %4184 = vmatpush.msra.mxu0 %v4171
    %4185 = vmatpush.msra.mxu0 %v4170
    %4186 = vmatpush.msra.mxu0 %v4169
    %4187 = vmatpush.msra.mxu0 %v4168
    %4188 = vmatpush.msra.mxu0 %v4167
    %4189 = vmatpush.msra.mxu0 %v4166
    %4190 = vmatpush.msra.mxu0 %v4165
    %4191 = vmatpush.msra.mxu0 %v4164
    %4192 = vmatpush.msra.mxu0 %v4163
    %4193 = vmatpush.msra.mxu0 %v4162
    %4194 = vmatpush.msra.mxu0 %v4161
    %4195 = vmatpush.msra.mxu0 %v4160
    %4196 = vmatmul.f32.gmra.mxu0 %v4083
    %v4197 = vpop.f32.mrf.mxu0
    %v4198 = vadd.f32 0.0, %v4197
    %4199 = vmatmul.f32.gmra.mxu0 %v4085
    %v4200 = vpop.f32.mrf.mxu0
    %v4201 = vadd.f32 0.0, %v4200
    %4202 = vdwg.mxu0
    %4203 = vmatpush.msra.mxu0 0.0
    %4204 = vmatpush.msra.mxu0 0.0
    %4205 = vmatpush.msra.mxu0 0.0
    %4206 = vmatpush.msra.mxu0 0.0
    %4207 = vmatpush.msra.mxu0 0.0
    %4208 = vmatpush.msra.mxu0 0.0
    %4209 = vmatpush.msra.mxu0 0.0
    %4210 = vmatpush.msra.mxu0 0.0
    %4211 = vmatpush.msra.mxu0 0.0
    %4212 = vmatpush.msra.mxu0 0.0
    %4213 = vmatpush.msra.mxu0 0.0
    %4214 = vmatpush.msra.mxu0 0.0
    %4215 = vmatpush.msra.mxu0 %v4179
    %4216 = vmatpush.msra.mxu0 %v4178
    %4217 = vmatpush.msra.mxu0 %v4177
    %4218 = vmatpush.msra.mxu0 %v4176
    %4219 = vmatmul.f32.gmra.mxu0 %v4108
    %v4220 = vpop.f32.mrf.mxu0
    %v4221 = vadd.f32 %v4198, %v4220
    %4222 = vmatmul.f32.gmra.mxu0 %v4111
    %v4223 = vpop.f32.mrf.mxu0
    %v4224 = vadd.f32 %v4201, %v4223
    %4225 = vdwg.mxu0
    %v4226 = vmax.f32 %v4154, %v4221
    %v4227 = vmax.f32 %v4157, %v4224
    %v4229 = vrot.slane %v4226, 1
    %4230 = vrot.lane.b32.xlu0 %v4229, 80
    %v4231 = vpop.permute.xlu0 %4230
    %v4233 = vrot.slane %v4226, 2
    %4234 = vrot.lane.b32.xlu0 %v4233, 32
    %v4235 = vpop.permute.xlu0 %4234
    %v4237 = vsel %vm1486, %v4226, %v4231
    %v4238 = vsel %vm366, %v4231, %v4235
    %v4240 = vrot.slane %v4227, 1
    %v4241 = vsel %vm151, %v4229, %v4240
    %4242 = vrot.lane.b32.xlu0 %v4241, 80
    %v4243 = vpop.permute.xlu0 %4242
    %v4245 = vrot.slane %v4227, 2
    %v4246 = vsel %vm171, %v4233, %v4245
    %4247 = vrot.lane.b32.xlu0 %v4246, 32
    %v4248 = vpop.permute.xlu0 %4247
    %v4250 = vsel %vm1486, %v4226, %v4243
    %v4251 = vsel %vm366, %v4243, %v4248
    %v4254 = vrot.slane %v4250, 2
    %v4255 = vrot.slane %v4251, 2
    %vm4258 = vcmask 1042432
    %v4259 = vsel %vm4258, %v4237, %v4254
    %v4260 = vsel %vm4258, %v4238, %v4255
    %v4261 = vld [vmem:[%s51] sm:$0xff]
    %v4262 = vld [vmem:[%s51 + $0x8] sm:$0xff]
    %v4263 = vld [vmem:[%s51 + $0x10] sm:$0xff]
    %v4264 = vld [vmem:[%s51 + $0x18] sm:$0xff]
    %v4265 = vld [vmem:[%s51 + $0x20] sm:$0xff]
    %v4266 = vld [vmem:[%s51 + $0x28] sm:$0xff]
    %v4267 = vld [vmem:[%s51 + $0x30] sm:$0xff]
    %v4268 = vld [vmem:[%s51 + $0x38] sm:$0xff]
    %v4269 = vld [vmem:[%s51 + $0x40] sm:$0xff]
    %v4270 = vld [vmem:[%s51 + $0x48] sm:$0xff]
    %v4271 = vld [vmem:[%s51 + $0x50] sm:$0xff]
    %v4272 = vld [vmem:[%s51 + $0x58] sm:$0xff]
    %v4273 = vld [vmem:[%s51 + $0x60] sm:$0xff]
    %v4274 = vld [vmem:[%s51 + $0x68] sm:$0xff]
    %v4275 = vld [vmem:[%s51 + $0x70] sm:$0xff]
    %v4276 = vld [vmem:[%s51 + $0x78] sm:$0xff]
    %v4277 = vld [vmem:[%s51 + $0x80] sm:$0xff]
    %v4278 = vld [vmem:[%s51 + $0x88] sm:$0xff]
    %v4279 = vld [vmem:[%s51 + $0x90] sm:$0xff]
    %v4280 = vld [vmem:[%s51 + $0x98] sm:$0xff]
    %v4281 = vld [vmem:[%s51 + $0xa0] sm:$0xff]
    %v4282 = vld [vmem:[%s51 + $0xa8] sm:$0xff]
    %v4283 = vld [vmem:[%s51 + $0xb0] sm:$0xff]
    %v4284 = vld [vmem:[%s51 + $0xb8] sm:$0xff]
    %v4285 = vld [vmem:[%s51 + $0xc0] sm:$0xff]
    %v4286 = vld [vmem:[%s51 + $0xc8] sm:$0xff]
    %v4287 = vld [vmem:[%s51 + $0xd0] sm:$0xff]
    %v4288 = vld [vmem:[%s51 + $0xd8] sm:$0xff]
    %v4289 = vld [vmem:[%s51 + $0xe0] sm:$0xff]
    %v4290 = vld [vmem:[%s51 + $0xe8] sm:$0xff]
    %v4291 = vld [vmem:[%s53] sm:$0x1]
    %v4293 = vperm.slane %v4291, 0
    %v4296 = vsel %vm645, %v4260, 0
    %4298 = vmatpush.msra.mxu0 %v4276
    %4299 = vmatpush.msra.mxu0 %v4275
    %4300 = vmatpush.msra.mxu0 %v4274
    %4301 = vmatpush.msra.mxu0 %v4273
    %4302 = vmatpush.msra.mxu0 %v4272
    %4303 = vmatpush.msra.mxu0 %v4271
    %4304 = vmatpush.msra.mxu0 %v4270
    %4305 = vmatpush.msra.mxu0 %v4269
    %4306 = vmatpush.msra.mxu0 %v4268
    %4307 = vmatpush.msra.mxu0 %v4267
    %4308 = vmatpush.msra.mxu0 %v4266
    %4309 = vmatpush.msra.mxu0 %v4265
    %4310 = vmatpush.msra.mxu0 %v4264
    %4311 = vmatpush.msra.mxu0 %v4263
    %4312 = vmatpush.msra.mxu0 %v4262
    %4313 = vmatpush.msra.mxu0 %v4261
    %4314 = vmatmul.f32.gmra.mxu0 %v4259
    %v4315 = vpop.f32.mrf.mxu0
    %v4316 = vadd.f32 %v4293, %v4315
    %4317 = vdwg.mxu0
    %4318 = vmatpush.msra.mxu0 0.0
    %4319 = vmatpush.msra.mxu0 0.0
    %4320 = vmatpush.msra.mxu0 %v4290
    %4321 = vmatpush.msra.mxu0 %v4289
    %4322 = vmatpush.msra.mxu0 %v4288
    %4323 = vmatpush.msra.mxu0 %v4287
    %4324 = vmatpush.msra.mxu0 %v4286
    %4325 = vmatpush.msra.mxu0 %v4285
    %4326 = vmatpush.msra.mxu0 %v4284
    %4327 = vmatpush.msra.mxu0 %v4283
    %4328 = vmatpush.msra.mxu0 %v4282
    %4329 = vmatpush.msra.mxu0 %v4281
    %4330 = vmatpush.msra.mxu0 %v4280
    %4331 = vmatpush.msra.mxu0 %v4279
    %4332 = vmatpush.msra.mxu0 %v4278
    %4333 = vmatpush.msra.mxu0 %v4277
    %4334 = vmatmul.f32.gmra.mxu0 %v4296
    %v4335 = vpop.f32.mrf.mxu0
    %v4336 = vadd.f32 %v4316, %v4335
    %4337 = vdwg.mxu0
    %vm4338 = vcmp.gt.f32.partialorder %v4336, 0.0
    %v4339 = vmin.f32 %v4336, 0.0
    %v4340 = vmul.f32 %v4339, 1.442695
    %v4341 = vpow.pop %v4340
    %v4342 = vsub.f32 %v4341, 1.0
    %v4343 = vsel %vm4338, %v4336, %v4342
    %v4345 = vrot.slane %v4343, 1
    %4346 = vrot.lane.b32.xlu0 %v4345, 48
    %v4347 = vpop.permute.xlu0 %4346
    %v4349 = vrot.slane %v4343, 2
    %4350 = vrot.lane.b32.xlu0 %v4349, 96
    %v4351 = vpop.permute.xlu0 %4350
    %vm4353 = vcmask 392192
    %v4354 = vsel %vm4353, %v4343, %v4347
    %v4355 = vsel %vm191, %v4354, %v4351
    %v4357 = vrot.slane %v4355, 2
    %v4358 = vrot.slane %v4351, 2
    %v4361 = vsel %vm719, %v4355, %v4357
    %v4362 = vsel %vm719, %v4351, %v4358
    %v4363 = vld [vmem:[%s55] sm:$0xff]
    %v4364 = vld [vmem:[%s55 + $0x8] sm:$0xff]
    %v4365 = vld [vmem:[%s55 + $0x10] sm:$0xff]
    %v4366 = vld [vmem:[%s55 + $0x18] sm:$0xff]
    %v4367 = vld [vmem:[%s55 + $0x20] sm:$0xff]
    %v4368 = vld [vmem:[%s55 + $0x28] sm:$0xff]
    %v4369 = vld [vmem:[%s55 + $0x30] sm:$0xff]
    %v4370 = vld [vmem:[%s55 + $0x38] sm:$0xff]
    %v4371 = vld [vmem:[%s55 + $0x40] sm:$0xff]
    %v4372 = vld [vmem:[%s55 + $0x48] sm:$0xff]
    %v4373 = vld [vmem:[%s55 + $0x50] sm:$0xff]
    %v4374 = vld [vmem:[%s55 + $0x58] sm:$0xff]
    %v4375 = vld [vmem:[%s55 + $0x60] sm:$0xff]
    %v4376 = vld [vmem:[%s55 + $0x68] sm:$0xff]
    %v4377 = vld [vmem:[%s55 + $0x70] sm:$0xff]
    %v4378 = vld [vmem:[%s55 + $0x78] sm:$0xff]
    %v4379 = vld [vmem:[%s55 + $0x80] sm:$0xff]
    %v4380 = vld [vmem:[%s55 + $0x88] sm:$0xff]
    %v4381 = vld [vmem:[%s57] sm:$0x1]
    %v4383 = vperm.slane %v4381, 0
    %v4386 = vsel %vm3129, %v4362, 0
    %4388 = vmatpush.msra.mxu0 %v4378
    %4389 = vmatpush.msra.mxu0 %v4377
    %4390 = vmatpush.msra.mxu0 %v4376
    %4391 = vmatpush.msra.mxu0 %v4375
    %4392 = vmatpush.msra.mxu0 %v4374
    %4393 = vmatpush.msra.mxu0 %v4373
    %4394 = vmatpush.msra.mxu0 %v4372
    %4395 = vmatpush.msra.mxu0 %v4371
    %4396 = vmatpush.msra.mxu0 %v4370
    %4397 = vmatpush.msra.mxu0 %v4369
    %4398 = vmatpush.msra.mxu0 %v4368
    %4399 = vmatpush.msra.mxu0 %v4367
    %4400 = vmatpush.msra.mxu0 %v4366
    %4401 = vmatpush.msra.mxu0 %v4365
    %4402 = vmatpush.msra.mxu0 %v4364
    %4403 = vmatpush.msra.mxu0 %v4363
    %4404 = vmatmul.f32.gmra.mxu0 %v4361
    %v4405 = vpop.f32.mrf.mxu0
    %v4406 = vadd.f32 %v4383, %v4405
    %4407 = vdwg.mxu0
    %4408 = vmatpush.msra.mxu0 0.0
    %4409 = vmatpush.msra.mxu0 0.0
    %4410 = vmatpush.msra.mxu0 0.0
    %4411 = vmatpush.msra.mxu0 0.0
    %4412 = vmatpush.msra.mxu0 0.0
    %4413 = vmatpush.msra.mxu0 0.0
    %4414 = vmatpush.msra.mxu0 0.0
    %4415 = vmatpush.msra.mxu0 0.0
    %4416 = vmatpush.msra.mxu0 0.0
    %4417 = vmatpush.msra.mxu0 0.0
    %4418 = vmatpush.msra.mxu0 0.0
    %4419 = vmatpush.msra.mxu0 0.0
    %4420 = vmatpush.msra.mxu0 0.0
    %4421 = vmatpush.msra.mxu0 0.0
    %4422 = vmatpush.msra.mxu0 %v4380
    %4423 = vmatpush.msra.mxu0 %v4379
    %4424 = vmatmul.f32.gmra.mxu0 %v4386
    %v4425 = vpop.f32.mrf.mxu0
    %v4426 = vadd.f32 %v4406, %v4425
    %4427 = vdwg.mxu0
    %vm4428 = vcmp.gt.f32.partialorder %v4426, 0.0
    %v4429 = vmin.f32 %v4426, 0.0
    %v4430 = vmul.f32 %v4429, 1.442695
    %v4431 = vpow.pop %v4430
    %v4432 = vsub.f32 %v4431, 1.0
    %v4433 = vsel %vm4428, %v4426, %v4432
    %v4434 = vld [vmem:[%s59] sm:$0xff]
    %v4435 = vld [vmem:[%s59 + $0x8] sm:$0xff]
    %v4436 = vld [vmem:[%s61] sm:$0x1]
    %v4437 = vld [vmem:[%s63] sm:$0xff]
    %v4438 = vld [vmem:[%s63 + $0x8] sm:$0xff]
    %v4439 = vld [vmem:[%s65] sm:$0x1]
    %v4441 = vperm.slane %v4436, 0
    %v4444 = vsel %vm3129, %v4433, 0
    %4446 = vmatpush.msra.mxu0 0.0
    %4447 = vmatpush.msra.mxu0 0.0
    %4448 = vmatpush.msra.mxu0 0.0
    %4449 = vmatpush.msra.mxu0 0.0
    %4450 = vmatpush.msra.mxu0 0.0
    %4451 = vmatpush.msra.mxu0 0.0
    %4452 = vmatpush.msra.mxu0 0.0
    %4453 = vmatpush.msra.mxu0 0.0
    %4454 = vmatpush.msra.mxu0 0.0
    %4455 = vmatpush.msra.mxu0 0.0
    %4456 = vmatpush.msra.mxu0 0.0
    %4457 = vmatpush.msra.mxu0 0.0
    %4458 = vmatpush.msra.mxu0 0.0
    %4459 = vmatpush.msra.mxu0 0.0
    %4460 = vmatpush.msra.mxu0 %v4435
    %4461 = vmatpush.msra.mxu0 %v4434
    %4462 = vmatmul.f32.gmra.mxu0 %v4444
    %v4463 = vpop.f32.mrf.mxu0
    %v4464 = vadd.f32 %v4441, %v4463
    %4465 = vdwg.mxu0
    %vm4466 = vcmp.gt.f32.partialorder %v4464, 0.0
    %v4467 = vmin.f32 %v4464, 0.0
    %v4468 = vmul.f32 %v4467, 1.442695
    %v4469 = vpow.pop %v4468
    %v4470 = vsub.f32 %v4469, 1.0
    %v4471 = vsel %vm4466, %v4464, %v4470
    %v4473 = vperm.slane %v4439, 0
    %v4476 = vsel %vm3129, %v4471, 0
    %4478 = vmatpush.msra.mxu0 0.0
    %4479 = vmatpush.msra.mxu0 0.0
    %4480 = vmatpush.msra.mxu0 0.0
    %4481 = vmatpush.msra.mxu0 0.0
    %4482 = vmatpush.msra.mxu0 0.0
    %4483 = vmatpush.msra.mxu0 0.0
    %4484 = vmatpush.msra.mxu0 0.0
    %4485 = vmatpush.msra.mxu0 0.0
    %4486 = vmatpush.msra.mxu0 0.0
    %4487 = vmatpush.msra.mxu0 0.0
    %4488 = vmatpush.msra.mxu0 0.0
    %4489 = vmatpush.msra.mxu0 0.0
    %4490 = vmatpush.msra.mxu0 0.0
    %4491 = vmatpush.msra.mxu0 0.0
    %4492 = vmatpush.msra.mxu0 %v4438
    %4493 = vmatpush.msra.mxu0 %v4437
    %4494 = vmatmul.f32.gmra.mxu0 %v4476
    %v4495 = vpop.f32.mrf.mxu0
    %v4496 = vadd.f32 %v4473, %v4495
    %4497 = vdwg.mxu0
    %vm4498 = vcmask 74752
    %4499 = vst.msk [vmem:[#allocation2] sm:$0x3] %vm4498, %v4496
    // Predicated region
    $region134: #{forward.1} parent=1 // pred_check
      _
    $region135: #{forward.1} parent=1 // pred_check_branch
      %4501 = sbr.rel (0) target = $region137
    $region136: #{forward.1} parent=1 // pred_region
      %4503 = vsyncadd [#allocation3], 0
      %s4505 = sshll.u32 [#allocation2], 4
      %s4506 = int_to_ptr.vmem [resolvable:$true] %s4505
      %s4507 = sshll.u32 %s67, 4
      %s4508 = int_to_ptr.hbm [resolvable:$true] %s4507
      %4510 = dma.vmem_to_hbm [thread:$0]  %s4506, 32, %s4508, [#allocation3]
    $region137: #{forward.1} parent=1 // pred_fallthru
      _
    // Predicated region
    $region138: #{forward.1} parent=1 // pred_check
      _
    $region139: #{forward.1} parent=1 // pred_check_branch
      %4512 = sbr.rel (0) target = $region141
    $region140: #{forward.1} parent=1 // pred_region
      %4514 = dma.done [#allocation3], 32
    $region141: #{forward.1} parent=1 // pred_fallthru
      _
    %4515 = vsyncpa [#allocation3], 1

</llo_original>
